<compile_context>
chip_gen: v5e
topology: v5e:2x2
jax: 0.10.0
libtpu: 0.0.40
codegen_flags: <defaults>
</compile_context>

<pallas_src>
import functools
import math

import jax
import jax.numpy as jnp
import numpy as np
from jax.experimental import pallas as pl
from jax.experimental.pallas import tpu as pltpu

# --------------------------- model hyper-params -----------------------------
D_MODEL = 32       # d_model
N_HEADS = 4        # n_heads
DIM_FC = 16        # dim_fc
N_LAYERS = 2       # n_layers
D_IN = 2           # input / output feature size of the projections
EPS = 1e-5
LANES = 128

BATCH = 2
SEQ = 8


# ------------------------------- kernel -------------------------------------
def _decoder_kernel(
    inp_ref,      # (R, 2*D_IN)   [x | frequency_masked_x] rows, R = b_blk*T
    mats_ref,     # (3L+1, D, 128) lane-dense weight blocks
    vecs_ref,     # (2+4L, 128)    lane-dense bias / LN rows
    out_ref,      # (R, 128)       [out_pad(32) | attn maps(2L*T=32) | zeros(64)]
    *, b_blk, seq, d_model, n_heads, n_layers,
):
    D, H, L, T = d_model, n_heads, n_layers, seq
    hd = D // H
    R = b_blk * T
    scale = 1.0 / math.sqrt(hd)
    f32 = jnp.float32

    def layernorm(a, vrow, g_off, b_off):
        g = vecs_ref[vrow, g_off:g_off + D]
        b = vecs_ref[vrow, b_off:b_off + D]
        mu = jnp.mean(a, axis=-1, keepdims=True)
        ac = a - mu
        var = jnp.mean(ac * ac, axis=-1, keepdims=True)
        return ac * jax.lax.rsqrt(var + EPS) * g[None, :] + b[None, :]

    def mha(xq, xkv, mat_idx, vrow, same_kv):
        # One wide QKV projection per source; head axis only as static lane
        # slices at the score / PV step.
        wqkv = mats_ref[mat_idx, :, 0:3 * D]        # (D, 3D)
        wo = mats_ref[mat_idx, :, 3 * D:4 * D]      # (D, D)
        bqkv = vecs_ref[vrow, 0:3 * D]              # (3D,)
        bo = vecs_ref[vrow, 3 * D:4 * D]            # (D,)

        qkv_q = jnp.dot(xq, wqkv, preferred_element_type=f32) + bqkv[None, :]
        if same_kv:
            qkv_kv = qkv_q
        else:
            qkv_kv = jnp.dot(xkv, wqkv, preferred_element_type=f32) + bqkv[None, :]

        o_parts = []
        attn_means = []
        inv_h = 1.0 / H
        for b in range(b_blk):
            r0 = b * T
            head_outs = []
            p_sum = None
            for h in range(H):
                q = qkv_q[r0:r0 + T, h * hd:(h + 1) * hd] * scale        # (T, hd)
                k = qkv_kv[r0:r0 + T, D + h * hd:D + (h + 1) * hd]       # (T, hd)
                v = qkv_kv[r0:r0 + T, 2 * D + h * hd:2 * D + (h + 1) * hd]
                s = jax.lax.dot_general(q, k, (((1,), (1,)), ((), ())),
                                        preferred_element_type=f32)      # (T, T)
                m = jnp.max(s, axis=-1, keepdims=True)
                e = jnp.exp(s - m)
                p = e / jnp.sum(e, axis=-1, keepdims=True)               # exact
                p_sum = p if p_sum is None else p_sum + p
                head_outs.append(jnp.dot(p, v, preferred_element_type=f32))
            o_parts.append(jnp.concatenate(head_outs, axis=1))           # (T, D)
            attn_means.append(p_sum * inv_h)                             # (T, T)

        o = jnp.concatenate(o_parts, axis=0) if b_blk > 1 else o_parts[0]
        o = jnp.dot(o, wo, preferred_element_type=f32) + bo[None, :]     # (R, D)
        return o, attn_means

    # ---- input projection: D_IN=2 -> D via VPU broadcast mul-adds ----
    inp = inp_ref[...]                              # (R, 4)
    wp0 = vecs_ref[0, 0:D]
    wp1 = vecs_ref[0, D:2 * D]
    bp = vecs_ref[0, 2 * D:3 * D]
    x = inp[:, 0:1] * wp0[None, :] + inp[:, 1:2] * wp1[None, :] + bp[None, :]
    fm = inp[:, 2:3] * wp0[None, :] + inp[:, 3:4] * wp1[None, :] + bp[None, :]

    attn_cols = [[] for _ in range(b_blk)]

    # ---- decoder layers ----
    for l in range(L):
        vb = 2 + 4 * l

        # self-attention sub-block
        res = x
        xn = layernorm(x, vb + 2, 0, D)
        a, w = mha(xn, xn, 3 * l + 0, vb + 0, True)
        x = res + a
        for b in range(b_blk):
            attn_cols[b].append(w[b])

        # cross-attention sub-block (K/V = projected frequency_masked_x)
        res = x
        xn = layernorm(x, vb + 2, 2 * D, 3 * D)
        a, w = mha(xn, fm, 3 * l + 1, vb + 1, False)
        x = res + a
        for b in range(b_blk):
            attn_cols[b].append(w[b])

        # feed-forward sub-block (weights zero-padded to (D, D) in wrapper)
        res = x
        xn = layernorm(x, vb + 3, 0, D)
        w1 = mats_ref[3 * l + 2, :, 0:D]
        w2 = mats_ref[3 * l + 2, :, D:2 * D]
        b1 = vecs_ref[vb + 3, 2 * D:3 * D]
        b2 = vecs_ref[vb + 3, 3 * D:4 * D]
        h1 = jnp.maximum(
            jnp.dot(xn, w1, preferred_element_type=f32) + b1[None, :], 0.0)
        x = res + jnp.dot(h1, w2, preferred_element_type=f32) + b2[None, :]

    # ---- output projection: Linear -> ReLU -> Linear (zero-padded to D) ----
    wo1 = mats_ref[3 * L, :, 0:D]
    wo2 = mats_ref[3 * L, :, D:2 * D]
    bo1 = vecs_ref[0, 3 * D:4 * D]
    bo2 = vecs_ref[1, 0:D]
    hh = jnp.maximum(
        jnp.dot(x, wo1, preferred_element_type=f32) + bo1[None, :], 0.0)
    out_pad = jnp.dot(hh, wo2, preferred_element_type=f32) + bo2[None, :]  # (R, D)

    # ---- single lane-dense store: [out_pad | attn maps | zeros] ----
    attn_blocks = [jnp.concatenate(attn_cols[b], axis=1) for b in range(b_blk)]
    attn_all = (jnp.concatenate(attn_blocks, axis=0)
                if b_blk > 1 else attn_blocks[0])                    # (R, 2L*T)
    n_pad = out_ref.shape[1] - D - 2 * L * T
    zpad = jnp.zeros((R, n_pad), dtype=out_pad.dtype)
    out_ref[...] = jnp.concatenate([out_pad, attn_all, zpad], axis=1)


# --------------------------- parameter packing --------------------------------
def pack_params(p):
    """Pack the 24 logical parameter arrays into two lane-dense slabs
    (done once, outside the kernel).  All zero-pads are mathematically exact."""
    D, F, L = D_MODEL, DIM_FC, N_LAYERS

    blocks = []
    for l in range(L):
        blocks.append(jnp.concatenate([p["sa_wi"][l], p["sa_wo"][l]], axis=1))  # (D,128)
        blocks.append(jnp.concatenate([p["ca_wi"][l], p["ca_wo"][l]], axis=1))  # (D,128)
        ff1 = jnp.pad(p["ffw1"][l], ((0, 0), (0, D - F)))                       # (D,D)
        ff2 = jnp.pad(p["ffw2"][l], ((0, D - F), (0, 0)))                       # (D,D)
        blocks.append(jnp.concatenate(
            [ff1, ff2, jnp.zeros((D, LANES - 2 * D), jnp.float32)], axis=1))
    wo2p = jnp.pad(p["wo2"], ((0, 0), (0, D - D_IN)))
    blocks.append(jnp.concatenate(
        [p["wo1"], wo2p, jnp.zeros((D, LANES - 2 * D), jnp.float32)], axis=1))
    mats = jnp.stack(blocks)                       # (3L+1, D, 128)

    rows = [jnp.concatenate([p["wp"][0], p["wp"][1], p["bp"][0], p["bo1"][0]]),
            jnp.concatenate([jnp.pad(p["bo2"][0], (0, D - D_IN)),
                             jnp.zeros((LANES - D,), jnp.float32)])]
    for l in range(L):
        rows.append(jnp.concatenate([p["sa_bi"][l], p["sa_bo"][l]]))
        rows.append(jnp.concatenate([p["ca_bi"][l], p["ca_bo"][l]]))
        rows.append(jnp.concatenate([p["ln1g"][l], p["ln1b"][l],
                                     p["ln2g"][l], p["ln2b"][l]]))
        rows.append(jnp.concatenate([p["ln3g"][l], p["ln3b"][l],
                                     jnp.pad(p["ffb1"][l], (0, D - F)),
                                     p["ffb2"][l]]))
    vecs = jnp.stack(rows)                         # (2+4L, 128)
    return mats, vecs


# ------------------------------ wrapper --------------------------------------
def frequency_decoder_pallas(x, fm, params, batch_block=None):
    B, T, Din = x.shape
    D, L = D_MODEL, N_LAYERS
    assert Din == D_IN

    if batch_block is None:
        try:
            kind = jax.devices()[0].device_kind.lower()
        except Exception:
            kind = ""
        # v7x: 2 TensorCores -> one batch element per core (parallel grid).
        # v5e / v6e: single core -> fold the whole batch into one invocation.
        batch_block = 1 if (("v7" in kind) or ("tpu7" in kind)) else B
    if B % batch_block != 0:
        batch_block = 1
    n_blocks = B // batch_block
    R = batch_block * T

    mats, vecs = pack_params(params)
    inp = jnp.concatenate([x, fm], axis=-1).reshape(B * T, 2 * Din)   # (B*T, 4)

    kernel = functools.partial(
        _decoder_kernel, b_blk=batch_block, seq=T,
        d_model=D, n_heads=N_HEADS, n_layers=L)

    grid_spec = pltpu.PrefetchScalarGridSpec(
        num_scalar_prefetch=0,
        grid=(n_blocks,),
        in_specs=[
            pl.BlockSpec((R, 2 * Din), lambda i: (i, 0)),
            pl.BlockSpec(mats.shape, lambda i: (0, 0, 0)),
            pl.BlockSpec(vecs.shape, lambda i: (0, 0)),
        ],
        out_specs=pl.BlockSpec((R, LANES), lambda i: (i, 0)),
    )

    slab = pl.pallas_call(
        kernel,
        grid_spec=grid_spec,
        out_shape=jax.ShapeDtypeStruct((B * T, LANES), jnp.float32),
        compiler_params=pltpu.CompilerParams(
            dimension_semantics=("parallel",)),   # batch blocks are independent
    )(inp, mats, vecs)

    slab = slab.reshape(B, T, LANES)
    out = slab[:, :, :Din]                                           # (B, T, 2)
    attn = slab[:, :, D:D + 2 * L * T].reshape(B, T, 2 * L, T)
    attn = attn.transpose(0, 2, 1, 3)                                # (B, 2L, T, T)
    return out, attn


# --------------------------- parameter init ----------------------------------
def init_params(key):
    """Deterministic synthetic params.  Linear weights stored as (in, out) =
    transpose of torch nn.Linear.weight; math is identical."""
    D, F, L = D_MODEL, DIM_FC, N_LAYERS
    ks = jax.random.split(key, 32)
    n = iter(range(32))

    def w(shape, scale=0.1):
        return (scale * jax.random.normal(ks[next(n)], shape)).astype(jnp.float32)

    p = {
        "wp": w((D_IN, D)), "bp": w((1, D)),
        "sa_wi": w((L, D, 3 * D)), "sa_bi": w((L, 3 * D)),
        "sa_wo": w((L, D, D)), "sa_bo": w((L, D)),
        "ca_wi": w((L, D, 3 * D)), "ca_bi": w((L, 3 * D)),
        "ca_wo": w((L, D, D)), "ca_bo": w((L, D)),
        "ffw1": w((L, D, F)), "ffb1": w((L, F)),
        "ffw2": w((L, F, D)), "ffb2": w((L, D)),
        "ln1g": jnp.ones((L, D), jnp.float32) + w((L, D), 0.05),
        "ln1b": w((L, D), 0.05),
        "ln2g": jnp.ones((L, D), jnp.float32) + w((L, D), 0.05),
        "ln2b": w((L, D), 0.05),
        "ln3g": jnp.ones((L, D), jnp.float32) + w((L, D), 0.05),
        "ln3b": w((L, D), 0.05),
        "wo1": w((D, D)), "bo1": w((1, D)),
        "wo2": w((D, D_IN)), "bo2": w((1, D_IN)),
    }
    return p


# -------------------------- pure-JAX reference -------------------------------
def ref_forward(x, fm, p):
    D, H, L = D_MODEL, N_HEADS, N_LAYERS
    hd = D // H

    def ln(a, g, b):
        mu = a.mean(-1, keepdims=True)
        v = ((a - mu) ** 2).mean(-1, keepdims=True)
        return (a - mu) / jnp.sqrt(v + EPS) * g + b

    def sm(s):
        m = s.max(-1, keepdims=True)
        e = jnp.exp(s - m)
        return e / e.sum(-1, keepdims=True)

    def mha(xq, xkv, wi, bi, wo, bo):
        B, T, _ = xq.shape
        q = xq @ wi[:, :D] + bi[:D]
        k = xkv @ wi[:, D:2 * D] + bi[D:2 * D]
        v = xkv @ wi[:, 2 * D:] + bi[2 * D:]
        q = q.reshape(B, T, H, hd).transpose(0, 2, 1, 3) / math.sqrt(hd)
        k = k.reshape(B, T, H, hd).transpose(0, 2, 1, 3)
        v = v.reshape(B, T, H, hd).transpose(0, 2, 1, 3)
        pw = sm(q @ k.transpose(0, 1, 3, 2))
        o = (pw @ v).transpose(0, 2, 1, 3).reshape(B, T, D)
        return o @ wo + bo, pw.mean(axis=1)

    xx = x @ p["wp"] + p["bp"][0]
    fmx = fm @ p["wp"] + p["bp"][0]
    attns = []
    for l in range(L):
        r = xx
        xn = ln(xx, p["ln1g"][l], p["ln1b"][l])
        a, ws = mha(xn, xn, p["sa_wi"][l], p["sa_bi"][l], p["sa_wo"][l], p["sa_bo"][l])
        xx = r + a
        r = xx
        xn = ln(xx, p["ln2g"][l], p["ln2b"][l])
        a, wc = mha(xn, fmx, p["ca_wi"][l], p["ca_bi"][l], p["ca_wo"][l], p["ca_bo"][l])
        xx = r + a
        r = xx
        xn = ln(xx, p["ln3g"][l], p["ln3b"][l])
        h = jax.nn.relu(xn @ p["ffw1"][l] + p["ffb1"][l])
        xx = r + h @ p["ffw2"][l] + p["ffb2"][l]
        attns.append(jnp.stack([ws, wc], axis=1))
    out = jax.nn.relu(xx @ p["wo1"] + p["bo1"][0]) @ p["wo2"] + p["bo2"][0]
    return out, jnp.concatenate(attns, axis=1)


# ---------------------------------- main --------------------------------------
if __name__ == "__main__":
    key = jax.random.PRNGKey(0)
    kx, kf, kp = jax.random.split(key, 3)
    x = jax.random.normal(kx, (BATCH, SEQ, D_IN), jnp.float32)
    fm = jax.random.normal(kf, (BATCH, SEQ, D_IN), jnp.float32)
    params = init_params(kp)

    out, attn = frequency_decoder_pallas(x, fm, params)
    out = jax.block_until_ready(out)
    attn = jax.block_until_ready(attn)

    ref_out, ref_attn = ref_forward(x, fm, params)
    np.testing.assert_allclose(np.asarray(out), np.asarray(ref_out), atol=2e-3, rtol=2e-3)
    np.testing.assert_allclose(np.asarray(attn), np.asarray(ref_attn), atol=2e-3, rtol=2e-3)

    # TODO(synk): dropout layers are eval-mode identities (inference semantics).
    print("KERNEL_OK")
</pallas_src>

<mosaic_0001>
module attributes {stable_mosaic.version = 11 : i64} {
  func.func @_decoder_kernel(%arg0: i32, %arg1: memref<16x4xf32, #tpu.memory_space<vmem>>, %arg2: memref<7x32x128xf32, #tpu.memory_space<vmem>>, %arg3: memref<10x128xf32, #tpu.memory_space<vmem>>, %arg4: memref<16x128xf32, #tpu.memory_space<vmem>>) attributes {dimension_semantics = [#tpu.dimension_semantics<parallel>], iteration_bounds = array<i64: 1>, scalar_prefetch = 0 : i64, scratch_operands = 0 : i64, tpu.core_type = #tpu.core_type<tc>, window_params = [{transform_indices = @transform_0, window_bounds = array<i64: 16, 4>}, {pipeline_mode = #tpu.pipeline_mode<synchronous>, transform_indices = @transform_1, window_bounds = array<i64: 7, 32, 128>}, {pipeline_mode = #tpu.pipeline_mode<synchronous>, transform_indices = @transform_2, window_bounds = array<i64: 10, 128>}, {transform_indices = @transform_3, window_bounds = array<i64: 16, 128>}]} {
    %c0 = arith.constant 0 : index
    %c0_0 = arith.constant 0 : index
    %0 = vector.load %arg1[%c0, %c0_0] : memref<16x4xf32, #tpu.memory_space<vmem>>, vector<16x4xf32>
    %c0_1 = arith.constant 0 : index
    %c0_2 = arith.constant 0 : index
    %1 = vector.load %arg3[%c0_1, %c0_2] : memref<10x128xf32, #tpu.memory_space<vmem>>, vector<1x32xf32>
    %2 = vector.shape_cast %1 : vector<1x32xf32> to vector<32xf32>
    %c0_3 = arith.constant 0 : index
    %c32 = arith.constant 32 : index
    %3 = vector.load %arg3[%c0_3, %c32] : memref<10x128xf32, #tpu.memory_space<vmem>>, vector<1x32xf32>
    %4 = vector.shape_cast %3 : vector<1x32xf32> to vector<32xf32>
    %c0_4 = arith.constant 0 : index
    %c64 = arith.constant 64 : index
    %5 = vector.load %arg3[%c0_4, %c64] : memref<10x128xf32, #tpu.memory_space<vmem>>, vector<1x32xf32>
    %6 = vector.shape_cast %5 : vector<1x32xf32> to vector<32xf32>
    %7 = vector.extract_strided_slice %0 {offsets = [0, 0], sizes = [16, 1], strides = [1, 1]} : vector<16x4xf32> to vector<16x1xf32>
    %8 = vector.shape_cast %2 : vector<32xf32> to vector<1x32xf32>
    %9 = vector.broadcast %7 : vector<16x1xf32> to vector<16x32xf32>
    %10 = vector.broadcast %8 : vector<1x32xf32> to vector<16x32xf32>
    %11 = arith.mulf %9, %10 : vector<16x32xf32>
    %12 = vector.extract_strided_slice %0 {offsets = [0, 1], sizes = [16, 1], strides = [1, 1]} : vector<16x4xf32> to vector<16x1xf32>
    %13 = vector.shape_cast %4 : vector<32xf32> to vector<1x32xf32>
    %14 = vector.broadcast %12 : vector<16x1xf32> to vector<16x32xf32>
    %15 = vector.broadcast %13 : vector<1x32xf32> to vector<16x32xf32>
    %16 = arith.mulf %14, %15 : vector<16x32xf32>
    %17 = arith.addf %11, %16 : vector<16x32xf32>
    %18 = vector.shape_cast %6 : vector<32xf32> to vector<1x32xf32>
    %19 = vector.broadcast %18 : vector<1x32xf32> to vector<16x32xf32>
    %20 = arith.addf %17, %19 : vector<16x32xf32>
    %21 = vector.extract_strided_slice %0 {offsets = [0, 2], sizes = [16, 1], strides = [1, 1]} : vector<16x4xf32> to vector<16x1xf32>
    %22 = vector.shape_cast %2 : vector<32xf32> to vector<1x32xf32>
    %23 = vector.broadcast %21 : vector<16x1xf32> to vector<16x32xf32>
    %24 = vector.broadcast %22 : vector<1x32xf32> to vector<16x32xf32>
    %25 = arith.mulf %23, %24 : vector<16x32xf32>
    %26 = vector.extract_strided_slice %0 {offsets = [0, 3], sizes = [16, 1], strides = [1, 1]} : vector<16x4xf32> to vector<16x1xf32>
    %27 = vector.shape_cast %4 : vector<32xf32> to vector<1x32xf32>
    %28 = vector.broadcast %26 : vector<16x1xf32> to vector<16x32xf32>
    %29 = vector.broadcast %27 : vector<1x32xf32> to vector<16x32xf32>
    %30 = arith.mulf %28, %29 : vector<16x32xf32>
    %31 = arith.addf %25, %30 : vector<16x32xf32>
    %32 = vector.shape_cast %6 : vector<32xf32> to vector<1x32xf32>
    %33 = vector.broadcast %32 : vector<1x32xf32> to vector<16x32xf32>
    %34 = arith.addf %31, %33 : vector<16x32xf32>
    %c4 = arith.constant 4 : index
    %c0_5 = arith.constant 0 : index
    %35 = vector.load %arg3[%c4, %c0_5] : memref<10x128xf32, #tpu.memory_space<vmem>>, vector<1x32xf32>
    %36 = vector.shape_cast %35 : vector<1x32xf32> to vector<32xf32>
    %c4_6 = arith.constant 4 : index
    %c32_7 = arith.constant 32 : index
    %37 = vector.load %arg3[%c4_6, %c32_7] : memref<10x128xf32, #tpu.memory_space<vmem>>, vector<1x32xf32>
    %38 = vector.shape_cast %37 : vector<1x32xf32> to vector<32xf32>
    %cst = arith.constant dense<0.000000e+00> : vector<16xf32>
    %39 = vector.multi_reduction <add>, %20, %cst [1] : vector<16x32xf32> to vector<16xf32>
    %40 = vector.shape_cast %39 : vector<16xf32> to vector<16x1xf32>
    %cst_8 = arith.constant 3.200000e+01 : f32
    %41 = vector.broadcast %cst_8 : f32 to vector<16x1xf32>
    %42 = arith.divf %40, %41 : vector<16x1xf32>
    %43 = vector.broadcast %42 : vector<16x1xf32> to vector<16x32xf32>
    %44 = arith.subf %20, %43 : vector<16x32xf32>
    %45 = arith.mulf %44, %44 : vector<16x32xf32>
    %cst_9 = arith.constant dense<0.000000e+00> : vector<16xf32>
    %46 = vector.multi_reduction <add>, %45, %cst_9 [1] : vector<16x32xf32> to vector<16xf32>
    %47 = vector.shape_cast %46 : vector<16xf32> to vector<16x1xf32>
    %cst_10 = arith.constant 3.200000e+01 : f32
    %48 = vector.broadcast %cst_10 : f32 to vector<16x1xf32>
    %49 = arith.divf %47, %48 : vector<16x1xf32>
    %cst_11 = arith.constant 9.99999974E-6 : f32
    %50 = vector.broadcast %cst_11 : f32 to vector<16x1xf32>
    %51 = arith.addf %49, %50 : vector<16x1xf32>
    %52 = math.rsqrt %51 : vector<16x1xf32>
    %53 = vector.broadcast %52 : vector<16x1xf32> to vector<16x32xf32>
    %54 = arith.mulf %44, %53 : vector<16x32xf32>
    %55 = vector.shape_cast %36 : vector<32xf32> to vector<1x32xf32>
    %56 = vector.broadcast %55 : vector<1x32xf32> to vector<16x32xf32>
    %57 = arith.mulf %54, %56 : vector<16x32xf32>
    %58 = vector.shape_cast %38 : vector<32xf32> to vector<1x32xf32>
    %59 = vector.broadcast %58 : vector<1x32xf32> to vector<16x32xf32>
    %60 = arith.addf %57, %59 : vector<16x32xf32>
    %c0_12 = arith.constant 0 : index
    %c0_13 = arith.constant 0 : index
    %c0_14 = arith.constant 0 : index
    %61 = vector.load %arg2[%c0_12, %c0_13, %c0_14] : memref<7x32x128xf32, #tpu.memory_space<vmem>>, vector<1x32x96xf32>
    %62 = vector.shape_cast %61 : vector<1x32x96xf32> to vector<32x96xf32>
    %c0_15 = arith.constant 0 : index
    %c0_16 = arith.constant 0 : index
    %c96 = arith.constant 96 : index
    %63 = vector.load %arg2[%c0_15, %c0_16, %c96] : memref<7x32x128xf32, #tpu.memory_space<vmem>>, vector<1x32x32xf32>
    %64 = vector.shape_cast %63 : vector<1x32x32xf32> to vector<32x32xf32>
    %c2 = arith.constant 2 : index
    %c0_17 = arith.constant 0 : index
    %65 = vector.load %arg3[%c2, %c0_17] : memref<10x128xf32, #tpu.memory_space<vmem>>, vector<1x96xf32>
    %66 = vector.shape_cast %65 : vector<1x96xf32> to vector<96xf32>
    %c2_18 = arith.constant 2 : index
    %c96_19 = arith.constant 96 : index
    %67 = vector.load %arg3[%c2_18, %c96_19] : memref<10x128xf32, #tpu.memory_space<vmem>>, vector<1x32xf32>
    %68 = vector.shape_cast %67 : vector<1x32xf32> to vector<32xf32>
    %cst_20 = arith.constant dense<0.000000e+00> : vector<16x96xf32>
    %69 = tpu.matmul %60, %62, %cst_20 {dimension_numbers = #tpu.dot_dimension_numbers<[1], [0], [0], [1], [0, 0, 1, 1], [], []>} : vector<16x32xf32>, vector<32x96xf32>, vector<16x96xf32> -> vector<16x96xf32>
    %70 = vector.shape_cast %66 : vector<96xf32> to vector<1x96xf32>
    %71 = vector.broadcast %70 : vector<1x96xf32> to vector<16x96xf32>
    %72 = arith.addf %69, %71 : vector<16x96xf32>
    %73 = vector.extract_strided_slice %72 {offsets = [0, 0], sizes = [8, 8], strides = [1, 1]} : vector<16x96xf32> to vector<8x8xf32>
    %cst_21 = arith.constant 0.353553385 : f32
    %74 = vector.broadcast %cst_21 : f32 to vector<8x8xf32>
    %75 = arith.mulf %73, %74 : vector<8x8xf32>
    %76 = vector.extract_strided_slice %72 {offsets = [0, 32], sizes = [8, 8], strides = [1, 1]} : vector<16x96xf32> to vector<8x8xf32>
    %77 = vector.extract_strided_slice %72 {offsets = [0, 64], sizes = [8, 8], strides = [1, 1]} : vector<16x96xf32> to vector<8x8xf32>
    %cst_22 = arith.constant dense<0.000000e+00> : vector<8x8xf32>
    %78 = tpu.matmul %75, %76, %cst_22 {dimension_numbers = #tpu.dot_dimension_numbers<[1], [1], [0], [0], [0, 0, 1, 0], [], []>} : vector<8x8xf32>, vector<8x8xf32>, vector<8x8xf32> -> vector<8x8xf32>
    %cst_23 = arith.constant dense<0xFF800000> : vector<8xf32>
    %79 = vector.multi_reduction <maximumf>, %78, %cst_23 [1] : vector<8x8xf32> to vector<8xf32>
    %80 = vector.shape_cast %79 : vector<8xf32> to vector<8x1xf32>
    %81 = vector.broadcast %80 : vector<8x1xf32> to vector<8x8xf32>
    %82 = arith.subf %78, %81 : vector<8x8xf32>
    %83 = math.exp %82 : vector<8x8xf32>
    %cst_24 = arith.constant dense<0.000000e+00> : vector<8xf32>
    %84 = vector.multi_reduction <add>, %83, %cst_24 [1] : vector<8x8xf32> to vector<8xf32>
    %85 = vector.shape_cast %84 : vector<8xf32> to vector<8x1xf32>
    %86 = vector.broadcast %85 : vector<8x1xf32> to vector<8x8xf32>
    %87 = arith.divf %83, %86 : vector<8x8xf32>
    %cst_25 = arith.constant dense<0.000000e+00> : vector<8x8xf32>
    %88 = tpu.matmul %87, %77, %cst_25 {dimension_numbers = #tpu.dot_dimension_numbers<[1], [0], [0], [1], [0, 0, 1, 1], [], []>} : vector<8x8xf32>, vector<8x8xf32>, vector<8x8xf32> -> vector<8x8xf32>
    %89 = vector.extract_strided_slice %72 {offsets = [0, 8], sizes = [8, 8], strides = [1, 1]} : vector<16x96xf32> to vector<8x8xf32>
    %cst_26 = arith.constant 0.353553385 : f32
    %90 = vector.broadcast %cst_26 : f32 to vector<8x8xf32>
    %91 = arith.mulf %89, %90 : vector<8x8xf32>
    %92 = vector.extract_strided_slice %72 {offsets = [0, 40], sizes = [8, 8], strides = [1, 1]} : vector<16x96xf32> to vector<8x8xf32>
    %93 = vector.extract_strided_slice %72 {offsets = [0, 72], sizes = [8, 8], strides = [1, 1]} : vector<16x96xf32> to vector<8x8xf32>
    %cst_27 = arith.constant dense<0.000000e+00> : vector<8x8xf32>
    %94 = tpu.matmul %91, %92, %cst_27 {dimension_numbers = #tpu.dot_dimension_numbers<[1], [1], [0], [0], [0, 0, 1, 0], [], []>} : vector<8x8xf32>, vector<8x8xf32>, vector<8x8xf32> -> vector<8x8xf32>
    %cst_28 = arith.constant dense<0xFF800000> : vector<8xf32>
    %95 = vector.multi_reduction <maximumf>, %94, %cst_28 [1] : vector<8x8xf32> to vector<8xf32>
    %96 = vector.shape_cast %95 : vector<8xf32> to vector<8x1xf32>
    %97 = vector.broadcast %96 : vector<8x1xf32> to vector<8x8xf32>
    %98 = arith.subf %94, %97 : vector<8x8xf32>
    %99 = math.exp %98 : vector<8x8xf32>
    %cst_29 = arith.constant dense<0.000000e+00> : vector<8xf32>
    %100 = vector.multi_reduction <add>, %99, %cst_29 [1] : vector<8x8xf32> to vector<8xf32>
    %101 = vector.shape_cast %100 : vector<8xf32> to vector<8x1xf32>
    %102 = vector.broadcast %101 : vector<8x1xf32> to vector<8x8xf32>
    %103 = arith.divf %99, %102 : vector<8x8xf32>
    %104 = arith.addf %87, %103 : vector<8x8xf32>
    %cst_30 = arith.constant dense<0.000000e+00> : vector<8x8xf32>
    %105 = tpu.matmul %103, %93, %cst_30 {dimension_numbers = #tpu.dot_dimension_numbers<[1], [0], [0], [1], [0, 0, 1, 1], [], []>} : vector<8x8xf32>, vector<8x8xf32>, vector<8x8xf32> -> vector<8x8xf32>
    %106 = vector.extract_strided_slice %72 {offsets = [0, 16], sizes = [8, 8], strides = [1, 1]} : vector<16x96xf32> to vector<8x8xf32>
    %cst_31 = arith.constant 0.353553385 : f32
    %107 = vector.broadcast %cst_31 : f32 to vector<8x8xf32>
    %108 = arith.mulf %106, %107 : vector<8x8xf32>
    %109 = vector.extract_strided_slice %72 {offsets = [0, 48], sizes = [8, 8], strides = [1, 1]} : vector<16x96xf32> to vector<8x8xf32>
    %110 = vector.extract_strided_slice %72 {offsets = [0, 80], sizes = [8, 8], strides = [1, 1]} : vector<16x96xf32> to vector<8x8xf32>
    %cst_32 = arith.constant dense<0.000000e+00> : vector<8x8xf32>
    %111 = tpu.matmul %108, %109, %cst_32 {dimension_numbers = #tpu.dot_dimension_numbers<[1], [1], [0], [0], [0, 0, 1, 0], [], []>} : vector<8x8xf32>, vector<8x8xf32>, vector<8x8xf32> -> vector<8x8xf32>
    %cst_33 = arith.constant dense<0xFF800000> : vector<8xf32>
    %112 = vector.multi_reduction <maximumf>, %111, %cst_33 [1] : vector<8x8xf32> to vector<8xf32>
    %113 = vector.shape_cast %112 : vector<8xf32> to vector<8x1xf32>
    %114 = vector.broadcast %113 : vector<8x1xf32> to vector<8x8xf32>
    %115 = arith.subf %111, %114 : vector<8x8xf32>
    %116 = math.exp %115 : vector<8x8xf32>
    %cst_34 = arith.constant dense<0.000000e+00> : vector<8xf32>
    %117 = vector.multi_reduction <add>, %116, %cst_34 [1] : vector<8x8xf32> to vector<8xf32>
    %118 = vector.shape_cast %117 : vector<8xf32> to vector<8x1xf32>
    %119 = vector.broadcast %118 : vector<8x1xf32> to vector<8x8xf32>
    %120 = arith.divf %116, %119 : vector<8x8xf32>
    %121 = arith.addf %104, %120 : vector<8x8xf32>
    %cst_35 = arith.constant dense<0.000000e+00> : vector<8x8xf32>
    %122 = tpu.matmul %120, %110, %cst_35 {dimension_numbers = #tpu.dot_dimension_numbers<[1], [0], [0], [1], [0, 0, 1, 1], [], []>} : vector<8x8xf32>, vector<8x8xf32>, vector<8x8xf32> -> vector<8x8xf32>
    %123 = vector.extract_strided_slice %72 {offsets = [0, 24], sizes = [8, 8], strides = [1, 1]} : vector<16x96xf32> to vector<8x8xf32>
    %cst_36 = arith.constant 0.353553385 : f32
    %124 = vector.broadcast %cst_36 : f32 to vector<8x8xf32>
    %125 = arith.mulf %123, %124 : vector<8x8xf32>
    %126 = vector.extract_strided_slice %72 {offsets = [0, 56], sizes = [8, 8], strides = [1, 1]} : vector<16x96xf32> to vector<8x8xf32>
    %127 = vector.extract_strided_slice %72 {offsets = [0, 88], sizes = [8, 8], strides = [1, 1]} : vector<16x96xf32> to vector<8x8xf32>
    %cst_37 = arith.constant dense<0.000000e+00> : vector<8x8xf32>
    %128 = tpu.matmul %125, %126, %cst_37 {dimension_numbers = #tpu.dot_dimension_numbers<[1], [1], [0], [0], [0, 0, 1, 0], [], []>} : vector<8x8xf32>, vector<8x8xf32>, vector<8x8xf32> -> vector<8x8xf32>
    %cst_38 = arith.constant dense<0xFF800000> : vector<8xf32>
    %129 = vector.multi_reduction <maximumf>, %128, %cst_38 [1] : vector<8x8xf32> to vector<8xf32>
    %130 = vector.shape_cast %129 : vector<8xf32> to vector<8x1xf32>
    %131 = vector.broadcast %130 : vector<8x1xf32> to vector<8x8xf32>
    %132 = arith.subf %128, %131 : vector<8x8xf32>
    %133 = math.exp %132 : vector<8x8xf32>
    %cst_39 = arith.constant dense<0.000000e+00> : vector<8xf32>
    %134 = vector.multi_reduction <add>, %133, %cst_39 [1] : vector<8x8xf32> to vector<8xf32>
    %135 = vector.shape_cast %134 : vector<8xf32> to vector<8x1xf32>
    %136 = vector.broadcast %135 : vector<8x1xf32> to vector<8x8xf32>
    %137 = arith.divf %133, %136 : vector<8x8xf32>
    %138 = arith.addf %121, %137 : vector<8x8xf32>
    %cst_40 = arith.constant dense<0.000000e+00> : vector<8x8xf32>
    %139 = tpu.matmul %137, %127, %cst_40 {dimension_numbers = #tpu.dot_dimension_numbers<[1], [0], [0], [1], [0, 0, 1, 1], [], []>} : vector<8x8xf32>, vector<8x8xf32>, vector<8x8xf32> -> vector<8x8xf32>
    %140 = tpu.concatenate %88, %105, %122, %139 in 1 : vector<8x8xf32>, vector<8x8xf32>, vector<8x8xf32>, vector<8x8xf32> -> vector<8x32xf32>
    %cst_41 = arith.constant 2.500000e-01 : f32
    %141 = vector.broadcast %cst_41 : f32 to vector<8x8xf32>
    %142 = arith.mulf %138, %141 : vector<8x8xf32>
    %143 = vector.extract_strided_slice %72 {offsets = [8, 0], sizes = [8, 8], strides = [1, 1]} : vector<16x96xf32> to vector<8x8xf32>
    %cst_42 = arith.constant 0.353553385 : f32
    %144 = vector.broadcast %cst_42 : f32 to vector<8x8xf32>
    %145 = arith.mulf %143, %144 : vector<8x8xf32>
    %146 = vector.extract_strided_slice %72 {offsets = [8, 32], sizes = [8, 8], strides = [1, 1]} : vector<16x96xf32> to vector<8x8xf32>
    %147 = vector.extract_strided_slice %72 {offsets = [8, 64], sizes = [8, 8], strides = [1, 1]} : vector<16x96xf32> to vector<8x8xf32>
    %cst_43 = arith.constant dense<0.000000e+00> : vector<8x8xf32>
    %148 = tpu.matmul %145, %146, %cst_43 {dimension_numbers = #tpu.dot_dimension_numbers<[1], [1], [0], [0], [0, 0, 1, 0], [], []>} : vector<8x8xf32>, vector<8x8xf32>, vector<8x8xf32> -> vector<8x8xf32>
    %cst_44 = arith.constant dense<0xFF800000> : vector<8xf32>
    %149 = vector.multi_reduction <maximumf>, %148, %cst_44 [1] : vector<8x8xf32> to vector<8xf32>
    %150 = vector.shape_cast %149 : vector<8xf32> to vector<8x1xf32>
    %151 = vector.broadcast %150 : vector<8x1xf32> to vector<8x8xf32>
    %152 = arith.subf %148, %151 : vector<8x8xf32>
    %153 = math.exp %152 : vector<8x8xf32>
    %cst_45 = arith.constant dense<0.000000e+00> : vector<8xf32>
    %154 = vector.multi_reduction <add>, %153, %cst_45 [1] : vector<8x8xf32> to vector<8xf32>
    %155 = vector.shape_cast %154 : vector<8xf32> to vector<8x1xf32>
    %156 = vector.broadcast %155 : vector<8x1xf32> to vector<8x8xf32>
    %157 = arith.divf %153, %156 : vector<8x8xf32>
    %cst_46 = arith.constant dense<0.000000e+00> : vector<8x8xf32>
    %158 = tpu.matmul %157, %147, %cst_46 {dimension_numbers = #tpu.dot_dimension_numbers<[1], [0], [0], [1], [0, 0, 1, 1], [], []>} : vector<8x8xf32>, vector<8x8xf32>, vector<8x8xf32> -> vector<8x8xf32>
    %159 = vector.extract_strided_slice %72 {offsets = [8, 8], sizes = [8, 8], strides = [1, 1]} : vector<16x96xf32> to vector<8x8xf32>
    %cst_47 = arith.constant 0.353553385 : f32
    %160 = vector.broadcast %cst_47 : f32 to vector<8x8xf32>
    %161 = arith.mulf %159, %160 : vector<8x8xf32>
    %162 = vector.extract_strided_slice %72 {offsets = [8, 40], sizes = [8, 8], strides = [1, 1]} : vector<16x96xf32> to vector<8x8xf32>
    %163 = vector.extract_strided_slice %72 {offsets = [8, 72], sizes = [8, 8], strides = [1, 1]} : vector<16x96xf32> to vector<8x8xf32>
    %cst_48 = arith.constant dense<0.000000e+00> : vector<8x8xf32>
    %164 = tpu.matmul %161, %162, %cst_48 {dimension_numbers = #tpu.dot_dimension_numbers<[1], [1], [0], [0], [0, 0, 1, 0], [], []>} : vector<8x8xf32>, vector<8x8xf32>, vector<8x8xf32> -> vector<8x8xf32>
    %cst_49 = arith.constant dense<0xFF800000> : vector<8xf32>
    %165 = vector.multi_reduction <maximumf>, %164, %cst_49 [1] : vector<8x8xf32> to vector<8xf32>
    %166 = vector.shape_cast %165 : vector<8xf32> to vector<8x1xf32>
    %167 = vector.broadcast %166 : vector<8x1xf32> to vector<8x8xf32>
    %168 = arith.subf %164, %167 : vector<8x8xf32>
    %169 = math.exp %168 : vector<8x8xf32>
    %cst_50 = arith.constant dense<0.000000e+00> : vector<8xf32>
    %170 = vector.multi_reduction <add>, %169, %cst_50 [1] : vector<8x8xf32> to vector<8xf32>
    %171 = vector.shape_cast %170 : vector<8xf32> to vector<8x1xf32>
    %172 = vector.broadcast %171 : vector<8x1xf32> to vector<8x8xf32>
    %173 = arith.divf %169, %172 : vector<8x8xf32>
    %174 = arith.addf %157, %173 : vector<8x8xf32>
    %cst_51 = arith.constant dense<0.000000e+00> : vector<8x8xf32>
    %175 = tpu.matmul %173, %163, %cst_51 {dimension_numbers = #tpu.dot_dimension_numbers<[1], [0], [0], [1], [0, 0, 1, 1], [], []>} : vector<8x8xf32>, vector<8x8xf32>, vector<8x8xf32> -> vector<8x8xf32>
    %176 = vector.extract_strided_slice %72 {offsets = [8, 16], sizes = [8, 8], strides = [1, 1]} : vector<16x96xf32> to vector<8x8xf32>
    %cst_52 = arith.constant 0.353553385 : f32
    %177 = vector.broadcast %cst_52 : f32 to vector<8x8xf32>
    %178 = arith.mulf %176, %177 : vector<8x8xf32>
    %179 = vector.extract_strided_slice %72 {offsets = [8, 48], sizes = [8, 8], strides = [1, 1]} : vector<16x96xf32> to vector<8x8xf32>
    %180 = vector.extract_strided_slice %72 {offsets = [8, 80], sizes = [8, 8], strides = [1, 1]} : vector<16x96xf32> to vector<8x8xf32>
    %cst_53 = arith.constant dense<0.000000e+00> : vector<8x8xf32>
    %181 = tpu.matmul %178, %179, %cst_53 {dimension_numbers = #tpu.dot_dimension_numbers<[1], [1], [0], [0], [0, 0, 1, 0], [], []>} : vector<8x8xf32>, vector<8x8xf32>, vector<8x8xf32> -> vector<8x8xf32>
    %cst_54 = arith.constant dense<0xFF800000> : vector<8xf32>
    %182 = vector.multi_reduction <maximumf>, %181, %cst_54 [1] : vector<8x8xf32> to vector<8xf32>
    %183 = vector.shape_cast %182 : vector<8xf32> to vector<8x1xf32>
    %184 = vector.broadcast %183 : vector<8x1xf32> to vector<8x8xf32>
    %185 = arith.subf %181, %184 : vector<8x8xf32>
    %186 = math.exp %185 : vector<8x8xf32>
    %cst_55 = arith.constant dense<0.000000e+00> : vector<8xf32>
    %187 = vector.multi_reduction <add>, %186, %cst_55 [1] : vector<8x8xf32> to vector<8xf32>
    %188 = vector.shape_cast %187 : vector<8xf32> to vector<8x1xf32>
    %189 = vector.broadcast %188 : vector<8x1xf32> to vector<8x8xf32>
    %190 = arith.divf %186, %189 : vector<8x8xf32>
    %191 = arith.addf %174, %190 : vector<8x8xf32>
    %cst_56 = arith.constant dense<0.000000e+00> : vector<8x8xf32>
    %192 = tpu.matmul %190, %180, %cst_56 {dimension_numbers = #tpu.dot_dimension_numbers<[1], [0], [0], [1], [0, 0, 1, 1], [], []>} : vector<8x8xf32>, vector<8x8xf32>, vector<8x8xf32> -> vector<8x8xf32>
    %193 = vector.extract_strided_slice %72 {offsets = [8, 24], sizes = [8, 8], strides = [1, 1]} : vector<16x96xf32> to vector<8x8xf32>
    %cst_57 = arith.constant 0.353553385 : f32
    %194 = vector.broadcast %cst_57 : f32 to vector<8x8xf32>
    %195 = arith.mulf %193, %194 : vector<8x8xf32>
    %196 = vector.extract_strided_slice %72 {offsets = [8, 56], sizes = [8, 8], strides = [1, 1]} : vector<16x96xf32> to vector<8x8xf32>
    %197 = vector.extract_strided_slice %72 {offsets = [8, 88], sizes = [8, 8], strides = [1, 1]} : vector<16x96xf32> to vector<8x8xf32>
    %cst_58 = arith.constant dense<0.000000e+00> : vector<8x8xf32>
    %198 = tpu.matmul %195, %196, %cst_58 {dimension_numbers = #tpu.dot_dimension_numbers<[1], [1], [0], [0], [0, 0, 1, 0], [], []>} : vector<8x8xf32>, vector<8x8xf32>, vector<8x8xf32> -> vector<8x8xf32>
    %cst_59 = arith.constant dense<0xFF800000> : vector<8xf32>
    %199 = vector.multi_reduction <maximumf>, %198, %cst_59 [1] : vector<8x8xf32> to vector<8xf32>
    %200 = vector.shape_cast %199 : vector<8xf32> to vector<8x1xf32>
    %201 = vector.broadcast %200 : vector<8x1xf32> to vector<8x8xf32>
    %202 = arith.subf %198, %201 : vector<8x8xf32>
    %203 = math.exp %202 : vector<8x8xf32>
    %cst_60 = arith.constant dense<0.000000e+00> : vector<8xf32>
    %204 = vector.multi_reduction <add>, %203, %cst_60 [1] : vector<8x8xf32> to vector<8xf32>
    %205 = vector.shape_cast %204 : vector<8xf32> to vector<8x1xf32>
    %206 = vector.broadcast %205 : vector<8x1xf32> to vector<8x8xf32>
    %207 = arith.divf %203, %206 : vector<8x8xf32>
    %208 = arith.addf %191, %207 : vector<8x8xf32>
    %cst_61 = arith.constant dense<0.000000e+00> : vector<8x8xf32>
    %209 = tpu.matmul %207, %197, %cst_61 {dimension_numbers = #tpu.dot_dimension_numbers<[1], [0], [0], [1], [0, 0, 1, 1], [], []>} : vector<8x8xf32>, vector<8x8xf32>, vector<8x8xf32> -> vector<8x8xf32>
    %210 = tpu.concatenate %158, %175, %192, %209 in 1 : vector<8x8xf32>, vector<8x8xf32>, vector<8x8xf32>, vector<8x8xf32> -> vector<8x32xf32>
    %cst_62 = arith.constant 2.500000e-01 : f32
    %211 = vector.broadcast %cst_62 : f32 to vector<8x8xf32>
    %212 = arith.mulf %208, %211 : vector<8x8xf32>
    %213 = tpu.concatenate %140, %210 in 0 : vector<8x32xf32>, vector<8x32xf32> -> vector<16x32xf32>
    %cst_63 = arith.constant dense<0.000000e+00> : vector<16x32xf32>
    %214 = tpu.matmul %213, %64, %cst_63 {dimension_numbers = #tpu.dot_dimension_numbers<[1], [0], [0], [1], [0, 0, 1, 1], [], []>} : vector<16x32xf32>, vector<32x32xf32>, vector<16x32xf32> -> vector<16x32xf32>
    %215 = vector.shape_cast %68 : vector<32xf32> to vector<1x32xf32>
    %216 = vector.broadcast %215 : vector<1x32xf32> to vector<16x32xf32>
    %217 = arith.addf %214, %216 : vector<16x32xf32>
    %218 = arith.addf %20, %217 : vector<16x32xf32>
    %c4_64 = arith.constant 4 : index
    %c64_65 = arith.constant 64 : index
    %219 = vector.load %arg3[%c4_64, %c64_65] : memref<10x128xf32, #tpu.memory_space<vmem>>, vector<1x32xf32>
    %220 = vector.shape_cast %219 : vector<1x32xf32> to vector<32xf32>
    %c4_66 = arith.constant 4 : index
    %c96_67 = arith.constant 96 : index
    %221 = vector.load %arg3[%c4_66, %c96_67] : memref<10x128xf32, #tpu.memory_space<vmem>>, vector<1x32xf32>
    %222 = vector.shape_cast %221 : vector<1x32xf32> to vector<32xf32>
    %cst_68 = arith.constant dense<0.000000e+00> : vector<16xf32>
    %223 = vector.multi_reduction <add>, %218, %cst_68 [1] : vector<16x32xf32> to vector<16xf32>
    %224 = vector.shape_cast %223 : vector<16xf32> to vector<16x1xf32>
    %cst_69 = arith.constant 3.200000e+01 : f32
    %225 = vector.broadcast %cst_69 : f32 to vector<16x1xf32>
    %226 = arith.divf %224, %225 : vector<16x1xf32>
    %227 = vector.broadcast %226 : vector<16x1xf32> to vector<16x32xf32>
    %228 = arith.subf %218, %227 : vector<16x32xf32>
    %229 = arith.mulf %228, %228 : vector<16x32xf32>
    %cst_70 = arith.constant dense<0.000000e+00> : vector<16xf32>
    %230 = vector.multi_reduction <add>, %229, %cst_70 [1] : vector<16x32xf32> to vector<16xf32>
    %231 = vector.shape_cast %230 : vector<16xf32> to vector<16x1xf32>
    %cst_71 = arith.constant 3.200000e+01 : f32
    %232 = vector.broadcast %cst_71 : f32 to vector<16x1xf32>
    %233 = arith.divf %231, %232 : vector<16x1xf32>
    %cst_72 = arith.constant 9.99999974E-6 : f32
    %234 = vector.broadcast %cst_72 : f32 to vector<16x1xf32>
    %235 = arith.addf %233, %234 : vector<16x1xf32>
    %236 = math.rsqrt %235 : vector<16x1xf32>
    %237 = vector.broadcast %236 : vector<16x1xf32> to vector<16x32xf32>
    %238 = arith.mulf %228, %237 : vector<16x32xf32>
    %239 = vector.shape_cast %220 : vector<32xf32> to vector<1x32xf32>
    %240 = vector.broadcast %239 : vector<1x32xf32> to vector<16x32xf32>
    %241 = arith.mulf %238, %240 : vector<16x32xf32>
    %242 = vector.shape_cast %222 : vector<32xf32> to vector<1x32xf32>
    %243 = vector.broadcast %242 : vector<1x32xf32> to vector<16x32xf32>
    %244 = arith.addf %241, %243 : vector<16x32xf32>
    %c1 = arith.constant 1 : index
    %c0_73 = arith.constant 0 : index
    %c0_74 = arith.constant 0 : index
    %245 = vector.load %arg2[%c1, %c0_73, %c0_74] : memref<7x32x128xf32, #tpu.memory_space<vmem>>, vector<1x32x96xf32>
    %246 = vector.shape_cast %245 : vector<1x32x96xf32> to vector<32x96xf32>
    %c1_75 = arith.constant 1 : index
    %c0_76 = arith.constant 0 : index
    %c96_77 = arith.constant 96 : index
    %247 = vector.load %arg2[%c1_75, %c0_76, %c96_77] : memref<7x32x128xf32, #tpu.memory_space<vmem>>, vector<1x32x32xf32>
    %248 = vector.shape_cast %247 : vector<1x32x32xf32> to vector<32x32xf32>
    %c3 = arith.constant 3 : index
    %c0_78 = arith.constant 0 : index
    %249 = vector.load %arg3[%c3, %c0_78] : memref<10x128xf32, #tpu.memory_space<vmem>>, vector<1x96xf32>
    %250 = vector.shape_cast %249 : vector<1x96xf32> to vector<96xf32>
    %c3_79 = arith.constant 3 : index
    %c96_80 = arith.constant 96 : index
    %251 = vector.load %arg3[%c3_79, %c96_80] : memref<10x128xf32, #tpu.memory_space<vmem>>, vector<1x32xf32>
    %252 = vector.shape_cast %251 : vector<1x32xf32> to vector<32xf32>
    %cst_81 = arith.constant dense<0.000000e+00> : vector<16x96xf32>
    %253 = tpu.matmul %244, %246, %cst_81 {dimension_numbers = #tpu.dot_dimension_numbers<[1], [0], [0], [1], [0, 0, 1, 1], [], []>} : vector<16x32xf32>, vector<32x96xf32>, vector<16x96xf32> -> vector<16x96xf32>
    %254 = vector.shape_cast %250 : vector<96xf32> to vector<1x96xf32>
    %255 = vector.broadcast %254 : vector<1x96xf32> to vector<16x96xf32>
    %256 = arith.addf %253, %255 : vector<16x96xf32>
    %cst_82 = arith.constant dense<0.000000e+00> : vector<16x96xf32>
    %257 = tpu.matmul %34, %246, %cst_82 {dimension_numbers = #tpu.dot_dimension_numbers<[1], [0], [0], [1], [0, 0, 1, 1], [], []>} : vector<16x32xf32>, vector<32x96xf32>, vector<16x96xf32> -> vector<16x96xf32>
    %258 = vector.shape_cast %250 : vector<96xf32> to vector<1x96xf32>
    %259 = vector.broadcast %258 : vector<1x96xf32> to vector<16x96xf32>
    %260 = arith.addf %257, %259 : vector<16x96xf32>
    %261 = vector.extract_strided_slice %256 {offsets = [0, 0], sizes = [8, 8], strides = [1, 1]} : vector<16x96xf32> to vector<8x8xf32>
    %cst_83 = arith.constant 0.353553385 : f32
    %262 = vector.broadcast %cst_83 : f32 to vector<8x8xf32>
    %263 = arith.mulf %261, %262 : vector<8x8xf32>
    %264 = vector.extract_strided_slice %260 {offsets = [0, 32], sizes = [8, 8], strides = [1, 1]} : vector<16x96xf32> to vector<8x8xf32>
    %265 = vector.extract_strided_slice %260 {offsets = [0, 64], sizes = [8, 8], strides = [1, 1]} : vector<16x96xf32> to vector<8x8xf32>
    %cst_84 = arith.constant dense<0.000000e+00> : vector<8x8xf32>
    %266 = tpu.matmul %263, %264, %cst_84 {dimension_numbers = #tpu.dot_dimension_numbers<[1], [1], [0], [0], [0, 0, 1, 0], [], []>} : vector<8x8xf32>, vector<8x8xf32>, vector<8x8xf32> -> vector<8x8xf32>
    %cst_85 = arith.constant dense<0xFF800000> : vector<8xf32>
    %267 = vector.multi_reduction <maximumf>, %266, %cst_85 [1] : vector<8x8xf32> to vector<8xf32>
    %268 = vector.shape_cast %267 : vector<8xf32> to vector<8x1xf32>
    %269 = vector.broadcast %268 : vector<8x1xf32> to vector<8x8xf32>
    %270 = arith.subf %266, %269 : vector<8x8xf32>
    %271 = math.exp %270 : vector<8x8xf32>
    %cst_86 = arith.constant dense<0.000000e+00> : vector<8xf32>
    %272 = vector.multi_reduction <add>, %271, %cst_86 [1] : vector<8x8xf32> to vector<8xf32>
    %273 = vector.shape_cast %272 : vector<8xf32> to vector<8x1xf32>
    %274 = vector.broadcast %273 : vector<8x1xf32> to vector<8x8xf32>
    %275 = arith.divf %271, %274 : vector<8x8xf32>
    %cst_87 = arith.constant dense<0.000000e+00> : vector<8x8xf32>
    %276 = tpu.matmul %275, %265, %cst_87 {dimension_numbers = #tpu.dot_dimension_numbers<[1], [0], [0], [1], [0, 0, 1, 1], [], []>} : vector<8x8xf32>, vector<8x8xf32>, vector<8x8xf32> -> vector<8x8xf32>
    %277 = vector.extract_strided_slice %256 {offsets = [0, 8], sizes = [8, 8], strides = [1, 1]} : vector<16x96xf32> to vector<8x8xf32>
    %cst_88 = arith.constant 0.353553385 : f32
    %278 = vector.broadcast %cst_88 : f32 to vector<8x8xf32>
    %279 = arith.mulf %277, %278 : vector<8x8xf32>
    %280 = vector.extract_strided_slice %260 {offsets = [0, 40], sizes = [8, 8], strides = [1, 1]} : vector<16x96xf32> to vector<8x8xf32>
    %281 = vector.extract_strided_slice %260 {offsets = [0, 72], sizes = [8, 8], strides = [1, 1]} : vector<16x96xf32> to vector<8x8xf32>
    %cst_89 = arith.constant dense<0.000000e+00> : vector<8x8xf32>
    %282 = tpu.matmul %279, %280, %cst_89 {dimension_numbers = #tpu.dot_dimension_numbers<[1], [1], [0], [0], [0, 0, 1, 0], [], []>} : vector<8x8xf32>, vector<8x8xf32>, vector<8x8xf32> -> vector<8x8xf32>
    %cst_90 = arith.constant dense<0xFF800000> : vector<8xf32>
    %283 = vector.multi_reduction <maximumf>, %282, %cst_90 [1] : vector<8x8xf32> to vector<8xf32>
    %284 = vector.shape_cast %283 : vector<8xf32> to vector<8x1xf32>
    %285 = vector.broadcast %284 : vector<8x1xf32> to vector<8x8xf32>
    %286 = arith.subf %282, %285 : vector<8x8xf32>
    %287 = math.exp %286 : vector<8x8xf32>
    %cst_91 = arith.constant dense<0.000000e+00> : vector<8xf32>
    %288 = vector.multi_reduction <add>, %287, %cst_91 [1] : vector<8x8xf32> to vector<8xf32>
    %289 = vector.shape_cast %288 : vector<8xf32> to vector<8x1xf32>
    %290 = vector.broadcast %289 : vector<8x1xf32> to vector<8x8xf32>
    %291 = arith.divf %287, %290 : vector<8x8xf32>
    %292 = arith.addf %275, %291 : vector<8x8xf32>
    %cst_92 = arith.constant dense<0.000000e+00> : vector<8x8xf32>
    %293 = tpu.matmul %291, %281, %cst_92 {dimension_numbers = #tpu.dot_dimension_numbers<[1], [0], [0], [1], [0, 0, 1, 1], [], []>} : vector<8x8xf32>, vector<8x8xf32>, vector<8x8xf32> -> vector<8x8xf32>
    %294 = vector.extract_strided_slice %256 {offsets = [0, 16], sizes = [8, 8], strides = [1, 1]} : vector<16x96xf32> to vector<8x8xf32>
    %cst_93 = arith.constant 0.353553385 : f32
    %295 = vector.broadcast %cst_93 : f32 to vector<8x8xf32>
    %296 = arith.mulf %294, %295 : vector<8x8xf32>
    %297 = vector.extract_strided_slice %260 {offsets = [0, 48], sizes = [8, 8], strides = [1, 1]} : vector<16x96xf32> to vector<8x8xf32>
    %298 = vector.extract_strided_slice %260 {offsets = [0, 80], sizes = [8, 8], strides = [1, 1]} : vector<16x96xf32> to vector<8x8xf32>
    %cst_94 = arith.constant dense<0.000000e+00> : vector<8x8xf32>
    %299 = tpu.matmul %296, %297, %cst_94 {dimension_numbers = #tpu.dot_dimension_numbers<[1], [1], [0], [0], [0, 0, 1, 0], [], []>} : vector<8x8xf32>, vector<8x8xf32>, vector<8x8xf32> -> vector<8x8xf32>
    %cst_95 = arith.constant dense<0xFF800000> : vector<8xf32>
    %300 = vector.multi_reduction <maximumf>, %299, %cst_95 [1] : vector<8x8xf32> to vector<8xf32>
    %301 = vector.shape_cast %300 : vector<8xf32> to vector<8x1xf32>
    %302 = vector.broadcast %301 : vector<8x1xf32> to vector<8x8xf32>
    %303 = arith.subf %299, %302 : vector<8x8xf32>
    %304 = math.exp %303 : vector<8x8xf32>
    %cst_96 = arith.constant dense<0.000000e+00> : vector<8xf32>
    %305 = vector.multi_reduction <add>, %304, %cst_96 [1] : vector<8x8xf32> to vector<8xf32>
    %306 = vector.shape_cast %305 : vector<8xf32> to vector<8x1xf32>
    %307 = vector.broadcast %306 : vector<8x1xf32> to vector<8x8xf32>
    %308 = arith.divf %304, %307 : vector<8x8xf32>
    %309 = arith.addf %292, %308 : vector<8x8xf32>
    %cst_97 = arith.constant dense<0.000000e+00> : vector<8x8xf32>
    %310 = tpu.matmul %308, %298, %cst_97 {dimension_numbers = #tpu.dot_dimension_numbers<[1], [0], [0], [1], [0, 0, 1, 1], [], []>} : vector<8x8xf32>, vector<8x8xf32>, vector<8x8xf32> -> vector<8x8xf32>
    %311 = vector.extract_strided_slice %256 {offsets = [0, 24], sizes = [8, 8], strides = [1, 1]} : vector<16x96xf32> to vector<8x8xf32>
    %cst_98 = arith.constant 0.353553385 : f32
    %312 = vector.broadcast %cst_98 : f32 to vector<8x8xf32>
    %313 = arith.mulf %311, %312 : vector<8x8xf32>
    %314 = vector.extract_strided_slice %260 {offsets = [0, 56], sizes = [8, 8], strides = [1, 1]} : vector<16x96xf32> to vector<8x8xf32>
    %315 = vector.extract_strided_slice %260 {offsets = [0, 88], sizes = [8, 8], strides = [1, 1]} : vector<16x96xf32> to vector<8x8xf32>
    %cst_99 = arith.constant dense<0.000000e+00> : vector<8x8xf32>
    %316 = tpu.matmul %313, %314, %cst_99 {dimension_numbers = #tpu.dot_dimension_numbers<[1], [1], [0], [0], [0, 0, 1, 0], [], []>} : vector<8x8xf32>, vector<8x8xf32>, vector<8x8xf32> -> vector<8x8xf32>
    %cst_100 = arith.constant dense<0xFF800000> : vector<8xf32>
    %317 = vector.multi_reduction <maximumf>, %316, %cst_100 [1] : vector<8x8xf32> to vector<8xf32>
    %318 = vector.shape_cast %317 : vector<8xf32> to vector<8x1xf32>
    %319 = vector.broadcast %318 : vector<8x1xf32> to vector<8x8xf32>
    %320 = arith.subf %316, %319 : vector<8x8xf32>
    %321 = math.exp %320 : vector<8x8xf32>
    %cst_101 = arith.constant dense<0.000000e+00> : vector<8xf32>
    %322 = vector.multi_reduction <add>, %321, %cst_101 [1] : vector<8x8xf32> to vector<8xf32>
    %323 = vector.shape_cast %322 : vector<8xf32> to vector<8x1xf32>
    %324 = vector.broadcast %323 : vector<8x1xf32> to vector<8x8xf32>
    %325 = arith.divf %321, %324 : vector<8x8xf32>
    %326 = arith.addf %309, %325 : vector<8x8xf32>
    %cst_102 = arith.constant dense<0.000000e+00> : vector<8x8xf32>
    %327 = tpu.matmul %325, %315, %cst_102 {dimension_numbers = #tpu.dot_dimension_numbers<[1], [0], [0], [1], [0, 0, 1, 1], [], []>} : vector<8x8xf32>, vector<8x8xf32>, vector<8x8xf32> -> vector<8x8xf32>
    %328 = tpu.concatenate %276, %293, %310, %327 in 1 : vector<8x8xf32>, vector<8x8xf32>, vector<8x8xf32>, vector<8x8xf32> -> vector<8x32xf32>
    %cst_103 = arith.constant 2.500000e-01 : f32
    %329 = vector.broadcast %cst_103 : f32 to vector<8x8xf32>
    %330 = arith.mulf %326, %329 : vector<8x8xf32>
    %331 = vector.extract_strided_slice %256 {offsets = [8, 0], sizes = [8, 8], strides = [1, 1]} : vector<16x96xf32> to vector<8x8xf32>
    %cst_104 = arith.constant 0.353553385 : f32
    %332 = vector.broadcast %cst_104 : f32 to vector<8x8xf32>
    %333 = arith.mulf %331, %332 : vector<8x8xf32>
    %334 = vector.extract_strided_slice %260 {offsets = [8, 32], sizes = [8, 8], strides = [1, 1]} : vector<16x96xf32> to vector<8x8xf32>
    %335 = vector.extract_strided_slice %260 {offsets = [8, 64], sizes = [8, 8], strides = [1, 1]} : vector<16x96xf32> to vector<8x8xf32>
    %cst_105 = arith.constant dense<0.000000e+00> : vector<8x8xf32>
    %336 = tpu.matmul %333, %334, %cst_105 {dimension_numbers = #tpu.dot_dimension_numbers<[1], [1], [0], [0], [0, 0, 1, 0], [], []>} : vector<8x8xf32>, vector<8x8xf32>, vector<8x8xf32> -> vector<8x8xf32>
    %cst_106 = arith.constant dense<0xFF800000> : vector<8xf32>
    %337 = vector.multi_reduction <maximumf>, %336, %cst_106 [1] : vector<8x8xf32> to vector<8xf32>
    %338 = vector.shape_cast %337 : vector<8xf32> to vector<8x1xf32>
    %339 = vector.broadcast %338 : vector<8x1xf32> to vector<8x8xf32>
    %340 = arith.subf %336, %339 : vector<8x8xf32>
    %341 = math.exp %340 : vector<8x8xf32>
    %cst_107 = arith.constant dense<0.000000e+00> : vector<8xf32>
    %342 = vector.multi_reduction <add>, %341, %cst_107 [1] : vector<8x8xf32> to vector<8xf32>
    %343 = vector.shape_cast %342 : vector<8xf32> to vector<8x1xf32>
    %344 = vector.broadcast %343 : vector<8x1xf32> to vector<8x8xf32>
    %345 = arith.divf %341, %344 : vector<8x8xf32>
    %cst_108 = arith.constant dense<0.000000e+00> : vector<8x8xf32>
    %346 = tpu.matmul %345, %335, %cst_108 {dimension_numbers = #tpu.dot_dimension_numbers<[1], [0], [0], [1], [0, 0, 1, 1], [], []>} : vector<8x8xf32>, vector<8x8xf32>, vector<8x8xf32> -> vector<8x8xf32>
    %347 = vector.extract_strided_slice %256 {offsets = [8, 8], sizes = [8, 8], strides = [1, 1]} : vector<16x96xf32> to vector<8x8xf32>
    %cst_109 = arith.constant 0.353553385 : f32
    %348 = vector.broadcast %cst_109 : f32 to vector<8x8xf32>
    %349 = arith.mulf %347, %348 : vector<8x8xf32>
    %350 = vector.extract_strided_slice %260 {offsets = [8, 40], sizes = [8, 8], strides = [1, 1]} : vector<16x96xf32> to vector<8x8xf32>
    %351 = vector.extract_strided_slice %260 {offsets = [8, 72], sizes = [8, 8], strides = [1, 1]} : vector<16x96xf32> to vector<8x8xf32>
    %cst_110 = arith.constant dense<0.000000e+00> : vector<8x8xf32>
    %352 = tpu.matmul %349, %350, %cst_110 {dimension_numbers = #tpu.dot_dimension_numbers<[1], [1], [0], [0], [0, 0, 1, 0], [], []>} : vector<8x8xf32>, vector<8x8xf32>, vector<8x8xf32> -> vector<8x8xf32>
    %cst_111 = arith.constant dense<0xFF800000> : vector<8xf32>
    %353 = vector.multi_reduction <maximumf>, %352, %cst_111 [1] : vector<8x8xf32> to vector<8xf32>
    %354 = vector.shape_cast %353 : vector<8xf32> to vector<8x1xf32>
    %355 = vector.broadcast %354 : vector<8x1xf32> to vector<8x8xf32>
    %356 = arith.subf %352, %355 : vector<8x8xf32>
    %357 = math.exp %356 : vector<8x8xf32>
    %cst_112 = arith.constant dense<0.000000e+00> : vector<8xf32>
    %358 = vector.multi_reduction <add>, %357, %cst_112 [1] : vector<8x8xf32> to vector<8xf32>
    %359 = vector.shape_cast %358 : vector<8xf32> to vector<8x1xf32>
    %360 = vector.broadcast %359 : vector<8x1xf32> to vector<8x8xf32>
    %361 = arith.divf %357, %360 : vector<8x8xf32>
    %362 = arith.addf %345, %361 : vector<8x8xf32>
    %cst_113 = arith.constant dense<0.000000e+00> : vector<8x8xf32>
    %363 = tpu.matmul %361, %351, %cst_113 {dimension_numbers = #tpu.dot_dimension_numbers<[1], [0], [0], [1], [0, 0, 1, 1], [], []>} : vector<8x8xf32>, vector<8x8xf32>, vector<8x8xf32> -> vector<8x8xf32>
    %364 = vector.extract_strided_slice %256 {offsets = [8, 16], sizes = [8, 8], strides = [1, 1]} : vector<16x96xf32> to vector<8x8xf32>
    %cst_114 = arith.constant 0.353553385 : f32
    %365 = vector.broadcast %cst_114 : f32 to vector<8x8xf32>
    %366 = arith.mulf %364, %365 : vector<8x8xf32>
    %367 = vector.extract_strided_slice %260 {offsets = [8, 48], sizes = [8, 8], strides = [1, 1]} : vector<16x96xf32> to vector<8x8xf32>
    %368 = vector.extract_strided_slice %260 {offsets = [8, 80], sizes = [8, 8], strides = [1, 1]} : vector<16x96xf32> to vector<8x8xf32>
    %cst_115 = arith.constant dense<0.000000e+00> : vector<8x8xf32>
    %369 = tpu.matmul %366, %367, %cst_115 {dimension_numbers = #tpu.dot_dimension_numbers<[1], [1], [0], [0], [0, 0, 1, 0], [], []>} : vector<8x8xf32>, vector<8x8xf32>, vector<8x8xf32> -> vector<8x8xf32>
    %cst_116 = arith.constant dense<0xFF800000> : vector<8xf32>
    %370 = vector.multi_reduction <maximumf>, %369, %cst_116 [1] : vector<8x8xf32> to vector<8xf32>
    %371 = vector.shape_cast %370 : vector<8xf32> to vector<8x1xf32>
    %372 = vector.broadcast %371 : vector<8x1xf32> to vector<8x8xf32>
    %373 = arith.subf %369, %372 : vector<8x8xf32>
    %374 = math.exp %373 : vector<8x8xf32>
    %cst_117 = arith.constant dense<0.000000e+00> : vector<8xf32>
    %375 = vector.multi_reduction <add>, %374, %cst_117 [1] : vector<8x8xf32> to vector<8xf32>
    %376 = vector.shape_cast %375 : vector<8xf32> to vector<8x1xf32>
    %377 = vector.broadcast %376 : vector<8x1xf32> to vector<8x8xf32>
    %378 = arith.divf %374, %377 : vector<8x8xf32>
    %379 = arith.addf %362, %378 : vector<8x8xf32>
    %cst_118 = arith.constant dense<0.000000e+00> : vector<8x8xf32>
    %380 = tpu.matmul %378, %368, %cst_118 {dimension_numbers = #tpu.dot_dimension_numbers<[1], [0], [0], [1], [0, 0, 1, 1], [], []>} : vector<8x8xf32>, vector<8x8xf32>, vector<8x8xf32> -> vector<8x8xf32>
    %381 = vector.extract_strided_slice %256 {offsets = [8, 24], sizes = [8, 8], strides = [1, 1]} : vector<16x96xf32> to vector<8x8xf32>
    %cst_119 = arith.constant 0.353553385 : f32
    %382 = vector.broadcast %cst_119 : f32 to vector<8x8xf32>
    %383 = arith.mulf %381, %382 : vector<8x8xf32>
    %384 = vector.extract_strided_slice %260 {offsets = [8, 56], sizes = [8, 8], strides = [1, 1]} : vector<16x96xf32> to vector<8x8xf32>
    %385 = vector.extract_strided_slice %260 {offsets = [8, 88], sizes = [8, 8], strides = [1, 1]} : vector<16x96xf32> to vector<8x8xf32>
    %cst_120 = arith.constant dense<0.000000e+00> : vector<8x8xf32>
    %386 = tpu.matmul %383, %384, %cst_120 {dimension_numbers = #tpu.dot_dimension_numbers<[1], [1], [0], [0], [0, 0, 1, 0], [], []>} : vector<8x8xf32>, vector<8x8xf32>, vector<8x8xf32> -> vector<8x8xf32>
    %cst_121 = arith.constant dense<0xFF800000> : vector<8xf32>
    %387 = vector.multi_reduction <maximumf>, %386, %cst_121 [1] : vector<8x8xf32> to vector<8xf32>
    %388 = vector.shape_cast %387 : vector<8xf32> to vector<8x1xf32>
    %389 = vector.broadcast %388 : vector<8x1xf32> to vector<8x8xf32>
    %390 = arith.subf %386, %389 : vector<8x8xf32>
    %391 = math.exp %390 : vector<8x8xf32>
    %cst_122 = arith.constant dense<0.000000e+00> : vector<8xf32>
    %392 = vector.multi_reduction <add>, %391, %cst_122 [1] : vector<8x8xf32> to vector<8xf32>
    %393 = vector.shape_cast %392 : vector<8xf32> to vector<8x1xf32>
    %394 = vector.broadcast %393 : vector<8x1xf32> to vector<8x8xf32>
    %395 = arith.divf %391, %394 : vector<8x8xf32>
    %396 = arith.addf %379, %395 : vector<8x8xf32>
    %cst_123 = arith.constant dense<0.000000e+00> : vector<8x8xf32>
    %397 = tpu.matmul %395, %385, %cst_123 {dimension_numbers = #tpu.dot_dimension_numbers<[1], [0], [0], [1], [0, 0, 1, 1], [], []>} : vector<8x8xf32>, vector<8x8xf32>, vector<8x8xf32> -> vector<8x8xf32>
    %398 = tpu.concatenate %346, %363, %380, %397 in 1 : vector<8x8xf32>, vector<8x8xf32>, vector<8x8xf32>, vector<8x8xf32> -> vector<8x32xf32>
    %cst_124 = arith.constant 2.500000e-01 : f32
    %399 = vector.broadcast %cst_124 : f32 to vector<8x8xf32>
    %400 = arith.mulf %396, %399 : vector<8x8xf32>
    %401 = tpu.concatenate %328, %398 in 0 : vector<8x32xf32>, vector<8x32xf32> -> vector<16x32xf32>
    %cst_125 = arith.constant dense<0.000000e+00> : vector<16x32xf32>
    %402 = tpu.matmul %401, %248, %cst_125 {dimension_numbers = #tpu.dot_dimension_numbers<[1], [0], [0], [1], [0, 0, 1, 1], [], []>} : vector<16x32xf32>, vector<32x32xf32>, vector<16x32xf32> -> vector<16x32xf32>
    %403 = vector.shape_cast %252 : vector<32xf32> to vector<1x32xf32>
    %404 = vector.broadcast %403 : vector<1x32xf32> to vector<16x32xf32>
    %405 = arith.addf %402, %404 : vector<16x32xf32>
    %406 = arith.addf %218, %405 : vector<16x32xf32>
    %c5 = arith.constant 5 : index
    %c0_126 = arith.constant 0 : index
    %407 = vector.load %arg3[%c5, %c0_126] : memref<10x128xf32, #tpu.memory_space<vmem>>, vector<1x32xf32>
    %408 = vector.shape_cast %407 : vector<1x32xf32> to vector<32xf32>
    %c5_127 = arith.constant 5 : index
    %c32_128 = arith.constant 32 : index
    %409 = vector.load %arg3[%c5_127, %c32_128] : memref<10x128xf32, #tpu.memory_space<vmem>>, vector<1x32xf32>
    %410 = vector.shape_cast %409 : vector<1x32xf32> to vector<32xf32>
    %cst_129 = arith.constant dense<0.000000e+00> : vector<16xf32>
    %411 = vector.multi_reduction <add>, %406, %cst_129 [1] : vector<16x32xf32> to vector<16xf32>
    %412 = vector.shape_cast %411 : vector<16xf32> to vector<16x1xf32>
    %cst_130 = arith.constant 3.200000e+01 : f32
    %413 = vector.broadcast %cst_130 : f32 to vector<16x1xf32>
    %414 = arith.divf %412, %413 : vector<16x1xf32>
    %415 = vector.broadcast %414 : vector<16x1xf32> to vector<16x32xf32>
    %416 = arith.subf %406, %415 : vector<16x32xf32>
    %417 = arith.mulf %416, %416 : vector<16x32xf32>
    %cst_131 = arith.constant dense<0.000000e+00> : vector<16xf32>
    %418 = vector.multi_reduction <add>, %417, %cst_131 [1] : vector<16x32xf32> to vector<16xf32>
    %419 = vector.shape_cast %418 : vector<16xf32> to vector<16x1xf32>
    %cst_132 = arith.constant 3.200000e+01 : f32
    %420 = vector.broadcast %cst_132 : f32 to vector<16x1xf32>
    %421 = arith.divf %419, %420 : vector<16x1xf32>
    %cst_133 = arith.constant 9.99999974E-6 : f32
    %422 = vector.broadcast %cst_133 : f32 to vector<16x1xf32>
    %423 = arith.addf %421, %422 : vector<16x1xf32>
    %424 = math.rsqrt %423 : vector<16x1xf32>
    %425 = vector.broadcast %424 : vector<16x1xf32> to vector<16x32xf32>
    %426 = arith.mulf %416, %425 : vector<16x32xf32>
    %427 = vector.shape_cast %408 : vector<32xf32> to vector<1x32xf32>
    %428 = vector.broadcast %427 : vector<1x32xf32> to vector<16x32xf32>
    %429 = arith.mulf %426, %428 : vector<16x32xf32>
    %430 = vector.shape_cast %410 : vector<32xf32> to vector<1x32xf32>
    %431 = vector.broadcast %430 : vector<1x32xf32> to vector<16x32xf32>
    %432 = arith.addf %429, %431 : vector<16x32xf32>
    %c2_134 = arith.constant 2 : index
    %c0_135 = arith.constant 0 : index
    %c0_136 = arith.constant 0 : index
    %433 = vector.load %arg2[%c2_134, %c0_135, %c0_136] : memref<7x32x128xf32, #tpu.memory_space<vmem>>, vector<1x32x32xf32>
    %434 = vector.shape_cast %433 : vector<1x32x32xf32> to vector<32x32xf32>
    %c2_137 = arith.constant 2 : index
    %c0_138 = arith.constant 0 : index
    %c32_139 = arith.constant 32 : index
    %435 = vector.load %arg2[%c2_137, %c0_138, %c32_139] : memref<7x32x128xf32, #tpu.memory_space<vmem>>, vector<1x32x32xf32>
    %436 = vector.shape_cast %435 : vector<1x32x32xf32> to vector<32x32xf32>
    %c5_140 = arith.constant 5 : index
    %c64_141 = arith.constant 64 : index
    %437 = vector.load %arg3[%c5_140, %c64_141] : memref<10x128xf32, #tpu.memory_space<vmem>>, vector<1x32xf32>
    %438 = vector.shape_cast %437 : vector<1x32xf32> to vector<32xf32>
    %c5_142 = arith.constant 5 : index
    %c96_143 = arith.constant 96 : index
    %439 = vector.load %arg3[%c5_142, %c96_143] : memref<10x128xf32, #tpu.memory_space<vmem>>, vector<1x32xf32>
    %440 = vector.shape_cast %439 : vector<1x32xf32> to vector<32xf32>
    %cst_144 = arith.constant dense<0.000000e+00> : vector<16x32xf32>
    %441 = tpu.matmul %432, %434, %cst_144 {dimension_numbers = #tpu.dot_dimension_numbers<[1], [0], [0], [1], [0, 0, 1, 1], [], []>} : vector<16x32xf32>, vector<32x32xf32>, vector<16x32xf32> -> vector<16x32xf32>
    %442 = vector.shape_cast %438 : vector<32xf32> to vector<1x32xf32>
    %443 = vector.broadcast %442 : vector<1x32xf32> to vector<16x32xf32>
    %444 = arith.addf %441, %443 : vector<16x32xf32>
    %cst_145 = arith.constant 0.000000e+00 : f32
    %445 = vector.broadcast %cst_145 : f32 to vector<16x32xf32>
    %446 = arith.maximumf %444, %445 : vector<16x32xf32>
    %cst_146 = arith.constant dense<0.000000e+00> : vector<16x32xf32>
    %447 = tpu.matmul %446, %436, %cst_146 {dimension_numbers = #tpu.dot_dimension_numbers<[1], [0], [0], [1], [0, 0, 1, 1], [], []>} : vector<16x32xf32>, vector<32x32xf32>, vector<16x32xf32> -> vector<16x32xf32>
    %448 = arith.addf %406, %447 : vector<16x32xf32>
    %449 = vector.shape_cast %440 : vector<32xf32> to vector<1x32xf32>
    %450 = vector.broadcast %449 : vector<1x32xf32> to vector<16x32xf32>
    %451 = arith.addf %448, %450 : vector<16x32xf32>
    %c8 = arith.constant 8 : index
    %c0_147 = arith.constant 0 : index
    %452 = vector.load %arg3[%c8, %c0_147] : memref<10x128xf32, #tpu.memory_space<vmem>>, vector<1x32xf32>
    %453 = vector.shape_cast %452 : vector<1x32xf32> to vector<32xf32>
    %c8_148 = arith.constant 8 : index
    %c32_149 = arith.constant 32 : index
    %454 = vector.load %arg3[%c8_148, %c32_149] : memref<10x128xf32, #tpu.memory_space<vmem>>, vector<1x32xf32>
    %455 = vector.shape_cast %454 : vector<1x32xf32> to vector<32xf32>
    %cst_150 = arith.constant dense<0.000000e+00> : vector<16xf32>
    %456 = vector.multi_reduction <add>, %451, %cst_150 [1] : vector<16x32xf32> to vector<16xf32>
    %457 = vector.shape_cast %456 : vector<16xf32> to vector<16x1xf32>
    %cst_151 = arith.constant 3.200000e+01 : f32
    %458 = vector.broadcast %cst_151 : f32 to vector<16x1xf32>
    %459 = arith.divf %457, %458 : vector<16x1xf32>
    %460 = vector.broadcast %459 : vector<16x1xf32> to vector<16x32xf32>
    %461 = arith.subf %451, %460 : vector<16x32xf32>
    %462 = arith.mulf %461, %461 : vector<16x32xf32>
    %cst_152 = arith.constant dense<0.000000e+00> : vector<16xf32>
    %463 = vector.multi_reduction <add>, %462, %cst_152 [1] : vector<16x32xf32> to vector<16xf32>
    %464 = vector.shape_cast %463 : vector<16xf32> to vector<16x1xf32>
    %cst_153 = arith.constant 3.200000e+01 : f32
    %465 = vector.broadcast %cst_153 : f32 to vector<16x1xf32>
    %466 = arith.divf %464, %465 : vector<16x1xf32>
    %cst_154 = arith.constant 9.99999974E-6 : f32
    %467 = vector.broadcast %cst_154 : f32 to vector<16x1xf32>
    %468 = arith.addf %466, %467 : vector<16x1xf32>
    %469 = math.rsqrt %468 : vector<16x1xf32>
    %470 = vector.broadcast %469 : vector<16x1xf32> to vector<16x32xf32>
    %471 = arith.mulf %461, %470 : vector<16x32xf32>
    %472 = vector.shape_cast %453 : vector<32xf32> to vector<1x32xf32>
    %473 = vector.broadcast %472 : vector<1x32xf32> to vector<16x32xf32>
    %474 = arith.mulf %471, %473 : vector<16x32xf32>
    %475 = vector.shape_cast %455 : vector<32xf32> to vector<1x32xf32>
    %476 = vector.broadcast %475 : vector<1x32xf32> to vector<16x32xf32>
    %477 = arith.addf %474, %476 : vector<16x32xf32>
    %c3_155 = arith.constant 3 : index
    %c0_156 = arith.constant 0 : index
    %c0_157 = arith.constant 0 : index
    %478 = vector.load %arg2[%c3_155, %c0_156, %c0_157] : memref<7x32x128xf32, #tpu.memory_space<vmem>>, vector<1x32x96xf32>
    %479 = vector.shape_cast %478 : vector<1x32x96xf32> to vector<32x96xf32>
    %c3_158 = arith.constant 3 : index
    %c0_159 = arith.constant 0 : index
    %c96_160 = arith.constant 96 : index
    %480 = vector.load %arg2[%c3_158, %c0_159, %c96_160] : memref<7x32x128xf32, #tpu.memory_space<vmem>>, vector<1x32x32xf32>
    %481 = vector.shape_cast %480 : vector<1x32x32xf32> to vector<32x32xf32>
    %c6 = arith.constant 6 : index
    %c0_161 = arith.constant 0 : index
    %482 = vector.load %arg3[%c6, %c0_161] : memref<10x128xf32, #tpu.memory_space<vmem>>, vector<1x96xf32>
    %483 = vector.shape_cast %482 : vector<1x96xf32> to vector<96xf32>
    %c6_162 = arith.constant 6 : index
    %c96_163 = arith.constant 96 : index
    %484 = vector.load %arg3[%c6_162, %c96_163] : memref<10x128xf32, #tpu.memory_space<vmem>>, vector<1x32xf32>
    %485 = vector.shape_cast %484 : vector<1x32xf32> to vector<32xf32>
    %cst_164 = arith.constant dense<0.000000e+00> : vector<16x96xf32>
    %486 = tpu.matmul %477, %479, %cst_164 {dimension_numbers = #tpu.dot_dimension_numbers<[1], [0], [0], [1], [0, 0, 1, 1], [], []>} : vector<16x32xf32>, vector<32x96xf32>, vector<16x96xf32> -> vector<16x96xf32>
    %487 = vector.shape_cast %483 : vector<96xf32> to vector<1x96xf32>
    %488 = vector.broadcast %487 : vector<1x96xf32> to vector<16x96xf32>
    %489 = arith.addf %486, %488 : vector<16x96xf32>
    %490 = vector.extract_strided_slice %489 {offsets = [0, 0], sizes = [8, 8], strides = [1, 1]} : vector<16x96xf32> to vector<8x8xf32>
    %cst_165 = arith.constant 0.353553385 : f32
    %491 = vector.broadcast %cst_165 : f32 to vector<8x8xf32>
    %492 = arith.mulf %490, %491 : vector<8x8xf32>
    %493 = vector.extract_strided_slice %489 {offsets = [0, 32], sizes = [8, 8], strides = [1, 1]} : vector<16x96xf32> to vector<8x8xf32>
    %494 = vector.extract_strided_slice %489 {offsets = [0, 64], sizes = [8, 8], strides = [1, 1]} : vector<16x96xf32> to vector<8x8xf32>
    %cst_166 = arith.constant dense<0.000000e+00> : vector<8x8xf32>
    %495 = tpu.matmul %492, %493, %cst_166 {dimension_numbers = #tpu.dot_dimension_numbers<[1], [1], [0], [0], [0, 0, 1, 0], [], []>} : vector<8x8xf32>, vector<8x8xf32>, vector<8x8xf32> -> vector<8x8xf32>
    %cst_167 = arith.constant dense<0xFF800000> : vector<8xf32>
    %496 = vector.multi_reduction <maximumf>, %495, %cst_167 [1] : vector<8x8xf32> to vector<8xf32>
    %497 = vector.shape_cast %496 : vector<8xf32> to vector<8x1xf32>
    %498 = vector.broadcast %497 : vector<8x1xf32> to vector<8x8xf32>
    %499 = arith.subf %495, %498 : vector<8x8xf32>
    %500 = math.exp %499 : vector<8x8xf32>
    %cst_168 = arith.constant dense<0.000000e+00> : vector<8xf32>
    %501 = vector.multi_reduction <add>, %500, %cst_168 [1] : vector<8x8xf32> to vector<8xf32>
    %502 = vector.shape_cast %501 : vector<8xf32> to vector<8x1xf32>
    %503 = vector.broadcast %502 : vector<8x1xf32> to vector<8x8xf32>
    %504 = arith.divf %500, %503 : vector<8x8xf32>
    %cst_169 = arith.constant dense<0.000000e+00> : vector<8x8xf32>
    %505 = tpu.matmul %504, %494, %cst_169 {dimension_numbers = #tpu.dot_dimension_numbers<[1], [0], [0], [1], [0, 0, 1, 1], [], []>} : vector<8x8xf32>, vector<8x8xf32>, vector<8x8xf32> -> vector<8x8xf32>
    %506 = vector.extract_strided_slice %489 {offsets = [0, 8], sizes = [8, 8], strides = [1, 1]} : vector<16x96xf32> to vector<8x8xf32>
    %cst_170 = arith.constant 0.353553385 : f32
    %507 = vector.broadcast %cst_170 : f32 to vector<8x8xf32>
    %508 = arith.mulf %506, %507 : vector<8x8xf32>
    %509 = vector.extract_strided_slice %489 {offsets = [0, 40], sizes = [8, 8], strides = [1, 1]} : vector<16x96xf32> to vector<8x8xf32>
    %510 = vector.extract_strided_slice %489 {offsets = [0, 72], sizes = [8, 8], strides = [1, 1]} : vector<16x96xf32> to vector<8x8xf32>
    %cst_171 = arith.constant dense<0.000000e+00> : vector<8x8xf32>
    %511 = tpu.matmul %508, %509, %cst_171 {dimension_numbers = #tpu.dot_dimension_numbers<[1], [1], [0], [0], [0, 0, 1, 0], [], []>} : vector<8x8xf32>, vector<8x8xf32>, vector<8x8xf32> -> vector<8x8xf32>
    %cst_172 = arith.constant dense<0xFF800000> : vector<8xf32>
    %512 = vector.multi_reduction <maximumf>, %511, %cst_172 [1] : vector<8x8xf32> to vector<8xf32>
    %513 = vector.shape_cast %512 : vector<8xf32> to vector<8x1xf32>
    %514 = vector.broadcast %513 : vector<8x1xf32> to vector<8x8xf32>
    %515 = arith.subf %511, %514 : vector<8x8xf32>
    %516 = math.exp %515 : vector<8x8xf32>
    %cst_173 = arith.constant dense<0.000000e+00> : vector<8xf32>
    %517 = vector.multi_reduction <add>, %516, %cst_173 [1] : vector<8x8xf32> to vector<8xf32>
    %518 = vector.shape_cast %517 : vector<8xf32> to vector<8x1xf32>
    %519 = vector.broadcast %518 : vector<8x1xf32> to vector<8x8xf32>
    %520 = arith.divf %516, %519 : vector<8x8xf32>
    %521 = arith.addf %504, %520 : vector<8x8xf32>
    %cst_174 = arith.constant dense<0.000000e+00> : vector<8x8xf32>
    %522 = tpu.matmul %520, %510, %cst_174 {dimension_numbers = #tpu.dot_dimension_numbers<[1], [0], [0], [1], [0, 0, 1, 1], [], []>} : vector<8x8xf32>, vector<8x8xf32>, vector<8x8xf32> -> vector<8x8xf32>
    %523 = vector.extract_strided_slice %489 {offsets = [0, 16], sizes = [8, 8], strides = [1, 1]} : vector<16x96xf32> to vector<8x8xf32>
    %cst_175 = arith.constant 0.353553385 : f32
    %524 = vector.broadcast %cst_175 : f32 to vector<8x8xf32>
    %525 = arith.mulf %523, %524 : vector<8x8xf32>
    %526 = vector.extract_strided_slice %489 {offsets = [0, 48], sizes = [8, 8], strides = [1, 1]} : vector<16x96xf32> to vector<8x8xf32>
    %527 = vector.extract_strided_slice %489 {offsets = [0, 80], sizes = [8, 8], strides = [1, 1]} : vector<16x96xf32> to vector<8x8xf32>
    %cst_176 = arith.constant dense<0.000000e+00> : vector<8x8xf32>
    %528 = tpu.matmul %525, %526, %cst_176 {dimension_numbers = #tpu.dot_dimension_numbers<[1], [1], [0], [0], [0, 0, 1, 0], [], []>} : vector<8x8xf32>, vector<8x8xf32>, vector<8x8xf32> -> vector<8x8xf32>
    %cst_177 = arith.constant dense<0xFF800000> : vector<8xf32>
    %529 = vector.multi_reduction <maximumf>, %528, %cst_177 [1] : vector<8x8xf32> to vector<8xf32>
    %530 = vector.shape_cast %529 : vector<8xf32> to vector<8x1xf32>
    %531 = vector.broadcast %530 : vector<8x1xf32> to vector<8x8xf32>
    %532 = arith.subf %528, %531 : vector<8x8xf32>
    %533 = math.exp %532 : vector<8x8xf32>
    %cst_178 = arith.constant dense<0.000000e+00> : vector<8xf32>
    %534 = vector.multi_reduction <add>, %533, %cst_178 [1] : vector<8x8xf32> to vector<8xf32>
    %535 = vector.shape_cast %534 : vector<8xf32> to vector<8x1xf32>
    %536 = vector.broadcast %535 : vector<8x1xf32> to vector<8x8xf32>
    %537 = arith.divf %533, %536 : vector<8x8xf32>
    %538 = arith.addf %521, %537 : vector<8x8xf32>
    %cst_179 = arith.constant dense<0.000000e+00> : vector<8x8xf32>
    %539 = tpu.matmul %537, %527, %cst_179 {dimension_numbers = #tpu.dot_dimension_numbers<[1], [0], [0], [1], [0, 0, 1, 1], [], []>} : vector<8x8xf32>, vector<8x8xf32>, vector<8x8xf32> -> vector<8x8xf32>
    %540 = vector.extract_strided_slice %489 {offsets = [0, 24], sizes = [8, 8], strides = [1, 1]} : vector<16x96xf32> to vector<8x8xf32>
    %cst_180 = arith.constant 0.353553385 : f32
    %541 = vector.broadcast %cst_180 : f32 to vector<8x8xf32>
    %542 = arith.mulf %540, %541 : vector<8x8xf32>
    %543 = vector.extract_strided_slice %489 {offsets = [0, 56], sizes = [8, 8], strides = [1, 1]} : vector<16x96xf32> to vector<8x8xf32>
    %544 = vector.extract_strided_slice %489 {offsets = [0, 88], sizes = [8, 8], strides = [1, 1]} : vector<16x96xf32> to vector<8x8xf32>
    %cst_181 = arith.constant dense<0.000000e+00> : vector<8x8xf32>
    %545 = tpu.matmul %542, %543, %cst_181 {dimension_numbers = #tpu.dot_dimension_numbers<[1], [1], [0], [0], [0, 0, 1, 0], [], []>} : vector<8x8xf32>, vector<8x8xf32>, vector<8x8xf32> -> vector<8x8xf32>
    %cst_182 = arith.constant dense<0xFF800000> : vector<8xf32>
    %546 = vector.multi_reduction <maximumf>, %545, %cst_182 [1] : vector<8x8xf32> to vector<8xf32>
    %547 = vector.shape_cast %546 : vector<8xf32> to vector<8x1xf32>
    %548 = vector.broadcast %547 : vector<8x1xf32> to vector<8x8xf32>
    %549 = arith.subf %545, %548 : vector<8x8xf32>
    %550 = math.exp %549 : vector<8x8xf32>
    %cst_183 = arith.constant dense<0.000000e+00> : vector<8xf32>
    %551 = vector.multi_reduction <add>, %550, %cst_183 [1] : vector<8x8xf32> to vector<8xf32>
    %552 = vector.shape_cast %551 : vector<8xf32> to vector<8x1xf32>
    %553 = vector.broadcast %552 : vector<8x1xf32> to vector<8x8xf32>
    %554 = arith.divf %550, %553 : vector<8x8xf32>
    %555 = arith.addf %538, %554 : vector<8x8xf32>
    %cst_184 = arith.constant dense<0.000000e+00> : vector<8x8xf32>
    %556 = tpu.matmul %554, %544, %cst_184 {dimension_numbers = #tpu.dot_dimension_numbers<[1], [0], [0], [1], [0, 0, 1, 1], [], []>} : vector<8x8xf32>, vector<8x8xf32>, vector<8x8xf32> -> vector<8x8xf32>
    %557 = tpu.concatenate %505, %522, %539, %556 in 1 : vector<8x8xf32>, vector<8x8xf32>, vector<8x8xf32>, vector<8x8xf32> -> vector<8x32xf32>
    %cst_185 = arith.constant 2.500000e-01 : f32
    %558 = vector.broadcast %cst_185 : f32 to vector<8x8xf32>
    %559 = arith.mulf %555, %558 : vector<8x8xf32>
    %560 = vector.extract_strided_slice %489 {offsets = [8, 0], sizes = [8, 8], strides = [1, 1]} : vector<16x96xf32> to vector<8x8xf32>
    %cst_186 = arith.constant 0.353553385 : f32
    %561 = vector.broadcast %cst_186 : f32 to vector<8x8xf32>
    %562 = arith.mulf %560, %561 : vector<8x8xf32>
    %563 = vector.extract_strided_slice %489 {offsets = [8, 32], sizes = [8, 8], strides = [1, 1]} : vector<16x96xf32> to vector<8x8xf32>
    %564 = vector.extract_strided_slice %489 {offsets = [8, 64], sizes = [8, 8], strides = [1, 1]} : vector<16x96xf32> to vector<8x8xf32>
    %cst_187 = arith.constant dense<0.000000e+00> : vector<8x8xf32>
    %565 = tpu.matmul %562, %563, %cst_187 {dimension_numbers = #tpu.dot_dimension_numbers<[1], [1], [0], [0], [0, 0, 1, 0], [], []>} : vector<8x8xf32>, vector<8x8xf32>, vector<8x8xf32> -> vector<8x8xf32>
    %cst_188 = arith.constant dense<0xFF800000> : vector<8xf32>
    %566 = vector.multi_reduction <maximumf>, %565, %cst_188 [1] : vector<8x8xf32> to vector<8xf32>
    %567 = vector.shape_cast %566 : vector<8xf32> to vector<8x1xf32>
    %568 = vector.broadcast %567 : vector<8x1xf32> to vector<8x8xf32>
    %569 = arith.subf %565, %568 : vector<8x8xf32>
    %570 = math.exp %569 : vector<8x8xf32>
    %cst_189 = arith.constant dense<0.000000e+00> : vector<8xf32>
    %571 = vector.multi_reduction <add>, %570, %cst_189 [1] : vector<8x8xf32> to vector<8xf32>
    %572 = vector.shape_cast %571 : vector<8xf32> to vector<8x1xf32>
    %573 = vector.broadcast %572 : vector<8x1xf32> to vector<8x8xf32>
    %574 = arith.divf %570, %573 : vector<8x8xf32>
    %cst_190 = arith.constant dense<0.000000e+00> : vector<8x8xf32>
    %575 = tpu.matmul %574, %564, %cst_190 {dimension_numbers = #tpu.dot_dimension_numbers<[1], [0], [0], [1], [0, 0, 1, 1], [], []>} : vector<8x8xf32>, vector<8x8xf32>, vector<8x8xf32> -> vector<8x8xf32>
    %576 = vector.extract_strided_slice %489 {offsets = [8, 8], sizes = [8, 8], strides = [1, 1]} : vector<16x96xf32> to vector<8x8xf32>
    %cst_191 = arith.constant 0.353553385 : f32
    %577 = vector.broadcast %cst_191 : f32 to vector<8x8xf32>
    %578 = arith.mulf %576, %577 : vector<8x8xf32>
    %579 = vector.extract_strided_slice %489 {offsets = [8, 40], sizes = [8, 8], strides = [1, 1]} : vector<16x96xf32> to vector<8x8xf32>
    %580 = vector.extract_strided_slice %489 {offsets = [8, 72], sizes = [8, 8], strides = [1, 1]} : vector<16x96xf32> to vector<8x8xf32>
    %cst_192 = arith.constant dense<0.000000e+00> : vector<8x8xf32>
    %581 = tpu.matmul %578, %579, %cst_192 {dimension_numbers = #tpu.dot_dimension_numbers<[1], [1], [0], [0], [0, 0, 1, 0], [], []>} : vector<8x8xf32>, vector<8x8xf32>, vector<8x8xf32> -> vector<8x8xf32>
    %cst_193 = arith.constant dense<0xFF800000> : vector<8xf32>
    %582 = vector.multi_reduction <maximumf>, %581, %cst_193 [1] : vector<8x8xf32> to vector<8xf32>
    %583 = vector.shape_cast %582 : vector<8xf32> to vector<8x1xf32>
    %584 = vector.broadcast %583 : vector<8x1xf32> to vector<8x8xf32>
    %585 = arith.subf %581, %584 : vector<8x8xf32>
    %586 = math.exp %585 : vector<8x8xf32>
    %cst_194 = arith.constant dense<0.000000e+00> : vector<8xf32>
    %587 = vector.multi_reduction <add>, %586, %cst_194 [1] : vector<8x8xf32> to vector<8xf32>
    %588 = vector.shape_cast %587 : vector<8xf32> to vector<8x1xf32>
    %589 = vector.broadcast %588 : vector<8x1xf32> to vector<8x8xf32>
    %590 = arith.divf %586, %589 : vector<8x8xf32>
    %591 = arith.addf %574, %590 : vector<8x8xf32>
    %cst_195 = arith.constant dense<0.000000e+00> : vector<8x8xf32>
    %592 = tpu.matmul %590, %580, %cst_195 {dimension_numbers = #tpu.dot_dimension_numbers<[1], [0], [0], [1], [0, 0, 1, 1], [], []>} : vector<8x8xf32>, vector<8x8xf32>, vector<8x8xf32> -> vector<8x8xf32>
    %593 = vector.extract_strided_slice %489 {offsets = [8, 16], sizes = [8, 8], strides = [1, 1]} : vector<16x96xf32> to vector<8x8xf32>
    %cst_196 = arith.constant 0.353553385 : f32
    %594 = vector.broadcast %cst_196 : f32 to vector<8x8xf32>
    %595 = arith.mulf %593, %594 : vector<8x8xf32>
    %596 = vector.extract_strided_slice %489 {offsets = [8, 48], sizes = [8, 8], strides = [1, 1]} : vector<16x96xf32> to vector<8x8xf32>
    %597 = vector.extract_strided_slice %489 {offsets = [8, 80], sizes = [8, 8], strides = [1, 1]} : vector<16x96xf32> to vector<8x8xf32>
    %cst_197 = arith.constant dense<0.000000e+00> : vector<8x8xf32>
    %598 = tpu.matmul %595, %596, %cst_197 {dimension_numbers = #tpu.dot_dimension_numbers<[1], [1], [0], [0], [0, 0, 1, 0], [], []>} : vector<8x8xf32>, vector<8x8xf32>, vector<8x8xf32> -> vector<8x8xf32>
    %cst_198 = arith.constant dense<0xFF800000> : vector<8xf32>
    %599 = vector.multi_reduction <maximumf>, %598, %cst_198 [1] : vector<8x8xf32> to vector<8xf32>
    %600 = vector.shape_cast %599 : vector<8xf32> to vector<8x1xf32>
    %601 = vector.broadcast %600 : vector<8x1xf32> to vector<8x8xf32>
    %602 = arith.subf %598, %601 : vector<8x8xf32>
    %603 = math.exp %602 : vector<8x8xf32>
    %cst_199 = arith.constant dense<0.000000e+00> : vector<8xf32>
    %604 = vector.multi_reduction <add>, %603, %cst_199 [1] : vector<8x8xf32> to vector<8xf32>
    %605 = vector.shape_cast %604 : vector<8xf32> to vector<8x1xf32>
    %606 = vector.broadcast %605 : vector<8x1xf32> to vector<8x8xf32>
    %607 = arith.divf %603, %606 : vector<8x8xf32>
    %608 = arith.addf %591, %607 : vector<8x8xf32>
    %cst_200 = arith.constant dense<0.000000e+00> : vector<8x8xf32>
    %609 = tpu.matmul %607, %597, %cst_200 {dimension_numbers = #tpu.dot_dimension_numbers<[1], [0], [0], [1], [0, 0, 1, 1], [], []>} : vector<8x8xf32>, vector<8x8xf32>, vector<8x8xf32> -> vector<8x8xf32>
    %610 = vector.extract_strided_slice %489 {offsets = [8, 24], sizes = [8, 8], strides = [1, 1]} : vector<16x96xf32> to vector<8x8xf32>
    %cst_201 = arith.constant 0.353553385 : f32
    %611 = vector.broadcast %cst_201 : f32 to vector<8x8xf32>
    %612 = arith.mulf %610, %611 : vector<8x8xf32>
    %613 = vector.extract_strided_slice %489 {offsets = [8, 56], sizes = [8, 8], strides = [1, 1]} : vector<16x96xf32> to vector<8x8xf32>
    %614 = vector.extract_strided_slice %489 {offsets = [8, 88], sizes = [8, 8], strides = [1, 1]} : vector<16x96xf32> to vector<8x8xf32>
    %cst_202 = arith.constant dense<0.000000e+00> : vector<8x8xf32>
    %615 = tpu.matmul %612, %613, %cst_202 {dimension_numbers = #tpu.dot_dimension_numbers<[1], [1], [0], [0], [0, 0, 1, 0], [], []>} : vector<8x8xf32>, vector<8x8xf32>, vector<8x8xf32> -> vector<8x8xf32>
    %cst_203 = arith.constant dense<0xFF800000> : vector<8xf32>
    %616 = vector.multi_reduction <maximumf>, %615, %cst_203 [1] : vector<8x8xf32> to vector<8xf32>
    %617 = vector.shape_cast %616 : vector<8xf32> to vector<8x1xf32>
    %618 = vector.broadcast %617 : vector<8x1xf32> to vector<8x8xf32>
    %619 = arith.subf %615, %618 : vector<8x8xf32>
    %620 = math.exp %619 : vector<8x8xf32>
    %cst_204 = arith.constant dense<0.000000e+00> : vector<8xf32>
    %621 = vector.multi_reduction <add>, %620, %cst_204 [1] : vector<8x8xf32> to vector<8xf32>
    %622 = vector.shape_cast %621 : vector<8xf32> to vector<8x1xf32>
    %623 = vector.broadcast %622 : vector<8x1xf32> to vector<8x8xf32>
    %624 = arith.divf %620, %623 : vector<8x8xf32>
    %625 = arith.addf %608, %624 : vector<8x8xf32>
    %cst_205 = arith.constant dense<0.000000e+00> : vector<8x8xf32>
    %626 = tpu.matmul %624, %614, %cst_205 {dimension_numbers = #tpu.dot_dimension_numbers<[1], [0], [0], [1], [0, 0, 1, 1], [], []>} : vector<8x8xf32>, vector<8x8xf32>, vector<8x8xf32> -> vector<8x8xf32>
    %627 = tpu.concatenate %575, %592, %609, %626 in 1 : vector<8x8xf32>, vector<8x8xf32>, vector<8x8xf32>, vector<8x8xf32> -> vector<8x32xf32>
    %cst_206 = arith.constant 2.500000e-01 : f32
    %628 = vector.broadcast %cst_206 : f32 to vector<8x8xf32>
    %629 = arith.mulf %625, %628 : vector<8x8xf32>
    %630 = tpu.concatenate %557, %627 in 0 : vector<8x32xf32>, vector<8x32xf32> -> vector<16x32xf32>
    %cst_207 = arith.constant dense<0.000000e+00> : vector<16x32xf32>
    %631 = tpu.matmul %630, %481, %cst_207 {dimension_numbers = #tpu.dot_dimension_numbers<[1], [0], [0], [1], [0, 0, 1, 1], [], []>} : vector<16x32xf32>, vector<32x32xf32>, vector<16x32xf32> -> vector<16x32xf32>
    %632 = vector.shape_cast %485 : vector<32xf32> to vector<1x32xf32>
    %633 = vector.broadcast %632 : vector<1x32xf32> to vector<16x32xf32>
    %634 = arith.addf %631, %633 : vector<16x32xf32>
    %635 = arith.addf %451, %634 : vector<16x32xf32>
    %c8_208 = arith.constant 8 : index
    %c64_209 = arith.constant 64 : index
    %636 = vector.load %arg3[%c8_208, %c64_209] : memref<10x128xf32, #tpu.memory_space<vmem>>, vector<1x32xf32>
    %637 = vector.shape_cast %636 : vector<1x32xf32> to vector<32xf32>
    %c8_210 = arith.constant 8 : index
    %c96_211 = arith.constant 96 : index
    %638 = vector.load %arg3[%c8_210, %c96_211] : memref<10x128xf32, #tpu.memory_space<vmem>>, vector<1x32xf32>
    %639 = vector.shape_cast %638 : vector<1x32xf32> to vector<32xf32>
    %cst_212 = arith.constant dense<0.000000e+00> : vector<16xf32>
    %640 = vector.multi_reduction <add>, %635, %cst_212 [1] : vector<16x32xf32> to vector<16xf32>
    %641 = vector.shape_cast %640 : vector<16xf32> to vector<16x1xf32>
    %cst_213 = arith.constant 3.200000e+01 : f32
    %642 = vector.broadcast %cst_213 : f32 to vector<16x1xf32>
    %643 = arith.divf %641, %642 : vector<16x1xf32>
    %644 = vector.broadcast %643 : vector<16x1xf32> to vector<16x32xf32>
    %645 = arith.subf %635, %644 : vector<16x32xf32>
    %646 = arith.mulf %645, %645 : vector<16x32xf32>
    %cst_214 = arith.constant dense<0.000000e+00> : vector<16xf32>
    %647 = vector.multi_reduction <add>, %646, %cst_214 [1] : vector<16x32xf32> to vector<16xf32>
    %648 = vector.shape_cast %647 : vector<16xf32> to vector<16x1xf32>
    %cst_215 = arith.constant 3.200000e+01 : f32
    %649 = vector.broadcast %cst_215 : f32 to vector<16x1xf32>
    %650 = arith.divf %648, %649 : vector<16x1xf32>
    %cst_216 = arith.constant 9.99999974E-6 : f32
    %651 = vector.broadcast %cst_216 : f32 to vector<16x1xf32>
    %652 = arith.addf %650, %651 : vector<16x1xf32>
    %653 = math.rsqrt %652 : vector<16x1xf32>
    %654 = vector.broadcast %653 : vector<16x1xf32> to vector<16x32xf32>
    %655 = arith.mulf %645, %654 : vector<16x32xf32>
    %656 = vector.shape_cast %637 : vector<32xf32> to vector<1x32xf32>
    %657 = vector.broadcast %656 : vector<1x32xf32> to vector<16x32xf32>
    %658 = arith.mulf %655, %657 : vector<16x32xf32>
    %659 = vector.shape_cast %639 : vector<32xf32> to vector<1x32xf32>
    %660 = vector.broadcast %659 : vector<1x32xf32> to vector<16x32xf32>
    %661 = arith.addf %658, %660 : vector<16x32xf32>
    %c4_217 = arith.constant 4 : index
    %c0_218 = arith.constant 0 : index
    %c0_219 = arith.constant 0 : index
    %662 = vector.load %arg2[%c4_217, %c0_218, %c0_219] : memref<7x32x128xf32, #tpu.memory_space<vmem>>, vector<1x32x96xf32>
    %663 = vector.shape_cast %662 : vector<1x32x96xf32> to vector<32x96xf32>
    %c4_220 = arith.constant 4 : index
    %c0_221 = arith.constant 0 : index
    %c96_222 = arith.constant 96 : index
    %664 = vector.load %arg2[%c4_220, %c0_221, %c96_222] : memref<7x32x128xf32, #tpu.memory_space<vmem>>, vector<1x32x32xf32>
    %665 = vector.shape_cast %664 : vector<1x32x32xf32> to vector<32x32xf32>
    %c7 = arith.constant 7 : index
    %c0_223 = arith.constant 0 : index
    %666 = vector.load %arg3[%c7, %c0_223] : memref<10x128xf32, #tpu.memory_space<vmem>>, vector<1x96xf32>
    %667 = vector.shape_cast %666 : vector<1x96xf32> to vector<96xf32>
    %c7_224 = arith.constant 7 : index
    %c96_225 = arith.constant 96 : index
    %668 = vector.load %arg3[%c7_224, %c96_225] : memref<10x128xf32, #tpu.memory_space<vmem>>, vector<1x32xf32>
    %669 = vector.shape_cast %668 : vector<1x32xf32> to vector<32xf32>
    %cst_226 = arith.constant dense<0.000000e+00> : vector<16x96xf32>
    %670 = tpu.matmul %661, %663, %cst_226 {dimension_numbers = #tpu.dot_dimension_numbers<[1], [0], [0], [1], [0, 0, 1, 1], [], []>} : vector<16x32xf32>, vector<32x96xf32>, vector<16x96xf32> -> vector<16x96xf32>
    %671 = vector.shape_cast %667 : vector<96xf32> to vector<1x96xf32>
    %672 = vector.broadcast %671 : vector<1x96xf32> to vector<16x96xf32>
    %673 = arith.addf %670, %672 : vector<16x96xf32>
    %cst_227 = arith.constant dense<0.000000e+00> : vector<16x96xf32>
    %674 = tpu.matmul %34, %663, %cst_227 {dimension_numbers = #tpu.dot_dimension_numbers<[1], [0], [0], [1], [0, 0, 1, 1], [], []>} : vector<16x32xf32>, vector<32x96xf32>, vector<16x96xf32> -> vector<16x96xf32>
    %675 = vector.shape_cast %667 : vector<96xf32> to vector<1x96xf32>
    %676 = vector.broadcast %675 : vector<1x96xf32> to vector<16x96xf32>
    %677 = arith.addf %674, %676 : vector<16x96xf32>
    %678 = vector.extract_strided_slice %673 {offsets = [0, 0], sizes = [8, 8], strides = [1, 1]} : vector<16x96xf32> to vector<8x8xf32>
    %cst_228 = arith.constant 0.353553385 : f32
    %679 = vector.broadcast %cst_228 : f32 to vector<8x8xf32>
    %680 = arith.mulf %678, %679 : vector<8x8xf32>
    %681 = vector.extract_strided_slice %677 {offsets = [0, 32], sizes = [8, 8], strides = [1, 1]} : vector<16x96xf32> to vector<8x8xf32>
    %682 = vector.extract_strided_slice %677 {offsets = [0, 64], sizes = [8, 8], strides = [1, 1]} : vector<16x96xf32> to vector<8x8xf32>
    %cst_229 = arith.constant dense<0.000000e+00> : vector<8x8xf32>
    %683 = tpu.matmul %680, %681, %cst_229 {dimension_numbers = #tpu.dot_dimension_numbers<[1], [1], [0], [0], [0, 0, 1, 0], [], []>} : vector<8x8xf32>, vector<8x8xf32>, vector<8x8xf32> -> vector<8x8xf32>
    %cst_230 = arith.constant dense<0xFF800000> : vector<8xf32>
    %684 = vector.multi_reduction <maximumf>, %683, %cst_230 [1] : vector<8x8xf32> to vector<8xf32>
    %685 = vector.shape_cast %684 : vector<8xf32> to vector<8x1xf32>
    %686 = vector.broadcast %685 : vector<8x1xf32> to vector<8x8xf32>
    %687 = arith.subf %683, %686 : vector<8x8xf32>
    %688 = math.exp %687 : vector<8x8xf32>
    %cst_231 = arith.constant dense<0.000000e+00> : vector<8xf32>
    %689 = vector.multi_reduction <add>, %688, %cst_231 [1] : vector<8x8xf32> to vector<8xf32>
    %690 = vector.shape_cast %689 : vector<8xf32> to vector<8x1xf32>
    %691 = vector.broadcast %690 : vector<8x1xf32> to vector<8x8xf32>
    %692 = arith.divf %688, %691 : vector<8x8xf32>
    %cst_232 = arith.constant dense<0.000000e+00> : vector<8x8xf32>
    %693 = tpu.matmul %692, %682, %cst_232 {dimension_numbers = #tpu.dot_dimension_numbers<[1], [0], [0], [1], [0, 0, 1, 1], [], []>} : vector<8x8xf32>, vector<8x8xf32>, vector<8x8xf32> -> vector<8x8xf32>
    %694 = vector.extract_strided_slice %673 {offsets = [0, 8], sizes = [8, 8], strides = [1, 1]} : vector<16x96xf32> to vector<8x8xf32>
    %cst_233 = arith.constant 0.353553385 : f32
    %695 = vector.broadcast %cst_233 : f32 to vector<8x8xf32>
    %696 = arith.mulf %694, %695 : vector<8x8xf32>
    %697 = vector.extract_strided_slice %677 {offsets = [0, 40], sizes = [8, 8], strides = [1, 1]} : vector<16x96xf32> to vector<8x8xf32>
    %698 = vector.extract_strided_slice %677 {offsets = [0, 72], sizes = [8, 8], strides = [1, 1]} : vector<16x96xf32> to vector<8x8xf32>
    %cst_234 = arith.constant dense<0.000000e+00> : vector<8x8xf32>
    %699 = tpu.matmul %696, %697, %cst_234 {dimension_numbers = #tpu.dot_dimension_numbers<[1], [1], [0], [0], [0, 0, 1, 0], [], []>} : vector<8x8xf32>, vector<8x8xf32>, vector<8x8xf32> -> vector<8x8xf32>
    %cst_235 = arith.constant dense<0xFF800000> : vector<8xf32>
    %700 = vector.multi_reduction <maximumf>, %699, %cst_235 [1] : vector<8x8xf32> to vector<8xf32>
    %701 = vector.shape_cast %700 : vector<8xf32> to vector<8x1xf32>
    %702 = vector.broadcast %701 : vector<8x1xf32> to vector<8x8xf32>
    %703 = arith.subf %699, %702 : vector<8x8xf32>
    %704 = math.exp %703 : vector<8x8xf32>
    %cst_236 = arith.constant dense<0.000000e+00> : vector<8xf32>
    %705 = vector.multi_reduction <add>, %704, %cst_236 [1] : vector<8x8xf32> to vector<8xf32>
    %706 = vector.shape_cast %705 : vector<8xf32> to vector<8x1xf32>
    %707 = vector.broadcast %706 : vector<8x1xf32> to vector<8x8xf32>
    %708 = arith.divf %704, %707 : vector<8x8xf32>
    %709 = arith.addf %692, %708 : vector<8x8xf32>
    %cst_237 = arith.constant dense<0.000000e+00> : vector<8x8xf32>
    %710 = tpu.matmul %708, %698, %cst_237 {dimension_numbers = #tpu.dot_dimension_numbers<[1], [0], [0], [1], [0, 0, 1, 1], [], []>} : vector<8x8xf32>, vector<8x8xf32>, vector<8x8xf32> -> vector<8x8xf32>
    %711 = vector.extract_strided_slice %673 {offsets = [0, 16], sizes = [8, 8], strides = [1, 1]} : vector<16x96xf32> to vector<8x8xf32>
    %cst_238 = arith.constant 0.353553385 : f32
    %712 = vector.broadcast %cst_238 : f32 to vector<8x8xf32>
    %713 = arith.mulf %711, %712 : vector<8x8xf32>
    %714 = vector.extract_strided_slice %677 {offsets = [0, 48], sizes = [8, 8], strides = [1, 1]} : vector<16x96xf32> to vector<8x8xf32>
    %715 = vector.extract_strided_slice %677 {offsets = [0, 80], sizes = [8, 8], strides = [1, 1]} : vector<16x96xf32> to vector<8x8xf32>
    %cst_239 = arith.constant dense<0.000000e+00> : vector<8x8xf32>
    %716 = tpu.matmul %713, %714, %cst_239 {dimension_numbers = #tpu.dot_dimension_numbers<[1], [1], [0], [0], [0, 0, 1, 0], [], []>} : vector<8x8xf32>, vector<8x8xf32>, vector<8x8xf32> -> vector<8x8xf32>
    %cst_240 = arith.constant dense<0xFF800000> : vector<8xf32>
    %717 = vector.multi_reduction <maximumf>, %716, %cst_240 [1] : vector<8x8xf32> to vector<8xf32>
    %718 = vector.shape_cast %717 : vector<8xf32> to vector<8x1xf32>
    %719 = vector.broadcast %718 : vector<8x1xf32> to vector<8x8xf32>
    %720 = arith.subf %716, %719 : vector<8x8xf32>
    %721 = math.exp %720 : vector<8x8xf32>
    %cst_241 = arith.constant dense<0.000000e+00> : vector<8xf32>
    %722 = vector.multi_reduction <add>, %721, %cst_241 [1] : vector<8x8xf32> to vector<8xf32>
    %723 = vector.shape_cast %722 : vector<8xf32> to vector<8x1xf32>
    %724 = vector.broadcast %723 : vector<8x1xf32> to vector<8x8xf32>
    %725 = arith.divf %721, %724 : vector<8x8xf32>
    %726 = arith.addf %709, %725 : vector<8x8xf32>
    %cst_242 = arith.constant dense<0.000000e+00> : vector<8x8xf32>
    %727 = tpu.matmul %725, %715, %cst_242 {dimension_numbers = #tpu.dot_dimension_numbers<[1], [0], [0], [1], [0, 0, 1, 1], [], []>} : vector<8x8xf32>, vector<8x8xf32>, vector<8x8xf32> -> vector<8x8xf32>
    %728 = vector.extract_strided_slice %673 {offsets = [0, 24], sizes = [8, 8], strides = [1, 1]} : vector<16x96xf32> to vector<8x8xf32>
    %cst_243 = arith.constant 0.353553385 : f32
    %729 = vector.broadcast %cst_243 : f32 to vector<8x8xf32>
    %730 = arith.mulf %728, %729 : vector<8x8xf32>
    %731 = vector.extract_strided_slice %677 {offsets = [0, 56], sizes = [8, 8], strides = [1, 1]} : vector<16x96xf32> to vector<8x8xf32>
    %732 = vector.extract_strided_slice %677 {offsets = [0, 88], sizes = [8, 8], strides = [1, 1]} : vector<16x96xf32> to vector<8x8xf32>
    %cst_244 = arith.constant dense<0.000000e+00> : vector<8x8xf32>
    %733 = tpu.matmul %730, %731, %cst_244 {dimension_numbers = #tpu.dot_dimension_numbers<[1], [1], [0], [0], [0, 0, 1, 0], [], []>} : vector<8x8xf32>, vector<8x8xf32>, vector<8x8xf32> -> vector<8x8xf32>
    %cst_245 = arith.constant dense<0xFF800000> : vector<8xf32>
    %734 = vector.multi_reduction <maximumf>, %733, %cst_245 [1] : vector<8x8xf32> to vector<8xf32>
    %735 = vector.shape_cast %734 : vector<8xf32> to vector<8x1xf32>
    %736 = vector.broadcast %735 : vector<8x1xf32> to vector<8x8xf32>
    %737 = arith.subf %733, %736 : vector<8x8xf32>
    %738 = math.exp %737 : vector<8x8xf32>
    %cst_246 = arith.constant dense<0.000000e+00> : vector<8xf32>
    %739 = vector.multi_reduction <add>, %738, %cst_246 [1] : vector<8x8xf32> to vector<8xf32>
    %740 = vector.shape_cast %739 : vector<8xf32> to vector<8x1xf32>
    %741 = vector.broadcast %740 : vector<8x1xf32> to vector<8x8xf32>
    %742 = arith.divf %738, %741 : vector<8x8xf32>
    %743 = arith.addf %726, %742 : vector<8x8xf32>
    %cst_247 = arith.constant dense<0.000000e+00> : vector<8x8xf32>
    %744 = tpu.matmul %742, %732, %cst_247 {dimension_numbers = #tpu.dot_dimension_numbers<[1], [0], [0], [1], [0, 0, 1, 1], [], []>} : vector<8x8xf32>, vector<8x8xf32>, vector<8x8xf32> -> vector<8x8xf32>
    %745 = tpu.concatenate %693, %710, %727, %744 in 1 : vector<8x8xf32>, vector<8x8xf32>, vector<8x8xf32>, vector<8x8xf32> -> vector<8x32xf32>
    %cst_248 = arith.constant 2.500000e-01 : f32
    %746 = vector.broadcast %cst_248 : f32 to vector<8x8xf32>
    %747 = arith.mulf %743, %746 : vector<8x8xf32>
    %748 = vector.extract_strided_slice %673 {offsets = [8, 0], sizes = [8, 8], strides = [1, 1]} : vector<16x96xf32> to vector<8x8xf32>
    %cst_249 = arith.constant 0.353553385 : f32
    %749 = vector.broadcast %cst_249 : f32 to vector<8x8xf32>
    %750 = arith.mulf %748, %749 : vector<8x8xf32>
    %751 = vector.extract_strided_slice %677 {offsets = [8, 32], sizes = [8, 8], strides = [1, 1]} : vector<16x96xf32> to vector<8x8xf32>
    %752 = vector.extract_strided_slice %677 {offsets = [8, 64], sizes = [8, 8], strides = [1, 1]} : vector<16x96xf32> to vector<8x8xf32>
    %cst_250 = arith.constant dense<0.000000e+00> : vector<8x8xf32>
    %753 = tpu.matmul %750, %751, %cst_250 {dimension_numbers = #tpu.dot_dimension_numbers<[1], [1], [0], [0], [0, 0, 1, 0], [], []>} : vector<8x8xf32>, vector<8x8xf32>, vector<8x8xf32> -> vector<8x8xf32>
    %cst_251 = arith.constant dense<0xFF800000> : vector<8xf32>
    %754 = vector.multi_reduction <maximumf>, %753, %cst_251 [1] : vector<8x8xf32> to vector<8xf32>
    %755 = vector.shape_cast %754 : vector<8xf32> to vector<8x1xf32>
    %756 = vector.broadcast %755 : vector<8x1xf32> to vector<8x8xf32>
    %757 = arith.subf %753, %756 : vector<8x8xf32>
    %758 = math.exp %757 : vector<8x8xf32>
    %cst_252 = arith.constant dense<0.000000e+00> : vector<8xf32>
    %759 = vector.multi_reduction <add>, %758, %cst_252 [1] : vector<8x8xf32> to vector<8xf32>
    %760 = vector.shape_cast %759 : vector<8xf32> to vector<8x1xf32>
    %761 = vector.broadcast %760 : vector<8x1xf32> to vector<8x8xf32>
    %762 = arith.divf %758, %761 : vector<8x8xf32>
    %cst_253 = arith.constant dense<0.000000e+00> : vector<8x8xf32>
    %763 = tpu.matmul %762, %752, %cst_253 {dimension_numbers = #tpu.dot_dimension_numbers<[1], [0], [0], [1], [0, 0, 1, 1], [], []>} : vector<8x8xf32>, vector<8x8xf32>, vector<8x8xf32> -> vector<8x8xf32>
    %764 = vector.extract_strided_slice %673 {offsets = [8, 8], sizes = [8, 8], strides = [1, 1]} : vector<16x96xf32> to vector<8x8xf32>
    %cst_254 = arith.constant 0.353553385 : f32
    %765 = vector.broadcast %cst_254 : f32 to vector<8x8xf32>
    %766 = arith.mulf %764, %765 : vector<8x8xf32>
    %767 = vector.extract_strided_slice %677 {offsets = [8, 40], sizes = [8, 8], strides = [1, 1]} : vector<16x96xf32> to vector<8x8xf32>
    %768 = vector.extract_strided_slice %677 {offsets = [8, 72], sizes = [8, 8], strides = [1, 1]} : vector<16x96xf32> to vector<8x8xf32>
    %cst_255 = arith.constant dense<0.000000e+00> : vector<8x8xf32>
    %769 = tpu.matmul %766, %767, %cst_255 {dimension_numbers = #tpu.dot_dimension_numbers<[1], [1], [0], [0], [0, 0, 1, 0], [], []>} : vector<8x8xf32>, vector<8x8xf32>, vector<8x8xf32> -> vector<8x8xf32>
    %cst_256 = arith.constant dense<0xFF800000> : vector<8xf32>
    %770 = vector.multi_reduction <maximumf>, %769, %cst_256 [1] : vector<8x8xf32> to vector<8xf32>
    %771 = vector.shape_cast %770 : vector<8xf32> to vector<8x1xf32>
    %772 = vector.broadcast %771 : vector<8x1xf32> to vector<8x8xf32>
    %773 = arith.subf %769, %772 : vector<8x8xf32>
    %774 = math.exp %773 : vector<8x8xf32>
    %cst_257 = arith.constant dense<0.000000e+00> : vector<8xf32>
    %775 = vector.multi_reduction <add>, %774, %cst_257 [1] : vector<8x8xf32> to vector<8xf32>
    %776 = vector.shape_cast %775 : vector<8xf32> to vector<8x1xf32>
    %777 = vector.broadcast %776 : vector<8x1xf32> to vector<8x8xf32>
    %778 = arith.divf %774, %777 : vector<8x8xf32>
    %779 = arith.addf %762, %778 : vector<8x8xf32>
    %cst_258 = arith.constant dense<0.000000e+00> : vector<8x8xf32>
    %780 = tpu.matmul %778, %768, %cst_258 {dimension_numbers = #tpu.dot_dimension_numbers<[1], [0], [0], [1], [0, 0, 1, 1], [], []>} : vector<8x8xf32>, vector<8x8xf32>, vector<8x8xf32> -> vector<8x8xf32>
    %781 = vector.extract_strided_slice %673 {offsets = [8, 16], sizes = [8, 8], strides = [1, 1]} : vector<16x96xf32> to vector<8x8xf32>
    %cst_259 = arith.constant 0.353553385 : f32
    %782 = vector.broadcast %cst_259 : f32 to vector<8x8xf32>
    %783 = arith.mulf %781, %782 : vector<8x8xf32>
    %784 = vector.extract_strided_slice %677 {offsets = [8, 48], sizes = [8, 8], strides = [1, 1]} : vector<16x96xf32> to vector<8x8xf32>
    %785 = vector.extract_strided_slice %677 {offsets = [8, 80], sizes = [8, 8], strides = [1, 1]} : vector<16x96xf32> to vector<8x8xf32>
    %cst_260 = arith.constant dense<0.000000e+00> : vector<8x8xf32>
    %786 = tpu.matmul %783, %784, %cst_260 {dimension_numbers = #tpu.dot_dimension_numbers<[1], [1], [0], [0], [0, 0, 1, 0], [], []>} : vector<8x8xf32>, vector<8x8xf32>, vector<8x8xf32> -> vector<8x8xf32>
    %cst_261 = arith.constant dense<0xFF800000> : vector<8xf32>
    %787 = vector.multi_reduction <maximumf>, %786, %cst_261 [1] : vector<8x8xf32> to vector<8xf32>
    %788 = vector.shape_cast %787 : vector<8xf32> to vector<8x1xf32>
    %789 = vector.broadcast %788 : vector<8x1xf32> to vector<8x8xf32>
    %790 = arith.subf %786, %789 : vector<8x8xf32>
    %791 = math.exp %790 : vector<8x8xf32>
    %cst_262 = arith.constant dense<0.000000e+00> : vector<8xf32>
    %792 = vector.multi_reduction <add>, %791, %cst_262 [1] : vector<8x8xf32> to vector<8xf32>
    %793 = vector.shape_cast %792 : vector<8xf32> to vector<8x1xf32>
    %794 = vector.broadcast %793 : vector<8x1xf32> to vector<8x8xf32>
    %795 = arith.divf %791, %794 : vector<8x8xf32>
    %796 = arith.addf %779, %795 : vector<8x8xf32>
    %cst_263 = arith.constant dense<0.000000e+00> : vector<8x8xf32>
    %797 = tpu.matmul %795, %785, %cst_263 {dimension_numbers = #tpu.dot_dimension_numbers<[1], [0], [0], [1], [0, 0, 1, 1], [], []>} : vector<8x8xf32>, vector<8x8xf32>, vector<8x8xf32> -> vector<8x8xf32>
    %798 = vector.extract_strided_slice %673 {offsets = [8, 24], sizes = [8, 8], strides = [1, 1]} : vector<16x96xf32> to vector<8x8xf32>
    %cst_264 = arith.constant 0.353553385 : f32
    %799 = vector.broadcast %cst_264 : f32 to vector<8x8xf32>
    %800 = arith.mulf %798, %799 : vector<8x8xf32>
    %801 = vector.extract_strided_slice %677 {offsets = [8, 56], sizes = [8, 8], strides = [1, 1]} : vector<16x96xf32> to vector<8x8xf32>
    %802 = vector.extract_strided_slice %677 {offsets = [8, 88], sizes = [8, 8], strides = [1, 1]} : vector<16x96xf32> to vector<8x8xf32>
    %cst_265 = arith.constant dense<0.000000e+00> : vector<8x8xf32>
    %803 = tpu.matmul %800, %801, %cst_265 {dimension_numbers = #tpu.dot_dimension_numbers<[1], [1], [0], [0], [0, 0, 1, 0], [], []>} : vector<8x8xf32>, vector<8x8xf32>, vector<8x8xf32> -> vector<8x8xf32>
    %cst_266 = arith.constant dense<0xFF800000> : vector<8xf32>
    %804 = vector.multi_reduction <maximumf>, %803, %cst_266 [1] : vector<8x8xf32> to vector<8xf32>
    %805 = vector.shape_cast %804 : vector<8xf32> to vector<8x1xf32>
    %806 = vector.broadcast %805 : vector<8x1xf32> to vector<8x8xf32>
    %807 = arith.subf %803, %806 : vector<8x8xf32>
    %808 = math.exp %807 : vector<8x8xf32>
    %cst_267 = arith.constant dense<0.000000e+00> : vector<8xf32>
    %809 = vector.multi_reduction <add>, %808, %cst_267 [1] : vector<8x8xf32> to vector<8xf32>
    %810 = vector.shape_cast %809 : vector<8xf32> to vector<8x1xf32>
    %811 = vector.broadcast %810 : vector<8x1xf32> to vector<8x8xf32>
    %812 = arith.divf %808, %811 : vector<8x8xf32>
    %813 = arith.addf %796, %812 : vector<8x8xf32>
    %cst_268 = arith.constant dense<0.000000e+00> : vector<8x8xf32>
    %814 = tpu.matmul %812, %802, %cst_268 {dimension_numbers = #tpu.dot_dimension_numbers<[1], [0], [0], [1], [0, 0, 1, 1], [], []>} : vector<8x8xf32>, vector<8x8xf32>, vector<8x8xf32> -> vector<8x8xf32>
    %815 = tpu.concatenate %763, %780, %797, %814 in 1 : vector<8x8xf32>, vector<8x8xf32>, vector<8x8xf32>, vector<8x8xf32> -> vector<8x32xf32>
    %cst_269 = arith.constant 2.500000e-01 : f32
    %816 = vector.broadcast %cst_269 : f32 to vector<8x8xf32>
    %817 = arith.mulf %813, %816 : vector<8x8xf32>
    %818 = tpu.concatenate %745, %815 in 0 : vector<8x32xf32>, vector<8x32xf32> -> vector<16x32xf32>
    %cst_270 = arith.constant dense<0.000000e+00> : vector<16x32xf32>
    %819 = tpu.matmul %818, %665, %cst_270 {dimension_numbers = #tpu.dot_dimension_numbers<[1], [0], [0], [1], [0, 0, 1, 1], [], []>} : vector<16x32xf32>, vector<32x32xf32>, vector<16x32xf32> -> vector<16x32xf32>
    %820 = vector.shape_cast %669 : vector<32xf32> to vector<1x32xf32>
    %821 = vector.broadcast %820 : vector<1x32xf32> to vector<16x32xf32>
    %822 = arith.addf %819, %821 : vector<16x32xf32>
    %823 = arith.addf %635, %822 : vector<16x32xf32>
    %c9 = arith.constant 9 : index
    %c0_271 = arith.constant 0 : index
    %824 = vector.load %arg3[%c9, %c0_271] : memref<10x128xf32, #tpu.memory_space<vmem>>, vector<1x32xf32>
    %825 = vector.shape_cast %824 : vector<1x32xf32> to vector<32xf32>
    %c9_272 = arith.constant 9 : index
    %c32_273 = arith.constant 32 : index
    %826 = vector.load %arg3[%c9_272, %c32_273] : memref<10x128xf32, #tpu.memory_space<vmem>>, vector<1x32xf32>
    %827 = vector.shape_cast %826 : vector<1x32xf32> to vector<32xf32>
    %cst_274 = arith.constant dense<0.000000e+00> : vector<16xf32>
    %828 = vector.multi_reduction <add>, %823, %cst_274 [1] : vector<16x32xf32> to vector<16xf32>
    %829 = vector.shape_cast %828 : vector<16xf32> to vector<16x1xf32>
    %cst_275 = arith.constant 3.200000e+01 : f32
    %830 = vector.broadcast %cst_275 : f32 to vector<16x1xf32>
    %831 = arith.divf %829, %830 : vector<16x1xf32>
    %832 = vector.broadcast %831 : vector<16x1xf32> to vector<16x32xf32>
    %833 = arith.subf %823, %832 : vector<16x32xf32>
    %834 = arith.mulf %833, %833 : vector<16x32xf32>
    %cst_276 = arith.constant dense<0.000000e+00> : vector<16xf32>
    %835 = vector.multi_reduction <add>, %834, %cst_276 [1] : vector<16x32xf32> to vector<16xf32>
    %836 = vector.shape_cast %835 : vector<16xf32> to vector<16x1xf32>
    %cst_277 = arith.constant 3.200000e+01 : f32
    %837 = vector.broadcast %cst_277 : f32 to vector<16x1xf32>
    %838 = arith.divf %836, %837 : vector<16x1xf32>
    %cst_278 = arith.constant 9.99999974E-6 : f32
    %839 = vector.broadcast %cst_278 : f32 to vector<16x1xf32>
    %840 = arith.addf %838, %839 : vector<16x1xf32>
    %841 = math.rsqrt %840 : vector<16x1xf32>
    %842 = vector.broadcast %841 : vector<16x1xf32> to vector<16x32xf32>
    %843 = arith.mulf %833, %842 : vector<16x32xf32>
    %844 = vector.shape_cast %825 : vector<32xf32> to vector<1x32xf32>
    %845 = vector.broadcast %844 : vector<1x32xf32> to vector<16x32xf32>
    %846 = arith.mulf %843, %845 : vector<16x32xf32>
    %847 = vector.shape_cast %827 : vector<32xf32> to vector<1x32xf32>
    %848 = vector.broadcast %847 : vector<1x32xf32> to vector<16x32xf32>
    %849 = arith.addf %846, %848 : vector<16x32xf32>
    %c5_279 = arith.constant 5 : index
    %c0_280 = arith.constant 0 : index
    %c0_281 = arith.constant 0 : index
    %850 = vector.load %arg2[%c5_279, %c0_280, %c0_281] : memref<7x32x128xf32, #tpu.memory_space<vmem>>, vector<1x32x32xf32>
    %851 = vector.shape_cast %850 : vector<1x32x32xf32> to vector<32x32xf32>
    %c5_282 = arith.constant 5 : index
    %c0_283 = arith.constant 0 : index
    %c32_284 = arith.constant 32 : index
    %852 = vector.load %arg2[%c5_282, %c0_283, %c32_284] : memref<7x32x128xf32, #tpu.memory_space<vmem>>, vector<1x32x32xf32>
    %853 = vector.shape_cast %852 : vector<1x32x32xf32> to vector<32x32xf32>
    %c9_285 = arith.constant 9 : index
    %c64_286 = arith.constant 64 : index
    %854 = vector.load %arg3[%c9_285, %c64_286] : memref<10x128xf32, #tpu.memory_space<vmem>>, vector<1x32xf32>
    %855 = vector.shape_cast %854 : vector<1x32xf32> to vector<32xf32>
    %c9_287 = arith.constant 9 : index
    %c96_288 = arith.constant 96 : index
    %856 = vector.load %arg3[%c9_287, %c96_288] : memref<10x128xf32, #tpu.memory_space<vmem>>, vector<1x32xf32>
    %857 = vector.shape_cast %856 : vector<1x32xf32> to vector<32xf32>
    %cst_289 = arith.constant dense<0.000000e+00> : vector<16x32xf32>
    %858 = tpu.matmul %849, %851, %cst_289 {dimension_numbers = #tpu.dot_dimension_numbers<[1], [0], [0], [1], [0, 0, 1, 1], [], []>} : vector<16x32xf32>, vector<32x32xf32>, vector<16x32xf32> -> vector<16x32xf32>
    %859 = vector.shape_cast %855 : vector<32xf32> to vector<1x32xf32>
    %860 = vector.broadcast %859 : vector<1x32xf32> to vector<16x32xf32>
    %861 = arith.addf %858, %860 : vector<16x32xf32>
    %cst_290 = arith.constant 0.000000e+00 : f32
    %862 = vector.broadcast %cst_290 : f32 to vector<16x32xf32>
    %863 = arith.maximumf %861, %862 : vector<16x32xf32>
    %cst_291 = arith.constant dense<0.000000e+00> : vector<16x32xf32>
    %864 = tpu.matmul %863, %853, %cst_291 {dimension_numbers = #tpu.dot_dimension_numbers<[1], [0], [0], [1], [0, 0, 1, 1], [], []>} : vector<16x32xf32>, vector<32x32xf32>, vector<16x32xf32> -> vector<16x32xf32>
    %865 = arith.addf %823, %864 : vector<16x32xf32>
    %866 = vector.shape_cast %857 : vector<32xf32> to vector<1x32xf32>
    %867 = vector.broadcast %866 : vector<1x32xf32> to vector<16x32xf32>
    %868 = arith.addf %865, %867 : vector<16x32xf32>
    %c6_292 = arith.constant 6 : index
    %c0_293 = arith.constant 0 : index
    %c0_294 = arith.constant 0 : index
    %869 = vector.load %arg2[%c6_292, %c0_293, %c0_294] : memref<7x32x128xf32, #tpu.memory_space<vmem>>, vector<1x32x32xf32>
    %870 = vector.shape_cast %869 : vector<1x32x32xf32> to vector<32x32xf32>
    %c6_295 = arith.constant 6 : index
    %c0_296 = arith.constant 0 : index
    %c32_297 = arith.constant 32 : index
    %871 = vector.load %arg2[%c6_295, %c0_296, %c32_297] : memref<7x32x128xf32, #tpu.memory_space<vmem>>, vector<1x32x32xf32>
    %872 = vector.shape_cast %871 : vector<1x32x32xf32> to vector<32x32xf32>
    %c0_298 = arith.constant 0 : index
    %c96_299 = arith.constant 96 : index
    %873 = vector.load %arg3[%c0_298, %c96_299] : memref<10x128xf32, #tpu.memory_space<vmem>>, vector<1x32xf32>
    %874 = vector.shape_cast %873 : vector<1x32xf32> to vector<32xf32>
    %c1_300 = arith.constant 1 : index
    %c0_301 = arith.constant 0 : index
    %875 = vector.load %arg3[%c1_300, %c0_301] : memref<10x128xf32, #tpu.memory_space<vmem>>, vector<1x32xf32>
    %876 = vector.shape_cast %875 : vector<1x32xf32> to vector<32xf32>
    %cst_302 = arith.constant dense<0.000000e+00> : vector<16x32xf32>
    %877 = tpu.matmul %868, %870, %cst_302 {dimension_numbers = #tpu.dot_dimension_numbers<[1], [0], [0], [1], [0, 0, 1, 1], [], []>} : vector<16x32xf32>, vector<32x32xf32>, vector<16x32xf32> -> vector<16x32xf32>
    %878 = vector.shape_cast %874 : vector<32xf32> to vector<1x32xf32>
    %879 = vector.broadcast %878 : vector<1x32xf32> to vector<16x32xf32>
    %880 = arith.addf %877, %879 : vector<16x32xf32>
    %cst_303 = arith.constant 0.000000e+00 : f32
    %881 = vector.broadcast %cst_303 : f32 to vector<16x32xf32>
    %882 = arith.maximumf %880, %881 : vector<16x32xf32>
    %cst_304 = arith.constant dense<0.000000e+00> : vector<16x32xf32>
    %883 = tpu.matmul %882, %872, %cst_304 {dimension_numbers = #tpu.dot_dimension_numbers<[1], [0], [0], [1], [0, 0, 1, 1], [], []>} : vector<16x32xf32>, vector<32x32xf32>, vector<16x32xf32> -> vector<16x32xf32>
    %884 = vector.shape_cast %876 : vector<32xf32> to vector<1x32xf32>
    %885 = vector.broadcast %884 : vector<1x32xf32> to vector<16x32xf32>
    %886 = arith.addf %883, %885 : vector<16x32xf32>
    %887 = tpu.concatenate %142, %330, %559, %747 in 1 : vector<8x8xf32>, vector<8x8xf32>, vector<8x8xf32>, vector<8x8xf32> -> vector<8x32xf32>
    %888 = tpu.concatenate %212, %400, %629, %817 in 1 : vector<8x8xf32>, vector<8x8xf32>, vector<8x8xf32>, vector<8x8xf32> -> vector<8x32xf32>
    %889 = tpu.concatenate %887, %888 in 0 : vector<8x32xf32>, vector<8x32xf32> -> vector<16x32xf32>
    %cst_305 = arith.constant 0.000000e+00 : f32
    %890 = vector.broadcast %cst_305 : f32 to vector<16x64xf32>
    %891 = tpu.concatenate %886, %889, %890 in 1 : vector<16x32xf32>, vector<16x32xf32>, vector<16x64xf32> -> vector<16x128xf32>
    %c0_306 = arith.constant 0 : index
    %c0_307 = arith.constant 0 : index
    %892 = vector.load %arg4[%c0_306, %c0_307] : memref<16x128xf32, #tpu.memory_space<vmem>>, vector<16x128xf32>
    tpu.vector_store %arg4[%c0_306, %c0_307], %891 {strides = array<i32>} : memref<16x128xf32, #tpu.memory_space<vmem>>, vector<16x128xf32>,
    return
  }
  func.func @transform_0(%arg0: i32) -> (i32, i32) {
    %c0_i32 = arith.constant 0 : i32
    %c0_i32_0 = arith.constant 0 : i32
    return %arg0, %c0_i32 : i32, i32
  }
  func.func @transform_1(%arg0: i32) -> (i32, i32, i32) {
    %c0_i32 = arith.constant 0 : i32
    %c0_i32_0 = arith.constant 0 : i32
    %c0_i32_1 = arith.constant 0 : i32
    %c0_i32_2 = arith.constant 0 : i32
    return %c0_i32, %c0_i32_0, %c0_i32_1 : i32, i32, i32
  }
  func.func @transform_2(%arg0: i32) -> (i32, i32) {
    %c0_i32 = arith.constant 0 : i32
    %c0_i32_0 = arith.constant 0 : i32
    %c0_i32_1 = arith.constant 0 : i32
    return %c0_i32, %c0_i32_0 : i32, i32
  }
  func.func @transform_3(%arg0: i32) -> (i32, i32) {
    %c0_i32 = arith.constant 0 : i32
    %c0_i32_0 = arith.constant 0 : i32
    return %arg0, %c0_i32 : i32, i32
  }
}

</mosaic_0001>

<llo_original>
// kernel: tpu_custom_call.1
$region0: #{tpu_custom_call.1}
  #allocation0 [shape = 'u32[]', space=smem, size = 0x4, offset = 0x4, fixed_abs, tag = 'smem constant byte address 0x4 - core index']
  #allocation1 [shape = 'u32[72,128]{1,0:T(1,128)}', space=vmem, size = 0x9000, scoped, tag = 'internal scratch']
  %s0 = inlined_call_operand.vmem [shape: f32[16,4], index: 0, kind: input, shape index: {}]
  %s1 = inlined_call_operand.hbm [shape: f32[7,32,128], index: 1, kind: input, shape index: {}]
  %s2 = inlined_call_operand.vmem [shape: f32[10,128], index: 2, kind: input, shape index: {}]
  %s3 = inlined_call_operand.hbm [shape: f32[16,128], index: 3, kind: output, shape index: {}]
  %s4 = sld [smem:[#allocation0]]
  $region26: #{tpu_custom_call.1} parent=0
    _
  %s6 = ssub.s32 1, %s4
  %s7 = scalar_select 0, %s6, %s4
  $region1: #{tpu_custom_call.1} parent=0
    #allocation2 [shape = 'u8[114688]{0}', space=vmem, size = 0x1c000, scoped, tag = 'input window, operand 1, single buffered']
    #allocation3 [shape = 's32[1]{0}', space=sflag, size = 0x4, scoped, tag = 'scoped memory for tpu_custom_call.1']
    #allocation4 [shape = 's32[1]{0}', space=sflag, size = 0x4, scoped, tag = 'scoped memory for tpu_custom_call.1']
    #allocation5 [shape = 'u8[8192]{0}', space=vmem, size = 0x2000, scoped, tag = 'output window, operand 0, single buffered']
    %8 = vsyncpa [#allocation3], 0
    %9 = vsyncpa [#allocation4], 0
    // Predicated region
    $region2: #{tpu_custom_call.1} parent=1 // pred_check
      _
    $region3: #{tpu_custom_call.1} parent=1 // pred_check_branch
      %11 = sbr.rel (0) target = $region5
    $region4: #{tpu_custom_call.1} parent=1 // pred_region
      _
    $region5: #{tpu_custom_call.1} parent=1 // pred_fallthru
      _
    // Predicated region
    $region6: #{tpu_custom_call.1} parent=1 // pred_check
      _
    $region7: #{tpu_custom_call.1} parent=1 // pred_check_branch
      %13 = sbr.rel (0) target = $region9
    $region8: #{tpu_custom_call.1} parent=1 // pred_region
      %15 = vsyncadd [#allocation3], 0
      %s16 = sshll.u32 %s1, 4
      %s17 = int_to_ptr.hbm [resolvable:$true] %s16
      %s18 = sshll.u32 [#allocation2], 4
      %s19 = int_to_ptr.vmem [resolvable:$true] %s18
      %24 = dma.hbm_to_vmem [thread:$0]  %s17, 3584, %s19, [#allocation3], 128, 128, 8
    $region9: #{tpu_custom_call.1} parent=1 // pred_fallthru
      _
    // Predicated region
    $region10: #{tpu_custom_call.1} parent=1 // pred_check
      _
    $region11: #{tpu_custom_call.1} parent=1 // pred_check_branch
      %26 = sbr.rel (0) target = $region13
    $region12: #{tpu_custom_call.1} parent=1 // pred_region
      _
    $region13: #{tpu_custom_call.1} parent=1 // pred_fallthru
      _
    // Predicated region
    $region14: #{tpu_custom_call.1} parent=1 // pred_check
      _
    $region15: #{tpu_custom_call.1} parent=1 // pred_check_branch
      %28 = sbr.rel (0) target = $region17
    $region16: #{tpu_custom_call.1} parent=1 // pred_region
      %30 = dma.done [#allocation3], 3584
    $region17: #{tpu_custom_call.1} parent=1 // pred_fallthru
      _
    %v31 = vld [vmem:[%s0] sm:$0xff]
    %v32 = vld [vmem:[%s0 + $0x8] sm:$0xff]
    %v33 = vld [vmem:[%s2] sm:$0x1]
    %35 = vset.pattern.permute.xlu0 0
    %36 = vperm.xlu0 %35, %v31
    %v37 = vpop.permute.xlu0 %36
    %40 = vset.pattern.permute.xlu0 0
    %41 = vperm.xlu0 %40, %v32
    %v42 = vpop.permute.xlu0 %41
    %v44 = vperm.slane %v33, 0
    %v45 = vmul.f32 %v37, %v44
    %v46 = vmul.f32 %v42, %v44
    %47 = vset.pattern.permute.xlu0 1
    %48 = vperm.xlu0 %47, %v31
    %v49 = vpop.permute.xlu0 %48
    %51 = vset.pattern.permute.xlu0 1
    %52 = vperm.xlu0 %51, %v32
    %v53 = vpop.permute.xlu0 %52
    %v55 = vmul.f32 %v49, %v44
    %v56 = vmul.f32 %v53, %v44
    %59 = vrot.lane.b32.xlu0 %v55, 96
    %v60 = vpop.permute.xlu0 %59
    %61 = vrot.lane.b32.xlu0 %v56, 96
    %v62 = vpop.permute.xlu0 %61
    %v65 = vadd.f32 %v45, %v60
    %v66 = vadd.f32 %v46, %v62
    %68 = vrot.lane.b32.xlu0 %v44, 64
    %v69 = vpop.permute.xlu0 %68
    %v71 = vadd.f32 %v65, %v69
    %v72 = vadd.f32 %v66, %v69
    %73 = vset.pattern.permute.xlu0 2
    %74 = vperm.xlu0 %73, %v31
    %v75 = vpop.permute.xlu0 %74
    %77 = vset.pattern.permute.xlu0 2
    %78 = vperm.xlu0 %77, %v32
    %v79 = vpop.permute.xlu0 %78
    %v81 = vmul.f32 %v75, %v44
    %v82 = vmul.f32 %v79, %v44
    %83 = vset.pattern.permute.xlu0 3
    %84 = vperm.xlu0 %83, %v31
    %v85 = vpop.permute.xlu0 %84
    %87 = vset.pattern.permute.xlu0 3
    %88 = vperm.xlu0 %87, %v32
    %v89 = vpop.permute.xlu0 %88
    %v91 = vmul.f32 %v85, %v44
    %v92 = vmul.f32 %v89, %v44
    %95 = vrot.lane.b32.xlu0 %v91, 96
    %v96 = vpop.permute.xlu0 %95
    %97 = vrot.lane.b32.xlu0 %v92, 96
    %v98 = vpop.permute.xlu0 %97
    %v101 = vadd.f32 %v81, %v96
    %v102 = vadd.f32 %v82, %v98
    %v103 = vadd.f32 %v101, %v69
    %v104 = vadd.f32 %v102, %v69
    %v105 = vld [vmem:[%s2 + $0x4] sm:$0x1]
    %vm106 = vcmask 261120
    %v107 = vsel %vm106, %v71, 0.0
    %108 = vadd.xlane.f32.xlu0 %v107
    %v109 = vpop.xlane.xlu0 %108
    %v110 = vsel %vm106, %v72, 0.0
    %111 = vadd.xlane.f32.xlu0 %v110
    %v112 = vpop.xlane.xlu0 %111
    %v113 = vrcp.pop 32.0
    %v114 = vmul.f32 32.0, %v113
    %v115 = vsub.f32 1.0, %v114
    %v116 = vmul.f32 %v113, %v115
    %v117 = vadd.f32 %v113, %v116
    %vm118 = vweird.f32 %v113
    %v119 = vsel %vm118, %v113, %v117
    %v120 = vmul.f32 %v109, %v119
    %v121 = vmul.f32 %v112, %v119
    %v122 = vsub.f32 %v71, %v120
    %v123 = vsub.f32 %v72, %v121
    %v124 = vmul.f32 %v122, %v122
    %v125 = vmul.f32 %v123, %v123
    %v126 = vsel %vm106, %v124, 0.0
    %127 = vadd.xlane.f32.xlu0 %v126
    %v128 = vpop.xlane.xlu0 %127
    %v129 = vsel %vm106, %v125, 0.0
    %130 = vadd.xlane.f32.xlu0 %v129
    %v131 = vpop.xlane.xlu0 %130
    %v132 = vmul.f32 %v128, %v119
    %v133 = vmul.f32 %v131, %v119
    %v134 = vadd.f32 %v132, 1e-05
    %v135 = vadd.f32 %v133, 1e-05
    %v136 = vrsqrt.pop %v134
    %v137 = vmul.f32 %v136, %v134
    %v138 = vmul.f32 %v137, %v136
    %v139 = vmul.f32 0.5, %v138
    %v140 = vsub.f32 1.5, %v139
    %v141 = vmul.f32 %v136, %v140
    %vm142 = vweird.f32 %v134
    %vm143 = vweird.f32 %v136
    %vm144 = vmor %vm142, %vm143
    %v145 = vsel %vm144, %v136, %v141
    %v146 = vrsqrt.pop %v135
    %v147 = vmul.f32 %v146, %v135
    %v148 = vmul.f32 %v147, %v146
    %v149 = vmul.f32 0.5, %v148
    %v150 = vsub.f32 1.5, %v149
    %v151 = vmul.f32 %v146, %v150
    %vm152 = vweird.f32 %v135
    %vm153 = vweird.f32 %v146
    %vm154 = vmor %vm152, %vm153
    %v155 = vsel %vm154, %v146, %v151
    %v156 = vmul.f32 %v122, %v145
    %v157 = vmul.f32 %v123, %v155
    %v158 = vperm.slane %v105, 0
    %v159 = vmul.f32 %v156, %v158
    %v160 = vmul.f32 %v157, %v158
    %162 = vrot.lane.b32.xlu0 %v158, 96
    %v163 = vpop.permute.xlu0 %162
    %v165 = vadd.f32 %v159, %v163
    %v166 = vadd.f32 %v160, %v163
    %v167 = vld [vmem:[#allocation2] sm:$0xff]
    %v168 = vld [vmem:[#allocation2 + $0x8] sm:$0xff]
    %v169 = vld [vmem:[#allocation2 + $0x10] sm:$0xff]
    %v170 = vld [vmem:[#allocation2 + $0x18] sm:$0xff]
    %v171 = vld [vmem:[%s2 + $0x2] sm:$0x1]
    %v172 = vperm.slane %v171, 0
    %v174 = vsel %vm106, %v165, 0
    %v177 = vsel %vm106, %v166, 0
    %179 = vmatpush.msra.mxu0 0.0
    %180 = vmatpush.msra.mxu0 0.0
    %181 = vmatpush.msra.mxu0 0.0
    %182 = vmatpush.msra.mxu0 0.0
    %183 = vmatpush.msra.mxu0 0.0
    %184 = vmatpush.msra.mxu0 0.0
    %185 = vmatpush.msra.mxu0 0.0
    %186 = vmatpush.msra.mxu0 0.0
    %187 = vmatpush.msra.mxu0 0.0
    %188 = vmatpush.msra.mxu0 0.0
    %189 = vmatpush.msra.mxu0 0.0
    %190 = vmatpush.msra.mxu0 0.0
    %191 = vmatpush.msra.mxu0 %v170
    %192 = vmatpush.msra.mxu0 %v169
    %193 = vmatpush.msra.mxu0 %v168
    %194 = vmatpush.msra.mxu0 %v167
    %195 = vmatmul.f32.gmra.mxu0 %v174
    %v196 = vpop.f32.mrf.mxu0
    %v197 = vadd.f32 %v172, %v196
    %198 = vmatmul.f32.gmra.mxu0 %v177
    %v199 = vpop.f32.mrf.mxu0
    %v200 = vadd.f32 %v172, %v199
    %201 = vdwg.mxu0
    %v202 = vmul.f32 %v197, 0.35355338
    %204 = vrot.lane.b32.xlu0 %v197, 96
    %v205 = vpop.permute.xlu0 %204
    %vm206 = vcmask 64512
    %v208 = vsel %vm206, %v202, 0
    %v210 = vsel %vm206, %v205, 0
    %212 = vmatpush.xpose.msra.mxu0 0.0
    %213 = vmatpush.xpose.msra.mxu0 0.0
    %214 = vmatpush.xpose.msra.mxu0 0.0
    %215 = vmatpush.xpose.msra.mxu0 0.0
    %216 = vmatpush.xpose.msra.mxu0 0.0
    %217 = vmatpush.xpose.msra.mxu0 0.0
    %218 = vmatpush.xpose.msra.mxu0 0.0
    %219 = vmatpush.xpose.msra.mxu0 0.0
    %220 = vmatpush.xpose.msra.mxu0 0.0
    %221 = vmatpush.xpose.msra.mxu0 0.0
    %222 = vmatpush.xpose.msra.mxu0 0.0
    %223 = vmatpush.xpose.msra.mxu0 0.0
    %224 = vmatpush.xpose.msra.mxu0 0.0
    %225 = vmatpush.xpose.msra.mxu0 0.0
    %226 = vmatpush.xpose.msra.mxu0 0.0
    %227 = vmatpush.xpose.msra.mxu0 %v210
    %228 = vmatmul.f32.gmra.mxu0 %v208
    %v229 = vpop.f32.mrf.mxu0
    %v230 = vadd.f32 0.0, %v229
    %231 = vdwg.mxu0
    %v232 = vsel %vm206, %v230, -inf
    %233 = vmax.xlane.f32.xlu0 %v232
    %v234 = vpop.xlane.xlu0 %233
    %v235 = vsub.f32 %v230, %v234
    %v236 = vmul.f32 %v235, 1.442695
    %v237 = vpow.pop %v236
    %v238 = vsel %vm206, %v237, 0.0
    %239 = vadd.xlane.f32.xlu0 %v238
    %v240 = vpop.xlane.xlu0 %239
    %v241 = vrcp.pop %v240
    %v242 = vmul.f32 %v240, %v241
    %v243 = vsub.f32 1.0, %v242
    %v244 = vmul.f32 %v241, %v243
    %v245 = vadd.f32 %v241, %v244
    %vm246 = vweird.f32 %v240
    %vm247 = vweird.f32 %v241
    %vm248 = vmor %vm246, %vm247
    %v249 = vsel %vm248, %v241, %v245
    %v250 = vand.u32 2147483647, %v240
    %vm251 = vcmp.eq.f32.partialorder %v250, 8.507059e+37
    %v252 = vand.u32 %v240, 2147483648
    %v253 = vor.u32 1.1754944e-38, %v252
    %v254 = vsel %vm251, %v253, %v249
    %v255 = vmul.f32 %v237, %v254
    %256 = vrot.lane.b32.xlu0 %v197, 64
    %v257 = vpop.permute.xlu0 %256
    %v260 = vsel %vm206, %v255, 0
    %262 = vmatpush.msra.mxu0 0.0
    %263 = vmatpush.msra.mxu0 0.0
    %264 = vmatpush.msra.mxu0 0.0
    %265 = vmatpush.msra.mxu0 0.0
    %266 = vmatpush.msra.mxu0 0.0
    %267 = vmatpush.msra.mxu0 0.0
    %268 = vmatpush.msra.mxu0 0.0
    %269 = vmatpush.msra.mxu0 0.0
    %270 = vmatpush.msra.mxu0 0.0
    %271 = vmatpush.msra.mxu0 0.0
    %272 = vmatpush.msra.mxu0 0.0
    %273 = vmatpush.msra.mxu0 0.0
    %274 = vmatpush.msra.mxu0 0.0
    %275 = vmatpush.msra.mxu0 0.0
    %276 = vmatpush.msra.mxu0 0.0
    %277 = vmatpush.msra.mxu0 %v257
    %278 = vmatmul.f32.gmra.mxu0 %v260
    %v279 = vpop.f32.mrf.mxu0
    %v280 = vadd.f32 0.0, %v279
    %281 = vdwg.mxu0
    %282 = vrot.lane.b32.xlu0 %v202, 120
    %v283 = vpop.permute.xlu0 %282
    %284 = vrot.lane.b32.xlu0 %v197, 88
    %v285 = vpop.permute.xlu0 %284
    %v286 = vsel %vm206, %v283, 0
    %v288 = vsel %vm206, %v285, 0
    %290 = vmatpush.xpose.msra.mxu0 0.0
    %291 = vmatpush.xpose.msra.mxu0 0.0
    %292 = vmatpush.xpose.msra.mxu0 0.0
    %293 = vmatpush.xpose.msra.mxu0 0.0
    %294 = vmatpush.xpose.msra.mxu0 0.0
    %295 = vmatpush.xpose.msra.mxu0 0.0
    %296 = vmatpush.xpose.msra.mxu0 0.0
    %297 = vmatpush.xpose.msra.mxu0 0.0
    %298 = vmatpush.xpose.msra.mxu0 0.0
    %299 = vmatpush.xpose.msra.mxu0 0.0
    %300 = vmatpush.xpose.msra.mxu0 0.0
    %301 = vmatpush.xpose.msra.mxu0 0.0
    %302 = vmatpush.xpose.msra.mxu0 0.0
    %303 = vmatpush.xpose.msra.mxu0 0.0
    %304 = vmatpush.xpose.msra.mxu0 0.0
    %305 = vmatpush.xpose.msra.mxu0 %v288
    %306 = vmatmul.f32.gmra.mxu0 %v286
    %v307 = vpop.f32.mrf.mxu0
    %v308 = vadd.f32 0.0, %v307
    %309 = vdwg.mxu0
    %v310 = vsel %vm206, %v308, -inf
    %311 = vmax.xlane.f32.xlu0 %v310
    %v312 = vpop.xlane.xlu0 %311
    %v313 = vsub.f32 %v308, %v312
    %v314 = vmul.f32 %v313, 1.442695
    %v315 = vpow.pop %v314
    %v316 = vsel %vm206, %v315, 0.0
    %317 = vadd.xlane.f32.xlu0 %v316
    %v318 = vpop.xlane.xlu0 %317
    %v319 = vrcp.pop %v318
    %v320 = vmul.f32 %v318, %v319
    %v321 = vsub.f32 1.0, %v320
    %v322 = vmul.f32 %v319, %v321
    %v323 = vadd.f32 %v319, %v322
    %vm324 = vweird.f32 %v318
    %vm325 = vweird.f32 %v319
    %vm326 = vmor %vm324, %vm325
    %v327 = vsel %vm326, %v319, %v323
    %v328 = vand.u32 2147483647, %v318
    %vm329 = vcmp.eq.f32.partialorder %v328, 8.507059e+37
    %v330 = vand.u32 %v318, 2147483648
    %v331 = vor.u32 1.1754944e-38, %v330
    %v332 = vsel %vm329, %v331, %v327
    %v333 = vmul.f32 %v315, %v332
    %v334 = vadd.f32 %v255, %v333
    %335 = vrot.lane.b32.xlu0 %v197, 56
    %v336 = vpop.permute.xlu0 %335
    %v339 = vsel %vm206, %v333, 0
    %341 = vmatpush.msra.mxu0 0.0
    %342 = vmatpush.msra.mxu0 0.0
    %343 = vmatpush.msra.mxu0 0.0
    %344 = vmatpush.msra.mxu0 0.0
    %345 = vmatpush.msra.mxu0 0.0
    %346 = vmatpush.msra.mxu0 0.0
    %347 = vmatpush.msra.mxu0 0.0
    %348 = vmatpush.msra.mxu0 0.0
    %349 = vmatpush.msra.mxu0 0.0
    %350 = vmatpush.msra.mxu0 0.0
    %351 = vmatpush.msra.mxu0 0.0
    %352 = vmatpush.msra.mxu0 0.0
    %353 = vmatpush.msra.mxu0 0.0
    %354 = vmatpush.msra.mxu0 0.0
    %355 = vmatpush.msra.mxu0 0.0
    %356 = vmatpush.msra.mxu0 %v336
    %357 = vmatmul.f32.gmra.mxu0 %v339
    %v358 = vpop.f32.mrf.mxu0
    %v359 = vadd.f32 0.0, %v358
    %360 = vdwg.mxu0
    %361 = vrot.lane.b32.xlu0 %v202, 112
    %v362 = vpop.permute.xlu0 %361
    %363 = vrot.lane.b32.xlu0 %v197, 80
    %v364 = vpop.permute.xlu0 %363
    %v365 = vsel %vm206, %v362, 0
    %v367 = vsel %vm206, %v364, 0
    %369 = vmatpush.xpose.msra.mxu0 0.0
    %370 = vmatpush.xpose.msra.mxu0 0.0
    %371 = vmatpush.xpose.msra.mxu0 0.0
    %372 = vmatpush.xpose.msra.mxu0 0.0
    %373 = vmatpush.xpose.msra.mxu0 0.0
    %374 = vmatpush.xpose.msra.mxu0 0.0
    %375 = vmatpush.xpose.msra.mxu0 0.0
    %376 = vmatpush.xpose.msra.mxu0 0.0
    %377 = vmatpush.xpose.msra.mxu0 0.0
    %378 = vmatpush.xpose.msra.mxu0 0.0
    %379 = vmatpush.xpose.msra.mxu0 0.0
    %380 = vmatpush.xpose.msra.mxu0 0.0
    %381 = vmatpush.xpose.msra.mxu0 0.0
    %382 = vmatpush.xpose.msra.mxu0 0.0
    %383 = vmatpush.xpose.msra.mxu0 0.0
    %384 = vmatpush.xpose.msra.mxu0 %v367
    %385 = vmatmul.f32.gmra.mxu0 %v365
    %v386 = vpop.f32.mrf.mxu0
    %v387 = vadd.f32 0.0, %v386
    %388 = vdwg.mxu0
    %v389 = vsel %vm206, %v387, -inf
    %390 = vmax.xlane.f32.xlu0 %v389
    %v391 = vpop.xlane.xlu0 %390
    %v392 = vsub.f32 %v387, %v391
    %v393 = vmul.f32 %v392, 1.442695
    %v394 = vpow.pop %v393
    %v395 = vsel %vm206, %v394, 0.0
    %396 = vadd.xlane.f32.xlu0 %v395
    %v397 = vpop.xlane.xlu0 %396
    %v398 = vrcp.pop %v397
    %v399 = vmul.f32 %v397, %v398
    %v400 = vsub.f32 1.0, %v399
    %v401 = vmul.f32 %v398, %v400
    %v402 = vadd.f32 %v398, %v401
    %vm403 = vweird.f32 %v397
    %vm404 = vweird.f32 %v398
    %vm405 = vmor %vm403, %vm404
    %v406 = vsel %vm405, %v398, %v402
    %v407 = vand.u32 2147483647, %v397
    %vm408 = vcmp.eq.f32.partialorder %v407, 8.507059e+37
    %v409 = vand.u32 %v397, 2147483648
    %v410 = vor.u32 1.1754944e-38, %v409
    %v411 = vsel %vm408, %v410, %v406
    %v412 = vmul.f32 %v394, %v411
    %v413 = vadd.f32 %v334, %v412
    %414 = vrot.lane.b32.xlu0 %v197, 48
    %v415 = vpop.permute.xlu0 %414
    %v418 = vsel %vm206, %v412, 0
    %420 = vmatpush.msra.mxu0 0.0
    %421 = vmatpush.msra.mxu0 0.0
    %422 = vmatpush.msra.mxu0 0.0
    %423 = vmatpush.msra.mxu0 0.0
    %424 = vmatpush.msra.mxu0 0.0
    %425 = vmatpush.msra.mxu0 0.0
    %426 = vmatpush.msra.mxu0 0.0
    %427 = vmatpush.msra.mxu0 0.0
    %428 = vmatpush.msra.mxu0 0.0
    %429 = vmatpush.msra.mxu0 0.0
    %430 = vmatpush.msra.mxu0 0.0
    %431 = vmatpush.msra.mxu0 0.0
    %432 = vmatpush.msra.mxu0 0.0
    %433 = vmatpush.msra.mxu0 0.0
    %434 = vmatpush.msra.mxu0 0.0
    %435 = vmatpush.msra.mxu0 %v415
    %436 = vmatmul.f32.gmra.mxu0 %v418
    %v437 = vpop.f32.mrf.mxu0
    %v438 = vadd.f32 0.0, %v437
    %439 = vdwg.mxu0
    %440 = vrot.lane.b32.xlu0 %v202, 104
    %v441 = vpop.permute.xlu0 %440
    %442 = vrot.lane.b32.xlu0 %v197, 72
    %v443 = vpop.permute.xlu0 %442
    %v444 = vsel %vm206, %v441, 0
    %v446 = vsel %vm206, %v443, 0
    %448 = vmatpush.xpose.msra.mxu0 0.0
    %449 = vmatpush.xpose.msra.mxu0 0.0
    %450 = vmatpush.xpose.msra.mxu0 0.0
    %451 = vmatpush.xpose.msra.mxu0 0.0
    %452 = vmatpush.xpose.msra.mxu0 0.0
    %453 = vmatpush.xpose.msra.mxu0 0.0
    %454 = vmatpush.xpose.msra.mxu0 0.0
    %455 = vmatpush.xpose.msra.mxu0 0.0
    %456 = vmatpush.xpose.msra.mxu0 0.0
    %457 = vmatpush.xpose.msra.mxu0 0.0
    %458 = vmatpush.xpose.msra.mxu0 0.0
    %459 = vmatpush.xpose.msra.mxu0 0.0
    %460 = vmatpush.xpose.msra.mxu0 0.0
    %461 = vmatpush.xpose.msra.mxu0 0.0
    %462 = vmatpush.xpose.msra.mxu0 0.0
    %463 = vmatpush.xpose.msra.mxu0 %v446
    %464 = vmatmul.f32.gmra.mxu0 %v444
    %v465 = vpop.f32.mrf.mxu0
    %v466 = vadd.f32 0.0, %v465
    %467 = vdwg.mxu0
    %v468 = vsel %vm206, %v466, -inf
    %469 = vmax.xlane.f32.xlu0 %v468
    %v470 = vpop.xlane.xlu0 %469
    %v471 = vsub.f32 %v466, %v470
    %v472 = vmul.f32 %v471, 1.442695
    %v473 = vpow.pop %v472
    %v474 = vsel %vm206, %v473, 0.0
    %475 = vadd.xlane.f32.xlu0 %v474
    %v476 = vpop.xlane.xlu0 %475
    %v477 = vrcp.pop %v476
    %v478 = vmul.f32 %v476, %v477
    %v479 = vsub.f32 1.0, %v478
    %v480 = vmul.f32 %v477, %v479
    %v481 = vadd.f32 %v477, %v480
    %vm482 = vweird.f32 %v476
    %vm483 = vweird.f32 %v477
    %vm484 = vmor %vm482, %vm483
    %v485 = vsel %vm484, %v477, %v481
    %v486 = vand.u32 2147483647, %v476
    %vm487 = vcmp.eq.f32.partialorder %v486, 8.507059e+37
    %v488 = vand.u32 %v476, 2147483648
    %v489 = vor.u32 1.1754944e-38, %v488
    %v490 = vsel %vm487, %v489, %v485
    %v491 = vmul.f32 %v473, %v490
    %v492 = vadd.f32 %v413, %v491
    %493 = vrot.lane.b32.xlu0 %v197, 40
    %v494 = vpop.permute.xlu0 %493
    %v497 = vsel %vm206, %v491, 0
    %499 = vmatpush.msra.mxu0 0.0
    %500 = vmatpush.msra.mxu0 0.0
    %501 = vmatpush.msra.mxu0 0.0
    %502 = vmatpush.msra.mxu0 0.0
    %503 = vmatpush.msra.mxu0 0.0
    %504 = vmatpush.msra.mxu0 0.0
    %505 = vmatpush.msra.mxu0 0.0
    %506 = vmatpush.msra.mxu0 0.0
    %507 = vmatpush.msra.mxu0 0.0
    %508 = vmatpush.msra.mxu0 0.0
    %509 = vmatpush.msra.mxu0 0.0
    %510 = vmatpush.msra.mxu0 0.0
    %511 = vmatpush.msra.mxu0 0.0
    %512 = vmatpush.msra.mxu0 0.0
    %513 = vmatpush.msra.mxu0 0.0
    %514 = vmatpush.msra.mxu0 %v494
    %515 = vmatmul.f32.gmra.mxu0 %v497
    %v516 = vpop.f32.mrf.mxu0
    %v517 = vadd.f32 0.0, %v516
    %518 = vdwg.mxu0
    %520 = vrot.lane.b32.xlu0 %v359, 8
    %v521 = vpop.permute.xlu0 %520
    %524 = vrot.lane.b32.xlu0 %v438, 16
    %v525 = vpop.permute.xlu0 %524
    %528 = vrot.lane.b32.xlu0 %v517, 24
    %v529 = vpop.permute.xlu0 %528
    %v531 = vsel %vm206, %v280, %v521
    %vm532 = vcmask 130048
    %v533 = vsel %vm532, %v531, %v525
    %vm534 = vcmask 195584
    %v535 = vsel %vm534, %v533, %v529
    %v536 = vmul.f32 %v492, 0.25
    %v537 = vmul.f32 %v200, 0.35355338
    %539 = vrot.lane.b32.xlu0 %v200, 96
    %v540 = vpop.permute.xlu0 %539
    %v542 = vsel %vm206, %v537, 0
    %v544 = vsel %vm206, %v540, 0
    %546 = vmatpush.xpose.msra.mxu0 0.0
    %547 = vmatpush.xpose.msra.mxu0 0.0
    %548 = vmatpush.xpose.msra.mxu0 0.0
    %549 = vmatpush.xpose.msra.mxu0 0.0
    %550 = vmatpush.xpose.msra.mxu0 0.0
    %551 = vmatpush.xpose.msra.mxu0 0.0
    %552 = vmatpush.xpose.msra.mxu0 0.0
    %553 = vmatpush.xpose.msra.mxu0 0.0
    %554 = vmatpush.xpose.msra.mxu0 0.0
    %555 = vmatpush.xpose.msra.mxu0 0.0
    %556 = vmatpush.xpose.msra.mxu0 0.0
    %557 = vmatpush.xpose.msra.mxu0 0.0
    %558 = vmatpush.xpose.msra.mxu0 0.0
    %559 = vmatpush.xpose.msra.mxu0 0.0
    %560 = vmatpush.xpose.msra.mxu0 0.0
    %561 = vmatpush.xpose.msra.mxu0 %v544
    %562 = vmatmul.f32.gmra.mxu0 %v542
    %v563 = vpop.f32.mrf.mxu0
    %v564 = vadd.f32 0.0, %v563
    %565 = vdwg.mxu0
    %v566 = vsel %vm206, %v564, -inf
    %567 = vmax.xlane.f32.xlu0 %v566
    %v568 = vpop.xlane.xlu0 %567
    %v569 = vsub.f32 %v564, %v568
    %v570 = vmul.f32 %v569, 1.442695
    %v571 = vpow.pop %v570
    %v572 = vsel %vm206, %v571, 0.0
    %573 = vadd.xlane.f32.xlu0 %v572
    %v574 = vpop.xlane.xlu0 %573
    %v575 = vrcp.pop %v574
    %v576 = vmul.f32 %v574, %v575
    %v577 = vsub.f32 1.0, %v576
    %v578 = vmul.f32 %v575, %v577
    %v579 = vadd.f32 %v575, %v578
    %vm580 = vweird.f32 %v574
    %vm581 = vweird.f32 %v575
    %vm582 = vmor %vm580, %vm581
    %v583 = vsel %vm582, %v575, %v579
    %v584 = vand.u32 2147483647, %v574
    %vm585 = vcmp.eq.f32.partialorder %v584, 8.507059e+37
    %v586 = vand.u32 %v574, 2147483648
    %v587 = vor.u32 1.1754944e-38, %v586
    %v588 = vsel %vm585, %v587, %v583
    %v589 = vmul.f32 %v571, %v588
    %590 = vrot.lane.b32.xlu0 %v200, 64
    %v591 = vpop.permute.xlu0 %590
    %v594 = vsel %vm206, %v589, 0
    %596 = vmatpush.msra.mxu0 0.0
    %597 = vmatpush.msra.mxu0 0.0
    %598 = vmatpush.msra.mxu0 0.0
    %599 = vmatpush.msra.mxu0 0.0
    %600 = vmatpush.msra.mxu0 0.0
    %601 = vmatpush.msra.mxu0 0.0
    %602 = vmatpush.msra.mxu0 0.0
    %603 = vmatpush.msra.mxu0 0.0
    %604 = vmatpush.msra.mxu0 0.0
    %605 = vmatpush.msra.mxu0 0.0
    %606 = vmatpush.msra.mxu0 0.0
    %607 = vmatpush.msra.mxu0 0.0
    %608 = vmatpush.msra.mxu0 0.0
    %609 = vmatpush.msra.mxu0 0.0
    %610 = vmatpush.msra.mxu0 0.0
    %611 = vmatpush.msra.mxu0 %v591
    %612 = vmatmul.f32.gmra.mxu0 %v594
    %v613 = vpop.f32.mrf.mxu0
    %v614 = vadd.f32 0.0, %v613
    %615 = vdwg.mxu0
    %616 = vrot.lane.b32.xlu0 %v537, 120
    %v617 = vpop.permute.xlu0 %616
    %618 = vrot.lane.b32.xlu0 %v200, 88
    %v619 = vpop.permute.xlu0 %618
    %v620 = vsel %vm206, %v617, 0
    %v622 = vsel %vm206, %v619, 0
    %624 = vmatpush.xpose.msra.mxu0 0.0
    %625 = vmatpush.xpose.msra.mxu0 0.0
    %626 = vmatpush.xpose.msra.mxu0 0.0
    %627 = vmatpush.xpose.msra.mxu0 0.0
    %628 = vmatpush.xpose.msra.mxu0 0.0
    %629 = vmatpush.xpose.msra.mxu0 0.0
    %630 = vmatpush.xpose.msra.mxu0 0.0
    %631 = vmatpush.xpose.msra.mxu0 0.0
    %632 = vmatpush.xpose.msra.mxu0 0.0
    %633 = vmatpush.xpose.msra.mxu0 0.0
    %634 = vmatpush.xpose.msra.mxu0 0.0
    %635 = vmatpush.xpose.msra.mxu0 0.0
    %636 = vmatpush.xpose.msra.mxu0 0.0
    %637 = vmatpush.xpose.msra.mxu0 0.0
    %638 = vmatpush.xpose.msra.mxu0 0.0
    %639 = vmatpush.xpose.msra.mxu0 %v622
    %640 = vmatmul.f32.gmra.mxu0 %v620
    %v641 = vpop.f32.mrf.mxu0
    %v642 = vadd.f32 0.0, %v641
    %643 = vdwg.mxu0
    %v644 = vsel %vm206, %v642, -inf
    %645 = vmax.xlane.f32.xlu0 %v644
    %v646 = vpop.xlane.xlu0 %645
    %v647 = vsub.f32 %v642, %v646
    %v648 = vmul.f32 %v647, 1.442695
    %v649 = vpow.pop %v648
    %v650 = vsel %vm206, %v649, 0.0
    %651 = vadd.xlane.f32.xlu0 %v650
    %v652 = vpop.xlane.xlu0 %651
    %v653 = vrcp.pop %v652
    %v654 = vmul.f32 %v652, %v653
    %v655 = vsub.f32 1.0, %v654
    %v656 = vmul.f32 %v653, %v655
    %v657 = vadd.f32 %v653, %v656
    %vm658 = vweird.f32 %v652
    %vm659 = vweird.f32 %v653
    %vm660 = vmor %vm658, %vm659
    %v661 = vsel %vm660, %v653, %v657
    %v662 = vand.u32 2147483647, %v652
    %vm663 = vcmp.eq.f32.partialorder %v662, 8.507059e+37
    %v664 = vand.u32 %v652, 2147483648
    %v665 = vor.u32 1.1754944e-38, %v664
    %v666 = vsel %vm663, %v665, %v661
    %v667 = vmul.f32 %v649, %v666
    %v668 = vadd.f32 %v589, %v667
    %669 = vrot.lane.b32.xlu0 %v200, 56
    %v670 = vpop.permute.xlu0 %669
    %v673 = vsel %vm206, %v667, 0
    %675 = vmatpush.msra.mxu0 0.0
    %676 = vmatpush.msra.mxu0 0.0
    %677 = vmatpush.msra.mxu0 0.0
    %678 = vmatpush.msra.mxu0 0.0
    %679 = vmatpush.msra.mxu0 0.0
    %680 = vmatpush.msra.mxu0 0.0
    %681 = vmatpush.msra.mxu0 0.0
    %682 = vmatpush.msra.mxu0 0.0
    %683 = vmatpush.msra.mxu0 0.0
    %684 = vmatpush.msra.mxu0 0.0
    %685 = vmatpush.msra.mxu0 0.0
    %686 = vmatpush.msra.mxu0 0.0
    %687 = vmatpush.msra.mxu0 0.0
    %688 = vmatpush.msra.mxu0 0.0
    %689 = vmatpush.msra.mxu0 0.0
    %690 = vmatpush.msra.mxu0 %v670
    %691 = vmatmul.f32.gmra.mxu0 %v673
    %v692 = vpop.f32.mrf.mxu0
    %v693 = vadd.f32 0.0, %v692
    %694 = vdwg.mxu0
    %695 = vrot.lane.b32.xlu0 %v537, 112
    %v696 = vpop.permute.xlu0 %695
    %697 = vrot.lane.b32.xlu0 %v200, 80
    %v698 = vpop.permute.xlu0 %697
    %v699 = vsel %vm206, %v696, 0
    %v701 = vsel %vm206, %v698, 0
    %703 = vmatpush.xpose.msra.mxu0 0.0
    %704 = vmatpush.xpose.msra.mxu0 0.0
    %705 = vmatpush.xpose.msra.mxu0 0.0
    %706 = vmatpush.xpose.msra.mxu0 0.0
    %707 = vmatpush.xpose.msra.mxu0 0.0
    %708 = vmatpush.xpose.msra.mxu0 0.0
    %709 = vmatpush.xpose.msra.mxu0 0.0
    %710 = vmatpush.xpose.msra.mxu0 0.0
    %711 = vmatpush.xpose.msra.mxu0 0.0
    %712 = vmatpush.xpose.msra.mxu0 0.0
    %713 = vmatpush.xpose.msra.mxu0 0.0
    %714 = vmatpush.xpose.msra.mxu0 0.0
    %715 = vmatpush.xpose.msra.mxu0 0.0
    %716 = vmatpush.xpose.msra.mxu0 0.0
    %717 = vmatpush.xpose.msra.mxu0 0.0
    %718 = vmatpush.xpose.msra.mxu0 %v701
    %719 = vmatmul.f32.gmra.mxu0 %v699
    %v720 = vpop.f32.mrf.mxu0
    %v721 = vadd.f32 0.0, %v720
    %722 = vdwg.mxu0
    %v723 = vsel %vm206, %v721, -inf
    %724 = vmax.xlane.f32.xlu0 %v723
    %v725 = vpop.xlane.xlu0 %724
    %v726 = vsub.f32 %v721, %v725
    %v727 = vmul.f32 %v726, 1.442695
    %v728 = vpow.pop %v727
    %v729 = vsel %vm206, %v728, 0.0
    %730 = vadd.xlane.f32.xlu0 %v729
    %v731 = vpop.xlane.xlu0 %730
    %v732 = vrcp.pop %v731
    %v733 = vmul.f32 %v731, %v732
    %v734 = vsub.f32 1.0, %v733
    %v735 = vmul.f32 %v732, %v734
    %v736 = vadd.f32 %v732, %v735
    %vm737 = vweird.f32 %v731
    %vm738 = vweird.f32 %v732
    %vm739 = vmor %vm737, %vm738
    %v740 = vsel %vm739, %v732, %v736
    %v741 = vand.u32 2147483647, %v731
    %vm742 = vcmp.eq.f32.partialorder %v741, 8.507059e+37
    %v743 = vand.u32 %v731, 2147483648
    %v744 = vor.u32 1.1754944e-38, %v743
    %v745 = vsel %vm742, %v744, %v740
    %v746 = vmul.f32 %v728, %v745
    %v747 = vadd.f32 %v668, %v746
    %748 = vrot.lane.b32.xlu0 %v200, 48
    %v749 = vpop.permute.xlu0 %748
    %v752 = vsel %vm206, %v746, 0
    %754 = vmatpush.msra.mxu0 0.0
    %755 = vmatpush.msra.mxu0 0.0
    %756 = vmatpush.msra.mxu0 0.0
    %757 = vmatpush.msra.mxu0 0.0
    %758 = vmatpush.msra.mxu0 0.0
    %759 = vmatpush.msra.mxu0 0.0
    %760 = vmatpush.msra.mxu0 0.0
    %761 = vmatpush.msra.mxu0 0.0
    %762 = vmatpush.msra.mxu0 0.0
    %763 = vmatpush.msra.mxu0 0.0
    %764 = vmatpush.msra.mxu0 0.0
    %765 = vmatpush.msra.mxu0 0.0
    %766 = vmatpush.msra.mxu0 0.0
    %767 = vmatpush.msra.mxu0 0.0
    %768 = vmatpush.msra.mxu0 0.0
    %769 = vmatpush.msra.mxu0 %v749
    %770 = vmatmul.f32.gmra.mxu0 %v752
    %v771 = vpop.f32.mrf.mxu0
    %v772 = vadd.f32 0.0, %v771
    %773 = vdwg.mxu0
    %774 = vrot.lane.b32.xlu0 %v537, 104
    %v775 = vpop.permute.xlu0 %774
    %776 = vrot.lane.b32.xlu0 %v200, 72
    %v777 = vpop.permute.xlu0 %776
    %v778 = vsel %vm206, %v775, 0
    %v780 = vsel %vm206, %v777, 0
    %782 = vmatpush.xpose.msra.mxu0 0.0
    %783 = vmatpush.xpose.msra.mxu0 0.0
    %784 = vmatpush.xpose.msra.mxu0 0.0
    %785 = vmatpush.xpose.msra.mxu0 0.0
    %786 = vmatpush.xpose.msra.mxu0 0.0
    %787 = vmatpush.xpose.msra.mxu0 0.0
    %788 = vmatpush.xpose.msra.mxu0 0.0
    %789 = vmatpush.xpose.msra.mxu0 0.0
    %790 = vmatpush.xpose.msra.mxu0 0.0
    %791 = vmatpush.xpose.msra.mxu0 0.0
    %792 = vmatpush.xpose.msra.mxu0 0.0
    %793 = vmatpush.xpose.msra.mxu0 0.0
    %794 = vmatpush.xpose.msra.mxu0 0.0
    %795 = vmatpush.xpose.msra.mxu0 0.0
    %796 = vmatpush.xpose.msra.mxu0 0.0
    %797 = vmatpush.xpose.msra.mxu0 %v780
    %798 = vmatmul.f32.gmra.mxu0 %v778
    %v799 = vpop.f32.mrf.mxu0
    %v800 = vadd.f32 0.0, %v799
    %801 = vdwg.mxu0
    %v802 = vsel %vm206, %v800, -inf
    %803 = vmax.xlane.f32.xlu0 %v802
    %v804 = vpop.xlane.xlu0 %803
    %v805 = vsub.f32 %v800, %v804
    %v806 = vmul.f32 %v805, 1.442695
    %v807 = vpow.pop %v806
    %v808 = vsel %vm206, %v807, 0.0
    %809 = vadd.xlane.f32.xlu0 %v808
    %v810 = vpop.xlane.xlu0 %809
    %v811 = vrcp.pop %v810
    %v812 = vmul.f32 %v810, %v811
    %v813 = vsub.f32 1.0, %v812
    %v814 = vmul.f32 %v811, %v813
    %v815 = vadd.f32 %v811, %v814
    %vm816 = vweird.f32 %v810
    %vm817 = vweird.f32 %v811
    %vm818 = vmor %vm816, %vm817
    %v819 = vsel %vm818, %v811, %v815
    %v820 = vand.u32 2147483647, %v810
    %vm821 = vcmp.eq.f32.partialorder %v820, 8.507059e+37
    %v822 = vand.u32 %v810, 2147483648
    %v823 = vor.u32 1.1754944e-38, %v822
    %v824 = vsel %vm821, %v823, %v819
    %v825 = vmul.f32 %v807, %v824
    %v826 = vadd.f32 %v747, %v825
    %827 = vrot.lane.b32.xlu0 %v200, 40
    %v828 = vpop.permute.xlu0 %827
    %v831 = vsel %vm206, %v825, 0
    %833 = vmatpush.msra.mxu0 0.0
    %834 = vmatpush.msra.mxu0 0.0
    %835 = vmatpush.msra.mxu0 0.0
    %836 = vmatpush.msra.mxu0 0.0
    %837 = vmatpush.msra.mxu0 0.0
    %838 = vmatpush.msra.mxu0 0.0
    %839 = vmatpush.msra.mxu0 0.0
    %840 = vmatpush.msra.mxu0 0.0
    %841 = vmatpush.msra.mxu0 0.0
    %842 = vmatpush.msra.mxu0 0.0
    %843 = vmatpush.msra.mxu0 0.0
    %844 = vmatpush.msra.mxu0 0.0
    %845 = vmatpush.msra.mxu0 0.0
    %846 = vmatpush.msra.mxu0 0.0
    %847 = vmatpush.msra.mxu0 0.0
    %848 = vmatpush.msra.mxu0 %v828
    %849 = vmatmul.f32.gmra.mxu0 %v831
    %v850 = vpop.f32.mrf.mxu0
    %v851 = vadd.f32 0.0, %v850
    %852 = vdwg.mxu0
    %854 = vrot.lane.b32.xlu0 %v693, 8
    %v855 = vpop.permute.xlu0 %854
    %858 = vrot.lane.b32.xlu0 %v772, 16
    %v859 = vpop.permute.xlu0 %858
    %862 = vrot.lane.b32.xlu0 %v851, 24
    %v863 = vpop.permute.xlu0 %862
    %v865 = vsel %vm206, %v614, %v855
    %v866 = vsel %vm532, %v865, %v859
    %v867 = vsel %vm534, %v866, %v863
    %v868 = vmul.f32 %v826, 0.25
    %873 = vrot.lane.b32.xlu0 %v167, 32
    %v874 = vpop.permute.xlu0 %873
    %875 = vrot.lane.b32.xlu0 %v168, 32
    %v876 = vpop.permute.xlu0 %875
    %877 = vrot.lane.b32.xlu0 %v169, 32
    %v878 = vpop.permute.xlu0 %877
    %879 = vrot.lane.b32.xlu0 %v170, 32
    %v880 = vpop.permute.xlu0 %879
    %886 = vrot.lane.b32.xlu0 %v172, 32
    %v887 = vpop.permute.xlu0 %886
    %v890 = vsel %vm106, %v535, 0
    %v893 = vsel %vm106, %v867, 0
    %895 = vmatpush.msra.mxu0 0.0
    %896 = vmatpush.msra.mxu0 0.0
    %897 = vmatpush.msra.mxu0 0.0
    %898 = vmatpush.msra.mxu0 0.0
    %899 = vmatpush.msra.mxu0 0.0
    %900 = vmatpush.msra.mxu0 0.0
    %901 = vmatpush.msra.mxu0 0.0
    %902 = vmatpush.msra.mxu0 0.0
    %903 = vmatpush.msra.mxu0 0.0
    %904 = vmatpush.msra.mxu0 0.0
    %905 = vmatpush.msra.mxu0 0.0
    %906 = vmatpush.msra.mxu0 0.0
    %907 = vmatpush.msra.mxu0 %v880
    %908 = vmatpush.msra.mxu0 %v878
    %909 = vmatpush.msra.mxu0 %v876
    %910 = vmatpush.msra.mxu0 %v874
    %911 = vmatmul.f32.gmra.mxu0 %v890
    %v912 = vpop.f32.mrf.mxu0
    %v913 = vadd.f32 %v887, %v912
    %914 = vmatmul.f32.gmra.mxu0 %v893
    %v915 = vpop.f32.mrf.mxu0
    %v916 = vadd.f32 %v887, %v915
    %917 = vdwg.mxu0
    %v918 = vadd.f32 %v71, %v913
    %v919 = vadd.f32 %v72, %v916
    %v920 = vsel %vm106, %v918, 0.0
    %921 = vadd.xlane.f32.xlu0 %v920
    %v922 = vpop.xlane.xlu0 %921
    %v923 = vsel %vm106, %v919, 0.0
    %924 = vadd.xlane.f32.xlu0 %v923
    %v925 = vpop.xlane.xlu0 %924
    %v926 = vmul.f32 %v922, %v119
    %v927 = vmul.f32 %v925, %v119
    %v928 = vsub.f32 %v918, %v926
    %v929 = vsub.f32 %v919, %v927
    %v930 = vmul.f32 %v928, %v928
    %v931 = vmul.f32 %v929, %v929
    %v932 = vsel %vm106, %v930, 0.0
    %933 = vadd.xlane.f32.xlu0 %v932
    %v934 = vpop.xlane.xlu0 %933
    %v935 = vsel %vm106, %v931, 0.0
    %936 = vadd.xlane.f32.xlu0 %v935
    %v937 = vpop.xlane.xlu0 %936
    %v938 = vmul.f32 %v934, %v119
    %v939 = vmul.f32 %v937, %v119
    %v940 = vadd.f32 %v938, 1e-05
    %v941 = vadd.f32 %v939, 1e-05
    %v942 = vrsqrt.pop %v940
    %v943 = vmul.f32 %v942, %v940
    %v944 = vmul.f32 %v943, %v942
    %v945 = vmul.f32 0.5, %v944
    %v946 = vsub.f32 1.5, %v945
    %v947 = vmul.f32 %v942, %v946
    %vm948 = vweird.f32 %v940
    %vm949 = vweird.f32 %v942
    %vm950 = vmor %vm948, %vm949
    %v951 = vsel %vm950, %v942, %v947
    %v952 = vrsqrt.pop %v941
    %v953 = vmul.f32 %v952, %v941
    %v954 = vmul.f32 %v953, %v952
    %v955 = vmul.f32 0.5, %v954
    %v956 = vsub.f32 1.5, %v955
    %v957 = vmul.f32 %v952, %v956
    %vm958 = vweird.f32 %v941
    %vm959 = vweird.f32 %v952
    %vm960 = vmor %vm958, %vm959
    %v961 = vsel %vm960, %v952, %v957
    %v962 = vmul.f32 %v928, %v951
    %v963 = vmul.f32 %v929, %v961
    %964 = vrot.lane.b32.xlu0 %v158, 64
    %v965 = vpop.permute.xlu0 %964
    %v967 = vmul.f32 %v962, %v965
    %v968 = vmul.f32 %v963, %v965
    %969 = vrot.lane.b32.xlu0 %v158, 32
    %v970 = vpop.permute.xlu0 %969
    %v972 = vadd.f32 %v967, %v970
    %v973 = vadd.f32 %v968, %v970
    %s974 = scalar_lea.vmem [#allocation2], 32
    %v975 = vld [vmem:[%s974] sm:$0xff]
    %v976 = vld [vmem:[%s974 + $0x8] sm:$0xff]
    %v977 = vld [vmem:[%s974 + $0x10] sm:$0xff]
    %v978 = vld [vmem:[%s974 + $0x18] sm:$0xff]
    %v979 = vld [vmem:[%s2 + $0x3] sm:$0x1]
    %v980 = vperm.slane %v979, 0
    %v982 = vsel %vm106, %v972, 0
    %v985 = vsel %vm106, %v973, 0
    %987 = vmatpush.msra.mxu0 0.0
    %988 = vmatpush.msra.mxu0 0.0
    %989 = vmatpush.msra.mxu0 0.0
    %990 = vmatpush.msra.mxu0 0.0
    %991 = vmatpush.msra.mxu0 0.0
    %992 = vmatpush.msra.mxu0 0.0
    %993 = vmatpush.msra.mxu0 0.0
    %994 = vmatpush.msra.mxu0 0.0
    %995 = vmatpush.msra.mxu0 0.0
    %996 = vmatpush.msra.mxu0 0.0
    %997 = vmatpush.msra.mxu0 0.0
    %998 = vmatpush.msra.mxu0 0.0
    %999 = vmatpush.msra.mxu0 %v978
    %1000 = vmatpush.msra.mxu0 %v977
    %1001 = vmatpush.msra.mxu0 %v976
    %1002 = vmatpush.msra.mxu0 %v975
    %1003 = vmatmul.f32.gmra.mxu0 %v982
    %v1004 = vpop.f32.mrf.mxu0
    %v1005 = vadd.f32 %v980, %v1004
    %1006 = vmatmul.f32.gmra.mxu0 %v985
    %v1007 = vpop.f32.mrf.mxu0
    %v1008 = vadd.f32 %v980, %v1007
    %1009 = vdwg.mxu0
    %v1011 = vsel %vm106, %v103, 0
    %v1014 = vsel %vm106, %v104, 0
    %1016 = vmatpush.msra.mxu0 0.0
    %1017 = vmatpush.msra.mxu0 0.0
    %1018 = vmatpush.msra.mxu0 0.0
    %1019 = vmatpush.msra.mxu0 0.0
    %1020 = vmatpush.msra.mxu0 0.0
    %1021 = vmatpush.msra.mxu0 0.0
    %1022 = vmatpush.msra.mxu0 0.0
    %1023 = vmatpush.msra.mxu0 0.0
    %1024 = vmatpush.msra.mxu0 0.0
    %1025 = vmatpush.msra.mxu0 0.0
    %1026 = vmatpush.msra.mxu0 0.0
    %1027 = vmatpush.msra.mxu0 0.0
    %1028 = vmatpush.msra.mxu0 %v978
    %1029 = vmatpush.msra.mxu0 %v977
    %1030 = vmatpush.msra.mxu0 %v976
    %1031 = vmatpush.msra.mxu0 %v975
    %1032 = vmatmul.f32.gmra.mxu0 %v1011
    %v1033 = vpop.f32.mrf.mxu0
    %v1034 = vadd.f32 %v980, %v1033
    %1035 = vmatmul.f32.gmra.mxu0 %v1014
    %v1036 = vpop.f32.mrf.mxu0
    %v1037 = vadd.f32 %v980, %v1036
    %1038 = vdwg.mxu0
    %v1039 = vmul.f32 %v1005, 0.35355338
    %1041 = vrot.lane.b32.xlu0 %v1034, 96
    %v1042 = vpop.permute.xlu0 %1041
    %v1044 = vsel %vm206, %v1039, 0
    %v1046 = vsel %vm206, %v1042, 0
    %1048 = vmatpush.xpose.msra.mxu0 0.0
    %1049 = vmatpush.xpose.msra.mxu0 0.0
    %1050 = vmatpush.xpose.msra.mxu0 0.0
    %1051 = vmatpush.xpose.msra.mxu0 0.0
    %1052 = vmatpush.xpose.msra.mxu0 0.0
    %1053 = vmatpush.xpose.msra.mxu0 0.0
    %1054 = vmatpush.xpose.msra.mxu0 0.0
    %1055 = vmatpush.xpose.msra.mxu0 0.0
    %1056 = vmatpush.xpose.msra.mxu0 0.0
    %1057 = vmatpush.xpose.msra.mxu0 0.0
    %1058 = vmatpush.xpose.msra.mxu0 0.0
    %1059 = vmatpush.xpose.msra.mxu0 0.0
    %1060 = vmatpush.xpose.msra.mxu0 0.0
    %1061 = vmatpush.xpose.msra.mxu0 0.0
    %1062 = vmatpush.xpose.msra.mxu0 0.0
    %1063 = vmatpush.xpose.msra.mxu0 %v1046
    %1064 = vmatmul.f32.gmra.mxu0 %v1044
    %v1065 = vpop.f32.mrf.mxu0
    %v1066 = vadd.f32 0.0, %v1065
    %1067 = vdwg.mxu0
    %v1068 = vsel %vm206, %v1066, -inf
    %1069 = vmax.xlane.f32.xlu0 %v1068
    %v1070 = vpop.xlane.xlu0 %1069
    %v1071 = vsub.f32 %v1066, %v1070
    %v1072 = vmul.f32 %v1071, 1.442695
    %v1073 = vpow.pop %v1072
    %v1074 = vsel %vm206, %v1073, 0.0
    %1075 = vadd.xlane.f32.xlu0 %v1074
    %v1076 = vpop.xlane.xlu0 %1075
    %v1077 = vrcp.pop %v1076
    %v1078 = vmul.f32 %v1076, %v1077
    %v1079 = vsub.f32 1.0, %v1078
    %v1080 = vmul.f32 %v1077, %v1079
    %v1081 = vadd.f32 %v1077, %v1080
    %vm1082 = vweird.f32 %v1076
    %vm1083 = vweird.f32 %v1077
    %vm1084 = vmor %vm1082, %vm1083
    %v1085 = vsel %vm1084, %v1077, %v1081
    %v1086 = vand.u32 2147483647, %v1076
    %vm1087 = vcmp.eq.f32.partialorder %v1086, 8.507059e+37
    %v1088 = vand.u32 %v1076, 2147483648
    %v1089 = vor.u32 1.1754944e-38, %v1088
    %v1090 = vsel %vm1087, %v1089, %v1085
    %v1091 = vmul.f32 %v1073, %v1090
    %1092 = vrot.lane.b32.xlu0 %v1034, 64
    %v1093 = vpop.permute.xlu0 %1092
    %v1096 = vsel %vm206, %v1091, 0
    %1098 = vmatpush.msra.mxu0 0.0
    %1099 = vmatpush.msra.mxu0 0.0
    %1100 = vmatpush.msra.mxu0 0.0
    %1101 = vmatpush.msra.mxu0 0.0
    %1102 = vmatpush.msra.mxu0 0.0
    %1103 = vmatpush.msra.mxu0 0.0
    %1104 = vmatpush.msra.mxu0 0.0
    %1105 = vmatpush.msra.mxu0 0.0
    %1106 = vmatpush.msra.mxu0 0.0
    %1107 = vmatpush.msra.mxu0 0.0
    %1108 = vmatpush.msra.mxu0 0.0
    %1109 = vmatpush.msra.mxu0 0.0
    %1110 = vmatpush.msra.mxu0 0.0
    %1111 = vmatpush.msra.mxu0 0.0
    %1112 = vmatpush.msra.mxu0 0.0
    %1113 = vmatpush.msra.mxu0 %v1093
    %1114 = vmatmul.f32.gmra.mxu0 %v1096
    %v1115 = vpop.f32.mrf.mxu0
    %v1116 = vadd.f32 0.0, %v1115
    %1117 = vdwg.mxu0
    %1118 = vrot.lane.b32.xlu0 %v1039, 120
    %v1119 = vpop.permute.xlu0 %1118
    %1120 = vrot.lane.b32.xlu0 %v1034, 88
    %v1121 = vpop.permute.xlu0 %1120
    %v1122 = vsel %vm206, %v1119, 0
    %v1124 = vsel %vm206, %v1121, 0
    %1126 = vmatpush.xpose.msra.mxu0 0.0
    %1127 = vmatpush.xpose.msra.mxu0 0.0
    %1128 = vmatpush.xpose.msra.mxu0 0.0
    %1129 = vmatpush.xpose.msra.mxu0 0.0
    %1130 = vmatpush.xpose.msra.mxu0 0.0
    %1131 = vmatpush.xpose.msra.mxu0 0.0
    %1132 = vmatpush.xpose.msra.mxu0 0.0
    %1133 = vmatpush.xpose.msra.mxu0 0.0
    %1134 = vmatpush.xpose.msra.mxu0 0.0
    %1135 = vmatpush.xpose.msra.mxu0 0.0
    %1136 = vmatpush.xpose.msra.mxu0 0.0
    %1137 = vmatpush.xpose.msra.mxu0 0.0
    %1138 = vmatpush.xpose.msra.mxu0 0.0
    %1139 = vmatpush.xpose.msra.mxu0 0.0
    %1140 = vmatpush.xpose.msra.mxu0 0.0
    %1141 = vmatpush.xpose.msra.mxu0 %v1124
    %1142 = vmatmul.f32.gmra.mxu0 %v1122
    %v1143 = vpop.f32.mrf.mxu0
    %v1144 = vadd.f32 0.0, %v1143
    %1145 = vdwg.mxu0
    %v1146 = vsel %vm206, %v1144, -inf
    %1147 = vmax.xlane.f32.xlu0 %v1146
    %v1148 = vpop.xlane.xlu0 %1147
    %v1149 = vsub.f32 %v1144, %v1148
    %v1150 = vmul.f32 %v1149, 1.442695
    %v1151 = vpow.pop %v1150
    %v1152 = vsel %vm206, %v1151, 0.0
    %1153 = vadd.xlane.f32.xlu0 %v1152
    %v1154 = vpop.xlane.xlu0 %1153
    %v1155 = vrcp.pop %v1154
    %v1156 = vmul.f32 %v1154, %v1155
    %v1157 = vsub.f32 1.0, %v1156
    %v1158 = vmul.f32 %v1155, %v1157
    %v1159 = vadd.f32 %v1155, %v1158
    %vm1160 = vweird.f32 %v1154
    %vm1161 = vweird.f32 %v1155
    %vm1162 = vmor %vm1160, %vm1161
    %v1163 = vsel %vm1162, %v1155, %v1159
    %v1164 = vand.u32 2147483647, %v1154
    %vm1165 = vcmp.eq.f32.partialorder %v1164, 8.507059e+37
    %v1166 = vand.u32 %v1154, 2147483648
    %v1167 = vor.u32 1.1754944e-38, %v1166
    %v1168 = vsel %vm1165, %v1167, %v1163
    %v1169 = vmul.f32 %v1151, %v1168
    %v1170 = vadd.f32 %v1091, %v1169
    %1171 = vrot.lane.b32.xlu0 %v1034, 56
    %v1172 = vpop.permute.xlu0 %1171
    %v1175 = vsel %vm206, %v1169, 0
    %1177 = vmatpush.msra.mxu0 0.0
    %1178 = vmatpush.msra.mxu0 0.0
    %1179 = vmatpush.msra.mxu0 0.0
    %1180 = vmatpush.msra.mxu0 0.0
    %1181 = vmatpush.msra.mxu0 0.0
    %1182 = vmatpush.msra.mxu0 0.0
    %1183 = vmatpush.msra.mxu0 0.0
    %1184 = vmatpush.msra.mxu0 0.0
    %1185 = vmatpush.msra.mxu0 0.0
    %1186 = vmatpush.msra.mxu0 0.0
    %1187 = vmatpush.msra.mxu0 0.0
    %1188 = vmatpush.msra.mxu0 0.0
    %1189 = vmatpush.msra.mxu0 0.0
    %1190 = vmatpush.msra.mxu0 0.0
    %1191 = vmatpush.msra.mxu0 0.0
    %1192 = vmatpush.msra.mxu0 %v1172
    %1193 = vmatmul.f32.gmra.mxu0 %v1175
    %v1194 = vpop.f32.mrf.mxu0
    %v1195 = vadd.f32 0.0, %v1194
    %1196 = vdwg.mxu0
    %1197 = vrot.lane.b32.xlu0 %v1039, 112
    %v1198 = vpop.permute.xlu0 %1197
    %1199 = vrot.lane.b32.xlu0 %v1034, 80
    %v1200 = vpop.permute.xlu0 %1199
    %v1201 = vsel %vm206, %v1198, 0
    %v1203 = vsel %vm206, %v1200, 0
    %1205 = vmatpush.xpose.msra.mxu0 0.0
    %1206 = vmatpush.xpose.msra.mxu0 0.0
    %1207 = vmatpush.xpose.msra.mxu0 0.0
    %1208 = vmatpush.xpose.msra.mxu0 0.0
    %1209 = vmatpush.xpose.msra.mxu0 0.0
    %1210 = vmatpush.xpose.msra.mxu0 0.0
    %1211 = vmatpush.xpose.msra.mxu0 0.0
    %1212 = vmatpush.xpose.msra.mxu0 0.0
    %1213 = vmatpush.xpose.msra.mxu0 0.0
    %1214 = vmatpush.xpose.msra.mxu0 0.0
    %1215 = vmatpush.xpose.msra.mxu0 0.0
    %1216 = vmatpush.xpose.msra.mxu0 0.0
    %1217 = vmatpush.xpose.msra.mxu0 0.0
    %1218 = vmatpush.xpose.msra.mxu0 0.0
    %1219 = vmatpush.xpose.msra.mxu0 0.0
    %1220 = vmatpush.xpose.msra.mxu0 %v1203
    %1221 = vmatmul.f32.gmra.mxu0 %v1201
    %v1222 = vpop.f32.mrf.mxu0
    %v1223 = vadd.f32 0.0, %v1222
    %1224 = vdwg.mxu0
    %v1225 = vsel %vm206, %v1223, -inf
    %1226 = vmax.xlane.f32.xlu0 %v1225
    %v1227 = vpop.xlane.xlu0 %1226
    %v1228 = vsub.f32 %v1223, %v1227
    %v1229 = vmul.f32 %v1228, 1.442695
    %v1230 = vpow.pop %v1229
    %v1231 = vsel %vm206, %v1230, 0.0
    %1232 = vadd.xlane.f32.xlu0 %v1231
    %v1233 = vpop.xlane.xlu0 %1232
    %v1234 = vrcp.pop %v1233
    %v1235 = vmul.f32 %v1233, %v1234
    %v1236 = vsub.f32 1.0, %v1235
    %v1237 = vmul.f32 %v1234, %v1236
    %v1238 = vadd.f32 %v1234, %v1237
    %vm1239 = vweird.f32 %v1233
    %vm1240 = vweird.f32 %v1234
    %vm1241 = vmor %vm1239, %vm1240
    %v1242 = vsel %vm1241, %v1234, %v1238
    %v1243 = vand.u32 2147483647, %v1233
    %vm1244 = vcmp.eq.f32.partialorder %v1243, 8.507059e+37
    %v1245 = vand.u32 %v1233, 2147483648
    %v1246 = vor.u32 1.1754944e-38, %v1245
    %v1247 = vsel %vm1244, %v1246, %v1242
    %v1248 = vmul.f32 %v1230, %v1247
    %v1249 = vadd.f32 %v1170, %v1248
    %1250 = vrot.lane.b32.xlu0 %v1034, 48
    %v1251 = vpop.permute.xlu0 %1250
    %v1254 = vsel %vm206, %v1248, 0
    %1256 = vmatpush.msra.mxu0 0.0
    %1257 = vmatpush.msra.mxu0 0.0
    %1258 = vmatpush.msra.mxu0 0.0
    %1259 = vmatpush.msra.mxu0 0.0
    %1260 = vmatpush.msra.mxu0 0.0
    %1261 = vmatpush.msra.mxu0 0.0
    %1262 = vmatpush.msra.mxu0 0.0
    %1263 = vmatpush.msra.mxu0 0.0
    %1264 = vmatpush.msra.mxu0 0.0
    %1265 = vmatpush.msra.mxu0 0.0
    %1266 = vmatpush.msra.mxu0 0.0
    %1267 = vmatpush.msra.mxu0 0.0
    %1268 = vmatpush.msra.mxu0 0.0
    %1269 = vmatpush.msra.mxu0 0.0
    %1270 = vmatpush.msra.mxu0 0.0
    %1271 = vmatpush.msra.mxu0 %v1251
    %1272 = vmatmul.f32.gmra.mxu0 %v1254
    %v1273 = vpop.f32.mrf.mxu0
    %v1274 = vadd.f32 0.0, %v1273
    %1275 = vdwg.mxu0
    %1276 = vrot.lane.b32.xlu0 %v1039, 104
    %v1277 = vpop.permute.xlu0 %1276
    %1278 = vrot.lane.b32.xlu0 %v1034, 72
    %v1279 = vpop.permute.xlu0 %1278
    %v1280 = vsel %vm206, %v1277, 0
    %v1282 = vsel %vm206, %v1279, 0
    %1284 = vmatpush.xpose.msra.mxu0 0.0
    %1285 = vmatpush.xpose.msra.mxu0 0.0
    %1286 = vmatpush.xpose.msra.mxu0 0.0
    %1287 = vmatpush.xpose.msra.mxu0 0.0
    %1288 = vmatpush.xpose.msra.mxu0 0.0
    %1289 = vmatpush.xpose.msra.mxu0 0.0
    %1290 = vmatpush.xpose.msra.mxu0 0.0
    %1291 = vmatpush.xpose.msra.mxu0 0.0
    %1292 = vmatpush.xpose.msra.mxu0 0.0
    %1293 = vmatpush.xpose.msra.mxu0 0.0
    %1294 = vmatpush.xpose.msra.mxu0 0.0
    %1295 = vmatpush.xpose.msra.mxu0 0.0
    %1296 = vmatpush.xpose.msra.mxu0 0.0
    %1297 = vmatpush.xpose.msra.mxu0 0.0
    %1298 = vmatpush.xpose.msra.mxu0 0.0
    %1299 = vmatpush.xpose.msra.mxu0 %v1282
    %1300 = vmatmul.f32.gmra.mxu0 %v1280
    %v1301 = vpop.f32.mrf.mxu0
    %v1302 = vadd.f32 0.0, %v1301
    %1303 = vdwg.mxu0
    %v1304 = vsel %vm206, %v1302, -inf
    %1305 = vmax.xlane.f32.xlu0 %v1304
    %v1306 = vpop.xlane.xlu0 %1305
    %v1307 = vsub.f32 %v1302, %v1306
    %v1308 = vmul.f32 %v1307, 1.442695
    %v1309 = vpow.pop %v1308
    %v1310 = vsel %vm206, %v1309, 0.0
    %1311 = vadd.xlane.f32.xlu0 %v1310
    %v1312 = vpop.xlane.xlu0 %1311
    %v1313 = vrcp.pop %v1312
    %v1314 = vmul.f32 %v1312, %v1313
    %v1315 = vsub.f32 1.0, %v1314
    %v1316 = vmul.f32 %v1313, %v1315
    %v1317 = vadd.f32 %v1313, %v1316
    %vm1318 = vweird.f32 %v1312
    %vm1319 = vweird.f32 %v1313
    %vm1320 = vmor %vm1318, %vm1319
    %v1321 = vsel %vm1320, %v1313, %v1317
    %v1322 = vand.u32 2147483647, %v1312
    %vm1323 = vcmp.eq.f32.partialorder %v1322, 8.507059e+37
    %v1324 = vand.u32 %v1312, 2147483648
    %v1325 = vor.u32 1.1754944e-38, %v1324
    %v1326 = vsel %vm1323, %v1325, %v1321
    %v1327 = vmul.f32 %v1309, %v1326
    %v1328 = vadd.f32 %v1249, %v1327
    %1329 = vrot.lane.b32.xlu0 %v1034, 40
    %v1330 = vpop.permute.xlu0 %1329
    %v1333 = vsel %vm206, %v1327, 0
    %1335 = vmatpush.msra.mxu0 0.0
    %1336 = vmatpush.msra.mxu0 0.0
    %1337 = vmatpush.msra.mxu0 0.0
    %1338 = vmatpush.msra.mxu0 0.0
    %1339 = vmatpush.msra.mxu0 0.0
    %1340 = vmatpush.msra.mxu0 0.0
    %1341 = vmatpush.msra.mxu0 0.0
    %1342 = vmatpush.msra.mxu0 0.0
    %1343 = vmatpush.msra.mxu0 0.0
    %1344 = vmatpush.msra.mxu0 0.0
    %1345 = vmatpush.msra.mxu0 0.0
    %1346 = vmatpush.msra.mxu0 0.0
    %1347 = vmatpush.msra.mxu0 0.0
    %1348 = vmatpush.msra.mxu0 0.0
    %1349 = vmatpush.msra.mxu0 0.0
    %1350 = vmatpush.msra.mxu0 %v1330
    %1351 = vmatmul.f32.gmra.mxu0 %v1333
    %v1352 = vpop.f32.mrf.mxu0
    %v1353 = vadd.f32 0.0, %v1352
    %1354 = vdwg.mxu0
    %1356 = vrot.lane.b32.xlu0 %v1195, 8
    %v1357 = vpop.permute.xlu0 %1356
    %1360 = vrot.lane.b32.xlu0 %v1274, 16
    %v1361 = vpop.permute.xlu0 %1360
    %1364 = vrot.lane.b32.xlu0 %v1353, 24
    %v1365 = vpop.permute.xlu0 %1364
    %v1367 = vsel %vm206, %v1116, %v1357
    %v1368 = vsel %vm532, %v1367, %v1361
    %v1369 = vsel %vm534, %v1368, %v1365
    %v1370 = vmul.f32 %v1328, 0.25
    %v1371 = vmul.f32 %v1008, 0.35355338
    %1373 = vrot.lane.b32.xlu0 %v1037, 96
    %v1374 = vpop.permute.xlu0 %1373
    %v1376 = vsel %vm206, %v1371, 0
    %v1378 = vsel %vm206, %v1374, 0
    %1380 = vmatpush.xpose.msra.mxu0 0.0
    %1381 = vmatpush.xpose.msra.mxu0 0.0
    %1382 = vmatpush.xpose.msra.mxu0 0.0
    %1383 = vmatpush.xpose.msra.mxu0 0.0
    %1384 = vmatpush.xpose.msra.mxu0 0.0
    %1385 = vmatpush.xpose.msra.mxu0 0.0
    %1386 = vmatpush.xpose.msra.mxu0 0.0
    %1387 = vmatpush.xpose.msra.mxu0 0.0
    %1388 = vmatpush.xpose.msra.mxu0 0.0
    %1389 = vmatpush.xpose.msra.mxu0 0.0
    %1390 = vmatpush.xpose.msra.mxu0 0.0
    %1391 = vmatpush.xpose.msra.mxu0 0.0
    %1392 = vmatpush.xpose.msra.mxu0 0.0
    %1393 = vmatpush.xpose.msra.mxu0 0.0
    %1394 = vmatpush.xpose.msra.mxu0 0.0
    %1395 = vmatpush.xpose.msra.mxu0 %v1378
    %1396 = vmatmul.f32.gmra.mxu0 %v1376
    %v1397 = vpop.f32.mrf.mxu0
    %v1398 = vadd.f32 0.0, %v1397
    %1399 = vdwg.mxu0
    %v1400 = vsel %vm206, %v1398, -inf
    %1401 = vmax.xlane.f32.xlu0 %v1400
    %v1402 = vpop.xlane.xlu0 %1401
    %v1403 = vsub.f32 %v1398, %v1402
    %v1404 = vmul.f32 %v1403, 1.442695
    %v1405 = vpow.pop %v1404
    %v1406 = vsel %vm206, %v1405, 0.0
    %1407 = vadd.xlane.f32.xlu0 %v1406
    %v1408 = vpop.xlane.xlu0 %1407
    %v1409 = vrcp.pop %v1408
    %v1410 = vmul.f32 %v1408, %v1409
    %v1411 = vsub.f32 1.0, %v1410
    %v1412 = vmul.f32 %v1409, %v1411
    %v1413 = vadd.f32 %v1409, %v1412
    %vm1414 = vweird.f32 %v1408
    %vm1415 = vweird.f32 %v1409
    %vm1416 = vmor %vm1414, %vm1415
    %v1417 = vsel %vm1416, %v1409, %v1413
    %v1418 = vand.u32 2147483647, %v1408
    %vm1419 = vcmp.eq.f32.partialorder %v1418, 8.507059e+37
    %v1420 = vand.u32 %v1408, 2147483648
    %v1421 = vor.u32 1.1754944e-38, %v1420
    %v1422 = vsel %vm1419, %v1421, %v1417
    %v1423 = vmul.f32 %v1405, %v1422
    %1424 = vrot.lane.b32.xlu0 %v1037, 64
    %v1425 = vpop.permute.xlu0 %1424
    %v1428 = vsel %vm206, %v1423, 0
    %1430 = vmatpush.msra.mxu0 0.0
    %1431 = vmatpush.msra.mxu0 0.0
    %1432 = vmatpush.msra.mxu0 0.0
    %1433 = vmatpush.msra.mxu0 0.0
    %1434 = vmatpush.msra.mxu0 0.0
    %1435 = vmatpush.msra.mxu0 0.0
    %1436 = vmatpush.msra.mxu0 0.0
    %1437 = vmatpush.msra.mxu0 0.0
    %1438 = vmatpush.msra.mxu0 0.0
    %1439 = vmatpush.msra.mxu0 0.0
    %1440 = vmatpush.msra.mxu0 0.0
    %1441 = vmatpush.msra.mxu0 0.0
    %1442 = vmatpush.msra.mxu0 0.0
    %1443 = vmatpush.msra.mxu0 0.0
    %1444 = vmatpush.msra.mxu0 0.0
    %1445 = vmatpush.msra.mxu0 %v1425
    %1446 = vmatmul.f32.gmra.mxu0 %v1428
    %v1447 = vpop.f32.mrf.mxu0
    %v1448 = vadd.f32 0.0, %v1447
    %1449 = vdwg.mxu0
    %1450 = vrot.lane.b32.xlu0 %v1371, 120
    %v1451 = vpop.permute.xlu0 %1450
    %1452 = vrot.lane.b32.xlu0 %v1037, 88
    %v1453 = vpop.permute.xlu0 %1452
    %v1454 = vsel %vm206, %v1451, 0
    %v1456 = vsel %vm206, %v1453, 0
    %1458 = vmatpush.xpose.msra.mxu0 0.0
    %1459 = vmatpush.xpose.msra.mxu0 0.0
    %1460 = vmatpush.xpose.msra.mxu0 0.0
    %1461 = vmatpush.xpose.msra.mxu0 0.0
    %1462 = vmatpush.xpose.msra.mxu0 0.0
    %1463 = vmatpush.xpose.msra.mxu0 0.0
    %1464 = vmatpush.xpose.msra.mxu0 0.0
    %1465 = vmatpush.xpose.msra.mxu0 0.0
    %1466 = vmatpush.xpose.msra.mxu0 0.0
    %1467 = vmatpush.xpose.msra.mxu0 0.0
    %1468 = vmatpush.xpose.msra.mxu0 0.0
    %1469 = vmatpush.xpose.msra.mxu0 0.0
    %1470 = vmatpush.xpose.msra.mxu0 0.0
    %1471 = vmatpush.xpose.msra.mxu0 0.0
    %1472 = vmatpush.xpose.msra.mxu0 0.0
    %1473 = vmatpush.xpose.msra.mxu0 %v1456
    %1474 = vmatmul.f32.gmra.mxu0 %v1454
    %v1475 = vpop.f32.mrf.mxu0
    %v1476 = vadd.f32 0.0, %v1475
    %1477 = vdwg.mxu0
    %v1478 = vsel %vm206, %v1476, -inf
    %1479 = vmax.xlane.f32.xlu0 %v1478
    %v1480 = vpop.xlane.xlu0 %1479
    %v1481 = vsub.f32 %v1476, %v1480
    %v1482 = vmul.f32 %v1481, 1.442695
    %v1483 = vpow.pop %v1482
    %v1484 = vsel %vm206, %v1483, 0.0
    %1485 = vadd.xlane.f32.xlu0 %v1484
    %v1486 = vpop.xlane.xlu0 %1485
    %v1487 = vrcp.pop %v1486
    %v1488 = vmul.f32 %v1486, %v1487
    %v1489 = vsub.f32 1.0, %v1488
    %v1490 = vmul.f32 %v1487, %v1489
    %v1491 = vadd.f32 %v1487, %v1490
    %vm1492 = vweird.f32 %v1486
    %vm1493 = vweird.f32 %v1487
    %vm1494 = vmor %vm1492, %vm1493
    %v1495 = vsel %vm1494, %v1487, %v1491
    %v1496 = vand.u32 2147483647, %v1486
    %vm1497 = vcmp.eq.f32.partialorder %v1496, 8.507059e+37
    %v1498 = vand.u32 %v1486, 2147483648
    %v1499 = vor.u32 1.1754944e-38, %v1498
    %v1500 = vsel %vm1497, %v1499, %v1495
    %v1501 = vmul.f32 %v1483, %v1500
    %v1502 = vadd.f32 %v1423, %v1501
    %1503 = vrot.lane.b32.xlu0 %v1037, 56
    %v1504 = vpop.permute.xlu0 %1503
    %v1507 = vsel %vm206, %v1501, 0
    %1509 = vmatpush.msra.mxu0 0.0
    %1510 = vmatpush.msra.mxu0 0.0
    %1511 = vmatpush.msra.mxu0 0.0
    %1512 = vmatpush.msra.mxu0 0.0
    %1513 = vmatpush.msra.mxu0 0.0
    %1514 = vmatpush.msra.mxu0 0.0
    %1515 = vmatpush.msra.mxu0 0.0
    %1516 = vmatpush.msra.mxu0 0.0
    %1517 = vmatpush.msra.mxu0 0.0
    %1518 = vmatpush.msra.mxu0 0.0
    %1519 = vmatpush.msra.mxu0 0.0
    %1520 = vmatpush.msra.mxu0 0.0
    %1521 = vmatpush.msra.mxu0 0.0
    %1522 = vmatpush.msra.mxu0 0.0
    %1523 = vmatpush.msra.mxu0 0.0
    %1524 = vmatpush.msra.mxu0 %v1504
    %1525 = vmatmul.f32.gmra.mxu0 %v1507
    %v1526 = vpop.f32.mrf.mxu0
    %v1527 = vadd.f32 0.0, %v1526
    %1528 = vdwg.mxu0
    %1529 = vrot.lane.b32.xlu0 %v1371, 112
    %v1530 = vpop.permute.xlu0 %1529
    %1531 = vrot.lane.b32.xlu0 %v1037, 80
    %v1532 = vpop.permute.xlu0 %1531
    %v1533 = vsel %vm206, %v1530, 0
    %v1535 = vsel %vm206, %v1532, 0
    %1537 = vmatpush.xpose.msra.mxu0 0.0
    %1538 = vmatpush.xpose.msra.mxu0 0.0
    %1539 = vmatpush.xpose.msra.mxu0 0.0
    %1540 = vmatpush.xpose.msra.mxu0 0.0
    %1541 = vmatpush.xpose.msra.mxu0 0.0
    %1542 = vmatpush.xpose.msra.mxu0 0.0
    %1543 = vmatpush.xpose.msra.mxu0 0.0
    %1544 = vmatpush.xpose.msra.mxu0 0.0
    %1545 = vmatpush.xpose.msra.mxu0 0.0
    %1546 = vmatpush.xpose.msra.mxu0 0.0
    %1547 = vmatpush.xpose.msra.mxu0 0.0
    %1548 = vmatpush.xpose.msra.mxu0 0.0
    %1549 = vmatpush.xpose.msra.mxu0 0.0
    %1550 = vmatpush.xpose.msra.mxu0 0.0
    %1551 = vmatpush.xpose.msra.mxu0 0.0
    %1552 = vmatpush.xpose.msra.mxu0 %v1535
    %1553 = vmatmul.f32.gmra.mxu0 %v1533
    %v1554 = vpop.f32.mrf.mxu0
    %v1555 = vadd.f32 0.0, %v1554
    %1556 = vdwg.mxu0
    %v1557 = vsel %vm206, %v1555, -inf
    %1558 = vmax.xlane.f32.xlu0 %v1557
    %v1559 = vpop.xlane.xlu0 %1558
    %v1560 = vsub.f32 %v1555, %v1559
    %v1561 = vmul.f32 %v1560, 1.442695
    %v1562 = vpow.pop %v1561
    %v1563 = vsel %vm206, %v1562, 0.0
    %1564 = vadd.xlane.f32.xlu0 %v1563
    %v1565 = vpop.xlane.xlu0 %1564
    %v1566 = vrcp.pop %v1565
    %v1567 = vmul.f32 %v1565, %v1566
    %v1568 = vsub.f32 1.0, %v1567
    %v1569 = vmul.f32 %v1566, %v1568
    %v1570 = vadd.f32 %v1566, %v1569
    %vm1571 = vweird.f32 %v1565
    %vm1572 = vweird.f32 %v1566
    %vm1573 = vmor %vm1571, %vm1572
    %v1574 = vsel %vm1573, %v1566, %v1570
    %v1575 = vand.u32 2147483647, %v1565
    %vm1576 = vcmp.eq.f32.partialorder %v1575, 8.507059e+37
    %v1577 = vand.u32 %v1565, 2147483648
    %v1578 = vor.u32 1.1754944e-38, %v1577
    %v1579 = vsel %vm1576, %v1578, %v1574
    %v1580 = vmul.f32 %v1562, %v1579
    %v1581 = vadd.f32 %v1502, %v1580
    %1582 = vrot.lane.b32.xlu0 %v1037, 48
    %v1583 = vpop.permute.xlu0 %1582
    %v1586 = vsel %vm206, %v1580, 0
    %1588 = vmatpush.msra.mxu0 0.0
    %1589 = vmatpush.msra.mxu0 0.0
    %1590 = vmatpush.msra.mxu0 0.0
    %1591 = vmatpush.msra.mxu0 0.0
    %1592 = vmatpush.msra.mxu0 0.0
    %1593 = vmatpush.msra.mxu0 0.0
    %1594 = vmatpush.msra.mxu0 0.0
    %1595 = vmatpush.msra.mxu0 0.0
    %1596 = vmatpush.msra.mxu0 0.0
    %1597 = vmatpush.msra.mxu0 0.0
    %1598 = vmatpush.msra.mxu0 0.0
    %1599 = vmatpush.msra.mxu0 0.0
    %1600 = vmatpush.msra.mxu0 0.0
    %1601 = vmatpush.msra.mxu0 0.0
    %1602 = vmatpush.msra.mxu0 0.0
    %1603 = vmatpush.msra.mxu0 %v1583
    %1604 = vmatmul.f32.gmra.mxu0 %v1586
    %v1605 = vpop.f32.mrf.mxu0
    %v1606 = vadd.f32 0.0, %v1605
    %1607 = vdwg.mxu0
    %1608 = vrot.lane.b32.xlu0 %v1371, 104
    %v1609 = vpop.permute.xlu0 %1608
    %1610 = vrot.lane.b32.xlu0 %v1037, 72
    %v1611 = vpop.permute.xlu0 %1610
    %v1612 = vsel %vm206, %v1609, 0
    %v1614 = vsel %vm206, %v1611, 0
    %1616 = vmatpush.xpose.msra.mxu0 0.0
    %1617 = vmatpush.xpose.msra.mxu0 0.0
    %1618 = vmatpush.xpose.msra.mxu0 0.0
    %1619 = vmatpush.xpose.msra.mxu0 0.0
    %1620 = vmatpush.xpose.msra.mxu0 0.0
    %1621 = vmatpush.xpose.msra.mxu0 0.0
    %1622 = vmatpush.xpose.msra.mxu0 0.0
    %1623 = vmatpush.xpose.msra.mxu0 0.0
    %1624 = vmatpush.xpose.msra.mxu0 0.0
    %1625 = vmatpush.xpose.msra.mxu0 0.0
    %1626 = vmatpush.xpose.msra.mxu0 0.0
    %1627 = vmatpush.xpose.msra.mxu0 0.0
    %1628 = vmatpush.xpose.msra.mxu0 0.0
    %1629 = vmatpush.xpose.msra.mxu0 0.0
    %1630 = vmatpush.xpose.msra.mxu0 0.0
    %1631 = vmatpush.xpose.msra.mxu0 %v1614
    %1632 = vmatmul.f32.gmra.mxu0 %v1612
    %v1633 = vpop.f32.mrf.mxu0
    %v1634 = vadd.f32 0.0, %v1633
    %1635 = vdwg.mxu0
    %v1636 = vsel %vm206, %v1634, -inf
    %1637 = vmax.xlane.f32.xlu0 %v1636
    %v1638 = vpop.xlane.xlu0 %1637
    %v1639 = vsub.f32 %v1634, %v1638
    %v1640 = vmul.f32 %v1639, 1.442695
    %v1641 = vpow.pop %v1640
    %v1642 = vsel %vm206, %v1641, 0.0
    %1643 = vadd.xlane.f32.xlu0 %v1642
    %v1644 = vpop.xlane.xlu0 %1643
    %v1645 = vrcp.pop %v1644
    %v1646 = vmul.f32 %v1644, %v1645
    %v1647 = vsub.f32 1.0, %v1646
    %v1648 = vmul.f32 %v1645, %v1647
    %v1649 = vadd.f32 %v1645, %v1648
    %vm1650 = vweird.f32 %v1644
    %vm1651 = vweird.f32 %v1645
    %vm1652 = vmor %vm1650, %vm1651
    %v1653 = vsel %vm1652, %v1645, %v1649
    %v1654 = vand.u32 2147483647, %v1644
    %vm1655 = vcmp.eq.f32.partialorder %v1654, 8.507059e+37
    %v1656 = vand.u32 %v1644, 2147483648
    %v1657 = vor.u32 1.1754944e-38, %v1656
    %v1658 = vsel %vm1655, %v1657, %v1653
    %v1659 = vmul.f32 %v1641, %v1658
    %v1660 = vadd.f32 %v1581, %v1659
    %1661 = vrot.lane.b32.xlu0 %v1037, 40
    %v1662 = vpop.permute.xlu0 %1661
    %v1665 = vsel %vm206, %v1659, 0
    %1667 = vmatpush.msra.mxu0 0.0
    %1668 = vmatpush.msra.mxu0 0.0
    %1669 = vmatpush.msra.mxu0 0.0
    %1670 = vmatpush.msra.mxu0 0.0
    %1671 = vmatpush.msra.mxu0 0.0
    %1672 = vmatpush.msra.mxu0 0.0
    %1673 = vmatpush.msra.mxu0 0.0
    %1674 = vmatpush.msra.mxu0 0.0
    %1675 = vmatpush.msra.mxu0 0.0
    %1676 = vmatpush.msra.mxu0 0.0
    %1677 = vmatpush.msra.mxu0 0.0
    %1678 = vmatpush.msra.mxu0 0.0
    %1679 = vmatpush.msra.mxu0 0.0
    %1680 = vmatpush.msra.mxu0 0.0
    %1681 = vmatpush.msra.mxu0 0.0
    %1682 = vmatpush.msra.mxu0 %v1662
    %1683 = vmatmul.f32.gmra.mxu0 %v1665
    %v1684 = vpop.f32.mrf.mxu0
    %v1685 = vadd.f32 0.0, %v1684
    %1686 = vdwg.mxu0
    %1688 = vrot.lane.b32.xlu0 %v1527, 8
    %v1689 = vpop.permute.xlu0 %1688
    %1692 = vrot.lane.b32.xlu0 %v1606, 16
    %v1693 = vpop.permute.xlu0 %1692
    %1696 = vrot.lane.b32.xlu0 %v1685, 24
    %v1697 = vpop.permute.xlu0 %1696
    %v1699 = vsel %vm206, %v1448, %v1689
    %v1700 = vsel %vm532, %v1699, %v1693
    %v1701 = vsel %vm534, %v1700, %v1697
    %v1702 = vmul.f32 %v1660, 0.25
    %1707 = vrot.lane.b32.xlu0 %v975, 32
    %v1708 = vpop.permute.xlu0 %1707
    %1709 = vrot.lane.b32.xlu0 %v976, 32
    %v1710 = vpop.permute.xlu0 %1709
    %1711 = vrot.lane.b32.xlu0 %v977, 32
    %v1712 = vpop.permute.xlu0 %1711
    %1713 = vrot.lane.b32.xlu0 %v978, 32
    %v1714 = vpop.permute.xlu0 %1713
    %1720 = vrot.lane.b32.xlu0 %v980, 32
    %v1721 = vpop.permute.xlu0 %1720
    %v1724 = vsel %vm106, %v1369, 0
    %v1727 = vsel %vm106, %v1701, 0
    %1729 = vmatpush.msra.mxu0 0.0
    %1730 = vmatpush.msra.mxu0 0.0
    %1731 = vmatpush.msra.mxu0 0.0
    %1732 = vmatpush.msra.mxu0 0.0
    %1733 = vmatpush.msra.mxu0 0.0
    %1734 = vmatpush.msra.mxu0 0.0
    %1735 = vmatpush.msra.mxu0 0.0
    %1736 = vmatpush.msra.mxu0 0.0
    %1737 = vmatpush.msra.mxu0 0.0
    %1738 = vmatpush.msra.mxu0 0.0
    %1739 = vmatpush.msra.mxu0 0.0
    %1740 = vmatpush.msra.mxu0 0.0
    %1741 = vmatpush.msra.mxu0 %v1714
    %1742 = vmatpush.msra.mxu0 %v1712
    %1743 = vmatpush.msra.mxu0 %v1710
    %1744 = vmatpush.msra.mxu0 %v1708
    %1745 = vmatmul.f32.gmra.mxu0 %v1724
    %v1746 = vpop.f32.mrf.mxu0
    %v1747 = vadd.f32 %v1721, %v1746
    %1748 = vmatmul.f32.gmra.mxu0 %v1727
    %v1749 = vpop.f32.mrf.mxu0
    %v1750 = vadd.f32 %v1721, %v1749
    %1751 = vdwg.mxu0
    %v1752 = vadd.f32 %v918, %v1747
    %v1753 = vadd.f32 %v919, %v1750
    %v1754 = vld [vmem:[%s2 + $0x5] sm:$0x1]
    %v1755 = vsel %vm106, %v1752, 0.0
    %1756 = vadd.xlane.f32.xlu0 %v1755
    %v1757 = vpop.xlane.xlu0 %1756
    %v1758 = vsel %vm106, %v1753, 0.0
    %1759 = vadd.xlane.f32.xlu0 %v1758
    %v1760 = vpop.xlane.xlu0 %1759
    %v1761 = vmul.f32 %v1757, %v119
    %v1762 = vmul.f32 %v1760, %v119
    %v1763 = vsub.f32 %v1752, %v1761
    %v1764 = vsub.f32 %v1753, %v1762
    %v1765 = vmul.f32 %v1763, %v1763
    %v1766 = vmul.f32 %v1764, %v1764
    %v1767 = vsel %vm106, %v1765, 0.0
    %1768 = vadd.xlane.f32.xlu0 %v1767
    %v1769 = vpop.xlane.xlu0 %1768
    %v1770 = vsel %vm106, %v1766, 0.0
    %1771 = vadd.xlane.f32.xlu0 %v1770
    %v1772 = vpop.xlane.xlu0 %1771
    %v1773 = vmul.f32 %v1769, %v119
    %v1774 = vmul.f32 %v1772, %v119
    %v1775 = vadd.f32 %v1773, 1e-05
    %v1776 = vadd.f32 %v1774, 1e-05
    %v1777 = vrsqrt.pop %v1775
    %v1778 = vmul.f32 %v1777, %v1775
    %v1779 = vmul.f32 %v1778, %v1777
    %v1780 = vmul.f32 0.5, %v1779
    %v1781 = vsub.f32 1.5, %v1780
    %v1782 = vmul.f32 %v1777, %v1781
    %vm1783 = vweird.f32 %v1775
    %vm1784 = vweird.f32 %v1777
    %vm1785 = vmor %vm1783, %vm1784
    %v1786 = vsel %vm1785, %v1777, %v1782
    %v1787 = vrsqrt.pop %v1776
    %v1788 = vmul.f32 %v1787, %v1776
    %v1789 = vmul.f32 %v1788, %v1787
    %v1790 = vmul.f32 0.5, %v1789
    %v1791 = vsub.f32 1.5, %v1790
    %v1792 = vmul.f32 %v1787, %v1791
    %vm1793 = vweird.f32 %v1776
    %vm1794 = vweird.f32 %v1787
    %vm1795 = vmor %vm1793, %vm1794
    %v1796 = vsel %vm1795, %v1787, %v1792
    %v1797 = vmul.f32 %v1763, %v1786
    %v1798 = vmul.f32 %v1764, %v1796
    %v1799 = vperm.slane %v1754, 0
    %v1800 = vmul.f32 %v1797, %v1799
    %v1801 = vmul.f32 %v1798, %v1799
    %1803 = vrot.lane.b32.xlu0 %v1799, 96
    %v1804 = vpop.permute.xlu0 %1803
    %v1806 = vadd.f32 %v1800, %v1804
    %v1807 = vadd.f32 %v1801, %v1804
    %s1808 = scalar_lea.vmem [#allocation2], 64
    %v1809 = vld [vmem:[%s1808] sm:$0xff]
    %v1810 = vld [vmem:[%s1808 + $0x8] sm:$0xff]
    %v1811 = vld [vmem:[%s1808 + $0x10] sm:$0xff]
    %v1812 = vld [vmem:[%s1808 + $0x18] sm:$0xff]
    %1813 = vrot.lane.b32.xlu0 %v1799, 64
    %v1814 = vpop.permute.xlu0 %1813
    %v1817 = vsel %vm106, %v1806, 0
    %v1820 = vsel %vm106, %v1807, 0
    %1822 = vmatpush.msra.mxu0 0.0
    %1823 = vmatpush.msra.mxu0 0.0
    %1824 = vmatpush.msra.mxu0 0.0
    %1825 = vmatpush.msra.mxu0 0.0
    %1826 = vmatpush.msra.mxu0 0.0
    %1827 = vmatpush.msra.mxu0 0.0
    %1828 = vmatpush.msra.mxu0 0.0
    %1829 = vmatpush.msra.mxu0 0.0
    %1830 = vmatpush.msra.mxu0 0.0
    %1831 = vmatpush.msra.mxu0 0.0
    %1832 = vmatpush.msra.mxu0 0.0
    %1833 = vmatpush.msra.mxu0 0.0
    %1834 = vmatpush.msra.mxu0 %v1812
    %1835 = vmatpush.msra.mxu0 %v1811
    %1836 = vmatpush.msra.mxu0 %v1810
    %1837 = vmatpush.msra.mxu0 %v1809
    %1838 = vmatmul.f32.gmra.mxu0 %v1817
    %v1839 = vpop.f32.mrf.mxu0
    %v1840 = vadd.f32 %v1814, %v1839
    %1841 = vmatmul.f32.gmra.mxu0 %v1820
    %v1842 = vpop.f32.mrf.mxu0
    %v1843 = vadd.f32 %v1814, %v1842
    %1844 = vdwg.mxu0
    %v1845 = vmax.f32 %v1840, 0.0
    %v1846 = vmax.f32 %v1843, 0.0
    %1851 = vrot.lane.b32.xlu0 %v1809, 96
    %v1852 = vpop.permute.xlu0 %1851
    %1853 = vrot.lane.b32.xlu0 %v1810, 96
    %v1854 = vpop.permute.xlu0 %1853
    %1855 = vrot.lane.b32.xlu0 %v1811, 96
    %v1856 = vpop.permute.xlu0 %1855
    %1857 = vrot.lane.b32.xlu0 %v1812, 96
    %v1858 = vpop.permute.xlu0 %1857
    %v1864 = vsel %vm106, %v1845, 0
    %v1867 = vsel %vm106, %v1846, 0
    %1869 = vmatpush.msra.mxu0 0.0
    %1870 = vmatpush.msra.mxu0 0.0
    %1871 = vmatpush.msra.mxu0 0.0
    %1872 = vmatpush.msra.mxu0 0.0
    %1873 = vmatpush.msra.mxu0 0.0
    %1874 = vmatpush.msra.mxu0 0.0
    %1875 = vmatpush.msra.mxu0 0.0
    %1876 = vmatpush.msra.mxu0 0.0
    %1877 = vmatpush.msra.mxu0 0.0
    %1878 = vmatpush.msra.mxu0 0.0
    %1879 = vmatpush.msra.mxu0 0.0
    %1880 = vmatpush.msra.mxu0 0.0
    %1881 = vmatpush.msra.mxu0 %v1858
    %1882 = vmatpush.msra.mxu0 %v1856
    %1883 = vmatpush.msra.mxu0 %v1854
    %1884 = vmatpush.msra.mxu0 %v1852
    %1885 = vmatmul.f32.gmra.mxu0 %v1864
    %v1886 = vpop.f32.mrf.mxu0
    %v1887 = vadd.f32 0.0, %v1886
    %1888 = vmatmul.f32.gmra.mxu0 %v1867
    %v1889 = vpop.f32.mrf.mxu0
    %v1890 = vadd.f32 0.0, %v1889
    %1891 = vdwg.mxu0
    %v1892 = vadd.f32 %v1752, %v1887
    %v1893 = vadd.f32 %v1753, %v1890
    %1894 = vrot.lane.b32.xlu0 %v1799, 32
    %v1895 = vpop.permute.xlu0 %1894
    %v1897 = vadd.f32 %v1892, %v1895
    %v1898 = vadd.f32 %v1893, %v1895
    %v1899 = vld [vmem:[%s2 + $0x8] sm:$0x1]
    %v1900 = vsel %vm106, %v1897, 0.0
    %1901 = vadd.xlane.f32.xlu0 %v1900
    %v1902 = vpop.xlane.xlu0 %1901
    %v1903 = vsel %vm106, %v1898, 0.0
    %1904 = vadd.xlane.f32.xlu0 %v1903
    %v1905 = vpop.xlane.xlu0 %1904
    %v1906 = vmul.f32 %v1902, %v119
    %v1907 = vmul.f32 %v1905, %v119
    %v1908 = vsub.f32 %v1897, %v1906
    %v1909 = vsub.f32 %v1898, %v1907
    %v1910 = vmul.f32 %v1908, %v1908
    %v1911 = vmul.f32 %v1909, %v1909
    %v1912 = vsel %vm106, %v1910, 0.0
    %1913 = vadd.xlane.f32.xlu0 %v1912
    %v1914 = vpop.xlane.xlu0 %1913
    %v1915 = vsel %vm106, %v1911, 0.0
    %1916 = vadd.xlane.f32.xlu0 %v1915
    %v1917 = vpop.xlane.xlu0 %1916
    %v1918 = vmul.f32 %v1914, %v119
    %v1919 = vmul.f32 %v1917, %v119
    %v1920 = vadd.f32 %v1918, 1e-05
    %v1921 = vadd.f32 %v1919, 1e-05
    %v1922 = vrsqrt.pop %v1920
    %v1923 = vmul.f32 %v1922, %v1920
    %v1924 = vmul.f32 %v1923, %v1922
    %v1925 = vmul.f32 0.5, %v1924
    %v1926 = vsub.f32 1.5, %v1925
    %v1927 = vmul.f32 %v1922, %v1926
    %vm1928 = vweird.f32 %v1920
    %vm1929 = vweird.f32 %v1922
    %vm1930 = vmor %vm1928, %vm1929
    %v1931 = vsel %vm1930, %v1922, %v1927
    %v1932 = vrsqrt.pop %v1921
    %v1933 = vmul.f32 %v1932, %v1921
    %v1934 = vmul.f32 %v1933, %v1932
    %v1935 = vmul.f32 0.5, %v1934
    %v1936 = vsub.f32 1.5, %v1935
    %v1937 = vmul.f32 %v1932, %v1936
    %vm1938 = vweird.f32 %v1921
    %vm1939 = vweird.f32 %v1932
    %vm1940 = vmor %vm1938, %vm1939
    %v1941 = vsel %vm1940, %v1932, %v1937
    %v1942 = vmul.f32 %v1908, %v1931
    %v1943 = vmul.f32 %v1909, %v1941
    %v1944 = vperm.slane %v1899, 0
    %v1945 = vmul.f32 %v1942, %v1944
    %v1946 = vmul.f32 %v1943, %v1944
    %1948 = vrot.lane.b32.xlu0 %v1944, 96
    %v1949 = vpop.permute.xlu0 %1948
    %v1951 = vadd.f32 %v1945, %v1949
    %v1952 = vadd.f32 %v1946, %v1949
    %s1953 = scalar_lea.vmem [#allocation2], 96
    %v1954 = vld [vmem:[%s1953] sm:$0xff]
    %v1955 = vld [vmem:[%s1953 + $0x8] sm:$0xff]
    %v1956 = vld [vmem:[%s1953 + $0x10] sm:$0xff]
    %v1957 = vld [vmem:[%s1953 + $0x18] sm:$0xff]
    %v1958 = vld [vmem:[%s2 + $0x6] sm:$0x1]
    %v1959 = vperm.slane %v1958, 0
    %v1961 = vsel %vm106, %v1951, 0
    %v1964 = vsel %vm106, %v1952, 0
    %1966 = vmatpush.msra.mxu0 0.0
    %1967 = vmatpush.msra.mxu0 0.0
    %1968 = vmatpush.msra.mxu0 0.0
    %1969 = vmatpush.msra.mxu0 0.0
    %1970 = vmatpush.msra.mxu0 0.0
    %1971 = vmatpush.msra.mxu0 0.0
    %1972 = vmatpush.msra.mxu0 0.0
    %1973 = vmatpush.msra.mxu0 0.0
    %1974 = vmatpush.msra.mxu0 0.0
    %1975 = vmatpush.msra.mxu0 0.0
    %1976 = vmatpush.msra.mxu0 0.0
    %1977 = vmatpush.msra.mxu0 0.0
    %1978 = vmatpush.msra.mxu0 %v1957
    %1979 = vmatpush.msra.mxu0 %v1956
    %1980 = vmatpush.msra.mxu0 %v1955
    %1981 = vmatpush.msra.mxu0 %v1954
    %1982 = vmatmul.f32.gmra.mxu0 %v1961
    %v1983 = vpop.f32.mrf.mxu0
    %v1984 = vadd.f32 %v1959, %v1983
    %1985 = vmatmul.f32.gmra.mxu0 %v1964
    %v1986 = vpop.f32.mrf.mxu0
    %v1987 = vadd.f32 %v1959, %v1986
    %1988 = vdwg.mxu0
    %v1989 = vmul.f32 %v1984, 0.35355338
    %1991 = vrot.lane.b32.xlu0 %v1984, 96
    %v1992 = vpop.permute.xlu0 %1991
    %v1994 = vsel %vm206, %v1989, 0
    %v1996 = vsel %vm206, %v1992, 0
    %1998 = vmatpush.xpose.msra.mxu0 0.0
    %1999 = vmatpush.xpose.msra.mxu0 0.0
    %2000 = vmatpush.xpose.msra.mxu0 0.0
    %2001 = vmatpush.xpose.msra.mxu0 0.0
    %2002 = vmatpush.xpose.msra.mxu0 0.0
    %2003 = vmatpush.xpose.msra.mxu0 0.0
    %2004 = vmatpush.xpose.msra.mxu0 0.0
    %2005 = vmatpush.xpose.msra.mxu0 0.0
    %2006 = vmatpush.xpose.msra.mxu0 0.0
    %2007 = vmatpush.xpose.msra.mxu0 0.0
    %2008 = vmatpush.xpose.msra.mxu0 0.0
    %2009 = vmatpush.xpose.msra.mxu0 0.0
    %2010 = vmatpush.xpose.msra.mxu0 0.0
    %2011 = vmatpush.xpose.msra.mxu0 0.0
    %2012 = vmatpush.xpose.msra.mxu0 0.0
    %2013 = vmatpush.xpose.msra.mxu0 %v1996
    %2014 = vmatmul.f32.gmra.mxu0 %v1994
    %v2015 = vpop.f32.mrf.mxu0
    %v2016 = vadd.f32 0.0, %v2015
    %2017 = vdwg.mxu0
    %v2018 = vsel %vm206, %v2016, -inf
    %2019 = vmax.xlane.f32.xlu0 %v2018
    %v2020 = vpop.xlane.xlu0 %2019
    %v2021 = vsub.f32 %v2016, %v2020
    %v2022 = vmul.f32 %v2021, 1.442695
    %v2023 = vpow.pop %v2022
    %v2024 = vsel %vm206, %v2023, 0.0
    %2025 = vadd.xlane.f32.xlu0 %v2024
    %v2026 = vpop.xlane.xlu0 %2025
    %v2027 = vrcp.pop %v2026
    %v2028 = vmul.f32 %v2026, %v2027
    %v2029 = vsub.f32 1.0, %v2028
    %v2030 = vmul.f32 %v2027, %v2029
    %v2031 = vadd.f32 %v2027, %v2030
    %vm2032 = vweird.f32 %v2026
    %vm2033 = vweird.f32 %v2027
    %vm2034 = vmor %vm2032, %vm2033
    %v2035 = vsel %vm2034, %v2027, %v2031
    %v2036 = vand.u32 2147483647, %v2026
    %vm2037 = vcmp.eq.f32.partialorder %v2036, 8.507059e+37
    %v2038 = vand.u32 %v2026, 2147483648
    %v2039 = vor.u32 1.1754944e-38, %v2038
    %v2040 = vsel %vm2037, %v2039, %v2035
    %v2041 = vmul.f32 %v2023, %v2040
    %2042 = vrot.lane.b32.xlu0 %v1984, 64
    %v2043 = vpop.permute.xlu0 %2042
    %v2046 = vsel %vm206, %v2041, 0
    %2048 = vmatpush.msra.mxu0 0.0
    %2049 = vmatpush.msra.mxu0 0.0
    %2050 = vmatpush.msra.mxu0 0.0
    %2051 = vmatpush.msra.mxu0 0.0
    %2052 = vmatpush.msra.mxu0 0.0
    %2053 = vmatpush.msra.mxu0 0.0
    %2054 = vmatpush.msra.mxu0 0.0
    %2055 = vmatpush.msra.mxu0 0.0
    %2056 = vmatpush.msra.mxu0 0.0
    %2057 = vmatpush.msra.mxu0 0.0
    %2058 = vmatpush.msra.mxu0 0.0
    %2059 = vmatpush.msra.mxu0 0.0
    %2060 = vmatpush.msra.mxu0 0.0
    %2061 = vmatpush.msra.mxu0 0.0
    %2062 = vmatpush.msra.mxu0 0.0
    %2063 = vmatpush.msra.mxu0 %v2043
    %2064 = vmatmul.f32.gmra.mxu0 %v2046
    %v2065 = vpop.f32.mrf.mxu0
    %v2066 = vadd.f32 0.0, %v2065
    %2067 = vdwg.mxu0
    %2068 = vrot.lane.b32.xlu0 %v1989, 120
    %v2069 = vpop.permute.xlu0 %2068
    %2070 = vrot.lane.b32.xlu0 %v1984, 88
    %v2071 = vpop.permute.xlu0 %2070
    %v2072 = vsel %vm206, %v2069, 0
    %v2074 = vsel %vm206, %v2071, 0
    %2076 = vmatpush.xpose.msra.mxu0 0.0
    %2077 = vmatpush.xpose.msra.mxu0 0.0
    %2078 = vmatpush.xpose.msra.mxu0 0.0
    %2079 = vmatpush.xpose.msra.mxu0 0.0
    %2080 = vmatpush.xpose.msra.mxu0 0.0
    %2081 = vmatpush.xpose.msra.mxu0 0.0
    %2082 = vmatpush.xpose.msra.mxu0 0.0
    %2083 = vmatpush.xpose.msra.mxu0 0.0
    %2084 = vmatpush.xpose.msra.mxu0 0.0
    %2085 = vmatpush.xpose.msra.mxu0 0.0
    %2086 = vmatpush.xpose.msra.mxu0 0.0
    %2087 = vmatpush.xpose.msra.mxu0 0.0
    %2088 = vmatpush.xpose.msra.mxu0 0.0
    %2089 = vmatpush.xpose.msra.mxu0 0.0
    %2090 = vmatpush.xpose.msra.mxu0 0.0
    %2091 = vmatpush.xpose.msra.mxu0 %v2074
    %2092 = vmatmul.f32.gmra.mxu0 %v2072
    %v2093 = vpop.f32.mrf.mxu0
    %v2094 = vadd.f32 0.0, %v2093
    %2095 = vdwg.mxu0
    %v2096 = vsel %vm206, %v2094, -inf
    %2097 = vmax.xlane.f32.xlu0 %v2096
    %v2098 = vpop.xlane.xlu0 %2097
    %v2099 = vsub.f32 %v2094, %v2098
    %v2100 = vmul.f32 %v2099, 1.442695
    %v2101 = vpow.pop %v2100
    %v2102 = vsel %vm206, %v2101, 0.0
    %2103 = vadd.xlane.f32.xlu0 %v2102
    %v2104 = vpop.xlane.xlu0 %2103
    %v2105 = vrcp.pop %v2104
    %v2106 = vmul.f32 %v2104, %v2105
    %v2107 = vsub.f32 1.0, %v2106
    %v2108 = vmul.f32 %v2105, %v2107
    %v2109 = vadd.f32 %v2105, %v2108
    %vm2110 = vweird.f32 %v2104
    %vm2111 = vweird.f32 %v2105
    %vm2112 = vmor %vm2110, %vm2111
    %v2113 = vsel %vm2112, %v2105, %v2109
    %v2114 = vand.u32 2147483647, %v2104
    %vm2115 = vcmp.eq.f32.partialorder %v2114, 8.507059e+37
    %v2116 = vand.u32 %v2104, 2147483648
    %v2117 = vor.u32 1.1754944e-38, %v2116
    %v2118 = vsel %vm2115, %v2117, %v2113
    %v2119 = vmul.f32 %v2101, %v2118
    %v2120 = vadd.f32 %v2041, %v2119
    %2121 = vrot.lane.b32.xlu0 %v1984, 56
    %v2122 = vpop.permute.xlu0 %2121
    %v2125 = vsel %vm206, %v2119, 0
    %2127 = vmatpush.msra.mxu0 0.0
    %2128 = vmatpush.msra.mxu0 0.0
    %2129 = vmatpush.msra.mxu0 0.0
    %2130 = vmatpush.msra.mxu0 0.0
    %2131 = vmatpush.msra.mxu0 0.0
    %2132 = vmatpush.msra.mxu0 0.0
    %2133 = vmatpush.msra.mxu0 0.0
    %2134 = vmatpush.msra.mxu0 0.0
    %2135 = vmatpush.msra.mxu0 0.0
    %2136 = vmatpush.msra.mxu0 0.0
    %2137 = vmatpush.msra.mxu0 0.0
    %2138 = vmatpush.msra.mxu0 0.0
    %2139 = vmatpush.msra.mxu0 0.0
    %2140 = vmatpush.msra.mxu0 0.0
    %2141 = vmatpush.msra.mxu0 0.0
    %2142 = vmatpush.msra.mxu0 %v2122
    %2143 = vmatmul.f32.gmra.mxu0 %v2125
    %v2144 = vpop.f32.mrf.mxu0
    %v2145 = vadd.f32 0.0, %v2144
    %2146 = vdwg.mxu0
    %2147 = vrot.lane.b32.xlu0 %v1989, 112
    %v2148 = vpop.permute.xlu0 %2147
    %2149 = vrot.lane.b32.xlu0 %v1984, 80
    %v2150 = vpop.permute.xlu0 %2149
    %v2151 = vsel %vm206, %v2148, 0
    %v2153 = vsel %vm206, %v2150, 0
    %2155 = vmatpush.xpose.msra.mxu0 0.0
    %2156 = vmatpush.xpose.msra.mxu0 0.0
    %2157 = vmatpush.xpose.msra.mxu0 0.0
    %2158 = vmatpush.xpose.msra.mxu0 0.0
    %2159 = vmatpush.xpose.msra.mxu0 0.0
    %2160 = vmatpush.xpose.msra.mxu0 0.0
    %2161 = vmatpush.xpose.msra.mxu0 0.0
    %2162 = vmatpush.xpose.msra.mxu0 0.0
    %2163 = vmatpush.xpose.msra.mxu0 0.0
    %2164 = vmatpush.xpose.msra.mxu0 0.0
    %2165 = vmatpush.xpose.msra.mxu0 0.0
    %2166 = vmatpush.xpose.msra.mxu0 0.0
    %2167 = vmatpush.xpose.msra.mxu0 0.0
    %2168 = vmatpush.xpose.msra.mxu0 0.0
    %2169 = vmatpush.xpose.msra.mxu0 0.0
    %2170 = vmatpush.xpose.msra.mxu0 %v2153
    %2171 = vmatmul.f32.gmra.mxu0 %v2151
    %v2172 = vpop.f32.mrf.mxu0
    %v2173 = vadd.f32 0.0, %v2172
    %2174 = vdwg.mxu0
    %v2175 = vsel %vm206, %v2173, -inf
    %2176 = vmax.xlane.f32.xlu0 %v2175
    %v2177 = vpop.xlane.xlu0 %2176
    %v2178 = vsub.f32 %v2173, %v2177
    %v2179 = vmul.f32 %v2178, 1.442695
    %v2180 = vpow.pop %v2179
    %v2181 = vsel %vm206, %v2180, 0.0
    %2182 = vadd.xlane.f32.xlu0 %v2181
    %v2183 = vpop.xlane.xlu0 %2182
    %v2184 = vrcp.pop %v2183
    %v2185 = vmul.f32 %v2183, %v2184
    %v2186 = vsub.f32 1.0, %v2185
    %v2187 = vmul.f32 %v2184, %v2186
    %v2188 = vadd.f32 %v2184, %v2187
    %vm2189 = vweird.f32 %v2183
    %vm2190 = vweird.f32 %v2184
    %vm2191 = vmor %vm2189, %vm2190
    %v2192 = vsel %vm2191, %v2184, %v2188
    %v2193 = vand.u32 2147483647, %v2183
    %vm2194 = vcmp.eq.f32.partialorder %v2193, 8.507059e+37
    %v2195 = vand.u32 %v2183, 2147483648
    %v2196 = vor.u32 1.1754944e-38, %v2195
    %v2197 = vsel %vm2194, %v2196, %v2192
    %v2198 = vmul.f32 %v2180, %v2197
    %v2199 = vadd.f32 %v2120, %v2198
    %2200 = vrot.lane.b32.xlu0 %v1984, 48
    %v2201 = vpop.permute.xlu0 %2200
    %v2204 = vsel %vm206, %v2198, 0
    %2206 = vmatpush.msra.mxu0 0.0
    %2207 = vmatpush.msra.mxu0 0.0
    %2208 = vmatpush.msra.mxu0 0.0
    %2209 = vmatpush.msra.mxu0 0.0
    %2210 = vmatpush.msra.mxu0 0.0
    %2211 = vmatpush.msra.mxu0 0.0
    %2212 = vmatpush.msra.mxu0 0.0
    %2213 = vmatpush.msra.mxu0 0.0
    %2214 = vmatpush.msra.mxu0 0.0
    %2215 = vmatpush.msra.mxu0 0.0
    %2216 = vmatpush.msra.mxu0 0.0
    %2217 = vmatpush.msra.mxu0 0.0
    %2218 = vmatpush.msra.mxu0 0.0
    %2219 = vmatpush.msra.mxu0 0.0
    %2220 = vmatpush.msra.mxu0 0.0
    %2221 = vmatpush.msra.mxu0 %v2201
    %2222 = vmatmul.f32.gmra.mxu0 %v2204
    %v2223 = vpop.f32.mrf.mxu0
    %v2224 = vadd.f32 0.0, %v2223
    %2225 = vdwg.mxu0
    %2226 = vrot.lane.b32.xlu0 %v1989, 104
    %v2227 = vpop.permute.xlu0 %2226
    %2228 = vrot.lane.b32.xlu0 %v1984, 72
    %v2229 = vpop.permute.xlu0 %2228
    %v2230 = vsel %vm206, %v2227, 0
    %v2232 = vsel %vm206, %v2229, 0
    %2234 = vmatpush.xpose.msra.mxu0 0.0
    %2235 = vmatpush.xpose.msra.mxu0 0.0
    %2236 = vmatpush.xpose.msra.mxu0 0.0
    %2237 = vmatpush.xpose.msra.mxu0 0.0
    %2238 = vmatpush.xpose.msra.mxu0 0.0
    %2239 = vmatpush.xpose.msra.mxu0 0.0
    %2240 = vmatpush.xpose.msra.mxu0 0.0
    %2241 = vmatpush.xpose.msra.mxu0 0.0
    %2242 = vmatpush.xpose.msra.mxu0 0.0
    %2243 = vmatpush.xpose.msra.mxu0 0.0
    %2244 = vmatpush.xpose.msra.mxu0 0.0
    %2245 = vmatpush.xpose.msra.mxu0 0.0
    %2246 = vmatpush.xpose.msra.mxu0 0.0
    %2247 = vmatpush.xpose.msra.mxu0 0.0
    %2248 = vmatpush.xpose.msra.mxu0 0.0
    %2249 = vmatpush.xpose.msra.mxu0 %v2232
    %2250 = vmatmul.f32.gmra.mxu0 %v2230
    %v2251 = vpop.f32.mrf.mxu0
    %v2252 = vadd.f32 0.0, %v2251
    %2253 = vdwg.mxu0
    %v2254 = vsel %vm206, %v2252, -inf
    %2255 = vmax.xlane.f32.xlu0 %v2254
    %v2256 = vpop.xlane.xlu0 %2255
    %v2257 = vsub.f32 %v2252, %v2256
    %v2258 = vmul.f32 %v2257, 1.442695
    %v2259 = vpow.pop %v2258
    %v2260 = vsel %vm206, %v2259, 0.0
    %2261 = vadd.xlane.f32.xlu0 %v2260
    %v2262 = vpop.xlane.xlu0 %2261
    %v2263 = vrcp.pop %v2262
    %v2264 = vmul.f32 %v2262, %v2263
    %v2265 = vsub.f32 1.0, %v2264
    %v2266 = vmul.f32 %v2263, %v2265
    %v2267 = vadd.f32 %v2263, %v2266
    %vm2268 = vweird.f32 %v2262
    %vm2269 = vweird.f32 %v2263
    %vm2270 = vmor %vm2268, %vm2269
    %v2271 = vsel %vm2270, %v2263, %v2267
    %v2272 = vand.u32 2147483647, %v2262
    %vm2273 = vcmp.eq.f32.partialorder %v2272, 8.507059e+37
    %v2274 = vand.u32 %v2262, 2147483648
    %v2275 = vor.u32 1.1754944e-38, %v2274
    %v2276 = vsel %vm2273, %v2275, %v2271
    %v2277 = vmul.f32 %v2259, %v2276
    %v2278 = vadd.f32 %v2199, %v2277
    %2279 = vrot.lane.b32.xlu0 %v1984, 40
    %v2280 = vpop.permute.xlu0 %2279
    %v2283 = vsel %vm206, %v2277, 0
    %2285 = vmatpush.msra.mxu0 0.0
    %2286 = vmatpush.msra.mxu0 0.0
    %2287 = vmatpush.msra.mxu0 0.0
    %2288 = vmatpush.msra.mxu0 0.0
    %2289 = vmatpush.msra.mxu0 0.0
    %2290 = vmatpush.msra.mxu0 0.0
    %2291 = vmatpush.msra.mxu0 0.0
    %2292 = vmatpush.msra.mxu0 0.0
    %2293 = vmatpush.msra.mxu0 0.0
    %2294 = vmatpush.msra.mxu0 0.0
    %2295 = vmatpush.msra.mxu0 0.0
    %2296 = vmatpush.msra.mxu0 0.0
    %2297 = vmatpush.msra.mxu0 0.0
    %2298 = vmatpush.msra.mxu0 0.0
    %2299 = vmatpush.msra.mxu0 0.0
    %2300 = vmatpush.msra.mxu0 %v2280
    %2301 = vmatmul.f32.gmra.mxu0 %v2283
    %v2302 = vpop.f32.mrf.mxu0
    %v2303 = vadd.f32 0.0, %v2302
    %2304 = vdwg.mxu0
    %2306 = vrot.lane.b32.xlu0 %v2145, 8
    %v2307 = vpop.permute.xlu0 %2306
    %2310 = vrot.lane.b32.xlu0 %v2224, 16
    %v2311 = vpop.permute.xlu0 %2310
    %2314 = vrot.lane.b32.xlu0 %v2303, 24
    %v2315 = vpop.permute.xlu0 %2314
    %v2317 = vsel %vm206, %v2066, %v2307
    %v2318 = vsel %vm532, %v2317, %v2311
    %v2319 = vsel %vm534, %v2318, %v2315
    %v2320 = vmul.f32 %v2278, 0.25
    %v2321 = vmul.f32 %v1987, 0.35355338
    %2323 = vrot.lane.b32.xlu0 %v1987, 96
    %v2324 = vpop.permute.xlu0 %2323
    %v2326 = vsel %vm206, %v2321, 0
    %v2328 = vsel %vm206, %v2324, 0
    %2330 = vmatpush.xpose.msra.mxu0 0.0
    %2331 = vmatpush.xpose.msra.mxu0 0.0
    %2332 = vmatpush.xpose.msra.mxu0 0.0
    %2333 = vmatpush.xpose.msra.mxu0 0.0
    %2334 = vmatpush.xpose.msra.mxu0 0.0
    %2335 = vmatpush.xpose.msra.mxu0 0.0
    %2336 = vmatpush.xpose.msra.mxu0 0.0
    %2337 = vmatpush.xpose.msra.mxu0 0.0
    %2338 = vmatpush.xpose.msra.mxu0 0.0
    %2339 = vmatpush.xpose.msra.mxu0 0.0
    %2340 = vmatpush.xpose.msra.mxu0 0.0
    %2341 = vmatpush.xpose.msra.mxu0 0.0
    %2342 = vmatpush.xpose.msra.mxu0 0.0
    %2343 = vmatpush.xpose.msra.mxu0 0.0
    %2344 = vmatpush.xpose.msra.mxu0 0.0
    %2345 = vmatpush.xpose.msra.mxu0 %v2328
    %2346 = vmatmul.f32.gmra.mxu0 %v2326
    %v2347 = vpop.f32.mrf.mxu0
    %v2348 = vadd.f32 0.0, %v2347
    %2349 = vdwg.mxu0
    %v2350 = vsel %vm206, %v2348, -inf
    %2351 = vmax.xlane.f32.xlu0 %v2350
    %v2352 = vpop.xlane.xlu0 %2351
    %v2353 = vsub.f32 %v2348, %v2352
    %v2354 = vmul.f32 %v2353, 1.442695
    %v2355 = vpow.pop %v2354
    %v2356 = vsel %vm206, %v2355, 0.0
    %2357 = vadd.xlane.f32.xlu0 %v2356
    %v2358 = vpop.xlane.xlu0 %2357
    %v2359 = vrcp.pop %v2358
    %v2360 = vmul.f32 %v2358, %v2359
    %v2361 = vsub.f32 1.0, %v2360
    %v2362 = vmul.f32 %v2359, %v2361
    %v2363 = vadd.f32 %v2359, %v2362
    %vm2364 = vweird.f32 %v2358
    %vm2365 = vweird.f32 %v2359
    %vm2366 = vmor %vm2364, %vm2365
    %v2367 = vsel %vm2366, %v2359, %v2363
    %v2368 = vand.u32 2147483647, %v2358
    %vm2369 = vcmp.eq.f32.partialorder %v2368, 8.507059e+37
    %v2370 = vand.u32 %v2358, 2147483648
    %v2371 = vor.u32 1.1754944e-38, %v2370
    %v2372 = vsel %vm2369, %v2371, %v2367
    %v2373 = vmul.f32 %v2355, %v2372
    %2374 = vrot.lane.b32.xlu0 %v1987, 64
    %v2375 = vpop.permute.xlu0 %2374
    %v2378 = vsel %vm206, %v2373, 0
    %2380 = vmatpush.msra.mxu0 0.0
    %2381 = vmatpush.msra.mxu0 0.0
    %2382 = vmatpush.msra.mxu0 0.0
    %2383 = vmatpush.msra.mxu0 0.0
    %2384 = vmatpush.msra.mxu0 0.0
    %2385 = vmatpush.msra.mxu0 0.0
    %2386 = vmatpush.msra.mxu0 0.0
    %2387 = vmatpush.msra.mxu0 0.0
    %2388 = vmatpush.msra.mxu0 0.0
    %2389 = vmatpush.msra.mxu0 0.0
    %2390 = vmatpush.msra.mxu0 0.0
    %2391 = vmatpush.msra.mxu0 0.0
    %2392 = vmatpush.msra.mxu0 0.0
    %2393 = vmatpush.msra.mxu0 0.0
    %2394 = vmatpush.msra.mxu0 0.0
    %2395 = vmatpush.msra.mxu0 %v2375
    %2396 = vmatmul.f32.gmra.mxu0 %v2378
    %v2397 = vpop.f32.mrf.mxu0
    %v2398 = vadd.f32 0.0, %v2397
    %2399 = vdwg.mxu0
    %2400 = vrot.lane.b32.xlu0 %v2321, 120
    %v2401 = vpop.permute.xlu0 %2400
    %2402 = vrot.lane.b32.xlu0 %v1987, 88
    %v2403 = vpop.permute.xlu0 %2402
    %v2404 = vsel %vm206, %v2401, 0
    %v2406 = vsel %vm206, %v2403, 0
    %2408 = vmatpush.xpose.msra.mxu0 0.0
    %2409 = vmatpush.xpose.msra.mxu0 0.0
    %2410 = vmatpush.xpose.msra.mxu0 0.0
    %2411 = vmatpush.xpose.msra.mxu0 0.0
    %2412 = vmatpush.xpose.msra.mxu0 0.0
    %2413 = vmatpush.xpose.msra.mxu0 0.0
    %2414 = vmatpush.xpose.msra.mxu0 0.0
    %2415 = vmatpush.xpose.msra.mxu0 0.0
    %2416 = vmatpush.xpose.msra.mxu0 0.0
    %2417 = vmatpush.xpose.msra.mxu0 0.0
    %2418 = vmatpush.xpose.msra.mxu0 0.0
    %2419 = vmatpush.xpose.msra.mxu0 0.0
    %2420 = vmatpush.xpose.msra.mxu0 0.0
    %2421 = vmatpush.xpose.msra.mxu0 0.0
    %2422 = vmatpush.xpose.msra.mxu0 0.0
    %2423 = vmatpush.xpose.msra.mxu0 %v2406
    %2424 = vmatmul.f32.gmra.mxu0 %v2404
    %v2425 = vpop.f32.mrf.mxu0
    %v2426 = vadd.f32 0.0, %v2425
    %2427 = vdwg.mxu0
    %v2428 = vsel %vm206, %v2426, -inf
    %2429 = vmax.xlane.f32.xlu0 %v2428
    %v2430 = vpop.xlane.xlu0 %2429
    %v2431 = vsub.f32 %v2426, %v2430
    %v2432 = vmul.f32 %v2431, 1.442695
    %v2433 = vpow.pop %v2432
    %v2434 = vsel %vm206, %v2433, 0.0
    %2435 = vadd.xlane.f32.xlu0 %v2434
    %v2436 = vpop.xlane.xlu0 %2435
    %v2437 = vrcp.pop %v2436
    %v2438 = vmul.f32 %v2436, %v2437
    %v2439 = vsub.f32 1.0, %v2438
    %v2440 = vmul.f32 %v2437, %v2439
    %v2441 = vadd.f32 %v2437, %v2440
    %vm2442 = vweird.f32 %v2436
    %vm2443 = vweird.f32 %v2437
    %vm2444 = vmor %vm2442, %vm2443
    %v2445 = vsel %vm2444, %v2437, %v2441
    %v2446 = vand.u32 2147483647, %v2436
    %vm2447 = vcmp.eq.f32.partialorder %v2446, 8.507059e+37
    %v2448 = vand.u32 %v2436, 2147483648
    %v2449 = vor.u32 1.1754944e-38, %v2448
    %v2450 = vsel %vm2447, %v2449, %v2445
    %v2451 = vmul.f32 %v2433, %v2450
    %v2452 = vadd.f32 %v2373, %v2451
    %2453 = vrot.lane.b32.xlu0 %v1987, 56
    %v2454 = vpop.permute.xlu0 %2453
    %v2457 = vsel %vm206, %v2451, 0
    %2459 = vmatpush.msra.mxu0 0.0
    %2460 = vmatpush.msra.mxu0 0.0
    %2461 = vmatpush.msra.mxu0 0.0
    %2462 = vmatpush.msra.mxu0 0.0
    %2463 = vmatpush.msra.mxu0 0.0
    %2464 = vmatpush.msra.mxu0 0.0
    %2465 = vmatpush.msra.mxu0 0.0
    %2466 = vmatpush.msra.mxu0 0.0
    %2467 = vmatpush.msra.mxu0 0.0
    %2468 = vmatpush.msra.mxu0 0.0
    %2469 = vmatpush.msra.mxu0 0.0
    %2470 = vmatpush.msra.mxu0 0.0
    %2471 = vmatpush.msra.mxu0 0.0
    %2472 = vmatpush.msra.mxu0 0.0
    %2473 = vmatpush.msra.mxu0 0.0
    %2474 = vmatpush.msra.mxu0 %v2454
    %2475 = vmatmul.f32.gmra.mxu0 %v2457
    %v2476 = vpop.f32.mrf.mxu0
    %v2477 = vadd.f32 0.0, %v2476
    %2478 = vdwg.mxu0
    %2479 = vrot.lane.b32.xlu0 %v2321, 112
    %v2480 = vpop.permute.xlu0 %2479
    %2481 = vrot.lane.b32.xlu0 %v1987, 80
    %v2482 = vpop.permute.xlu0 %2481
    %v2483 = vsel %vm206, %v2480, 0
    %v2485 = vsel %vm206, %v2482, 0
    %2487 = vmatpush.xpose.msra.mxu0 0.0
    %2488 = vmatpush.xpose.msra.mxu0 0.0
    %2489 = vmatpush.xpose.msra.mxu0 0.0
    %2490 = vmatpush.xpose.msra.mxu0 0.0
    %2491 = vmatpush.xpose.msra.mxu0 0.0
    %2492 = vmatpush.xpose.msra.mxu0 0.0
    %2493 = vmatpush.xpose.msra.mxu0 0.0
    %2494 = vmatpush.xpose.msra.mxu0 0.0
    %2495 = vmatpush.xpose.msra.mxu0 0.0
    %2496 = vmatpush.xpose.msra.mxu0 0.0
    %2497 = vmatpush.xpose.msra.mxu0 0.0
    %2498 = vmatpush.xpose.msra.mxu0 0.0
    %2499 = vmatpush.xpose.msra.mxu0 0.0
    %2500 = vmatpush.xpose.msra.mxu0 0.0
    %2501 = vmatpush.xpose.msra.mxu0 0.0
    %2502 = vmatpush.xpose.msra.mxu0 %v2485
    %2503 = vmatmul.f32.gmra.mxu0 %v2483
    %v2504 = vpop.f32.mrf.mxu0
    %v2505 = vadd.f32 0.0, %v2504
    %2506 = vdwg.mxu0
    %v2507 = vsel %vm206, %v2505, -inf
    %2508 = vmax.xlane.f32.xlu0 %v2507
    %v2509 = vpop.xlane.xlu0 %2508
    %v2510 = vsub.f32 %v2505, %v2509
    %v2511 = vmul.f32 %v2510, 1.442695
    %v2512 = vpow.pop %v2511
    %v2513 = vsel %vm206, %v2512, 0.0
    %2514 = vadd.xlane.f32.xlu0 %v2513
    %v2515 = vpop.xlane.xlu0 %2514
    %v2516 = vrcp.pop %v2515
    %v2517 = vmul.f32 %v2515, %v2516
    %v2518 = vsub.f32 1.0, %v2517
    %v2519 = vmul.f32 %v2516, %v2518
    %v2520 = vadd.f32 %v2516, %v2519
    %vm2521 = vweird.f32 %v2515
    %vm2522 = vweird.f32 %v2516
    %vm2523 = vmor %vm2521, %vm2522
    %v2524 = vsel %vm2523, %v2516, %v2520
    %v2525 = vand.u32 2147483647, %v2515
    %vm2526 = vcmp.eq.f32.partialorder %v2525, 8.507059e+37
    %v2527 = vand.u32 %v2515, 2147483648
    %v2528 = vor.u32 1.1754944e-38, %v2527
    %v2529 = vsel %vm2526, %v2528, %v2524
    %v2530 = vmul.f32 %v2512, %v2529
    %v2531 = vadd.f32 %v2452, %v2530
    %2532 = vrot.lane.b32.xlu0 %v1987, 48
    %v2533 = vpop.permute.xlu0 %2532
    %v2536 = vsel %vm206, %v2530, 0
    %2538 = vmatpush.msra.mxu0 0.0
    %2539 = vmatpush.msra.mxu0 0.0
    %2540 = vmatpush.msra.mxu0 0.0
    %2541 = vmatpush.msra.mxu0 0.0
    %2542 = vmatpush.msra.mxu0 0.0
    %2543 = vmatpush.msra.mxu0 0.0
    %2544 = vmatpush.msra.mxu0 0.0
    %2545 = vmatpush.msra.mxu0 0.0
    %2546 = vmatpush.msra.mxu0 0.0
    %2547 = vmatpush.msra.mxu0 0.0
    %2548 = vmatpush.msra.mxu0 0.0
    %2549 = vmatpush.msra.mxu0 0.0
    %2550 = vmatpush.msra.mxu0 0.0
    %2551 = vmatpush.msra.mxu0 0.0
    %2552 = vmatpush.msra.mxu0 0.0
    %2553 = vmatpush.msra.mxu0 %v2533
    %2554 = vmatmul.f32.gmra.mxu0 %v2536
    %v2555 = vpop.f32.mrf.mxu0
    %v2556 = vadd.f32 0.0, %v2555
    %2557 = vdwg.mxu0
    %2558 = vrot.lane.b32.xlu0 %v2321, 104
    %v2559 = vpop.permute.xlu0 %2558
    %2560 = vrot.lane.b32.xlu0 %v1987, 72
    %v2561 = vpop.permute.xlu0 %2560
    %v2562 = vsel %vm206, %v2559, 0
    %v2564 = vsel %vm206, %v2561, 0
    %2566 = vmatpush.xpose.msra.mxu0 0.0
    %2567 = vmatpush.xpose.msra.mxu0 0.0
    %2568 = vmatpush.xpose.msra.mxu0 0.0
    %2569 = vmatpush.xpose.msra.mxu0 0.0
    %2570 = vmatpush.xpose.msra.mxu0 0.0
    %2571 = vmatpush.xpose.msra.mxu0 0.0
    %2572 = vmatpush.xpose.msra.mxu0 0.0
    %2573 = vmatpush.xpose.msra.mxu0 0.0
    %2574 = vmatpush.xpose.msra.mxu0 0.0
    %2575 = vmatpush.xpose.msra.mxu0 0.0
    %2576 = vmatpush.xpose.msra.mxu0 0.0
    %2577 = vmatpush.xpose.msra.mxu0 0.0
    %2578 = vmatpush.xpose.msra.mxu0 0.0
    %2579 = vmatpush.xpose.msra.mxu0 0.0
    %2580 = vmatpush.xpose.msra.mxu0 0.0
    %2581 = vmatpush.xpose.msra.mxu0 %v2564
    %2582 = vmatmul.f32.gmra.mxu0 %v2562
    %v2583 = vpop.f32.mrf.mxu0
    %v2584 = vadd.f32 0.0, %v2583
    %2585 = vdwg.mxu0
    %v2586 = vsel %vm206, %v2584, -inf
    %2587 = vmax.xlane.f32.xlu0 %v2586
    %v2588 = vpop.xlane.xlu0 %2587
    %v2589 = vsub.f32 %v2584, %v2588
    %v2590 = vmul.f32 %v2589, 1.442695
    %v2591 = vpow.pop %v2590
    %v2592 = vsel %vm206, %v2591, 0.0
    %2593 = vadd.xlane.f32.xlu0 %v2592
    %v2594 = vpop.xlane.xlu0 %2593
    %v2595 = vrcp.pop %v2594
    %v2596 = vmul.f32 %v2594, %v2595
    %v2597 = vsub.f32 1.0, %v2596
    %v2598 = vmul.f32 %v2595, %v2597
    %v2599 = vadd.f32 %v2595, %v2598
    %vm2600 = vweird.f32 %v2594
    %vm2601 = vweird.f32 %v2595
    %vm2602 = vmor %vm2600, %vm2601
    %v2603 = vsel %vm2602, %v2595, %v2599
    %v2604 = vand.u32 2147483647, %v2594
    %vm2605 = vcmp.eq.f32.partialorder %v2604, 8.507059e+37
    %v2606 = vand.u32 %v2594, 2147483648
    %v2607 = vor.u32 1.1754944e-38, %v2606
    %v2608 = vsel %vm2605, %v2607, %v2603
    %v2609 = vmul.f32 %v2591, %v2608
    %v2610 = vadd.f32 %v2531, %v2609
    %2611 = vrot.lane.b32.xlu0 %v1987, 40
    %v2612 = vpop.permute.xlu0 %2611
    %v2615 = vsel %vm206, %v2609, 0
    %2617 = vmatpush.msra.mxu0 0.0
    %2618 = vmatpush.msra.mxu0 0.0
    %2619 = vmatpush.msra.mxu0 0.0
    %2620 = vmatpush.msra.mxu0 0.0
    %2621 = vmatpush.msra.mxu0 0.0
    %2622 = vmatpush.msra.mxu0 0.0
    %2623 = vmatpush.msra.mxu0 0.0
    %2624 = vmatpush.msra.mxu0 0.0
    %2625 = vmatpush.msra.mxu0 0.0
    %2626 = vmatpush.msra.mxu0 0.0
    %2627 = vmatpush.msra.mxu0 0.0
    %2628 = vmatpush.msra.mxu0 0.0
    %2629 = vmatpush.msra.mxu0 0.0
    %2630 = vmatpush.msra.mxu0 0.0
    %2631 = vmatpush.msra.mxu0 0.0
    %2632 = vmatpush.msra.mxu0 %v2612
    %2633 = vmatmul.f32.gmra.mxu0 %v2615
    %v2634 = vpop.f32.mrf.mxu0
    %v2635 = vadd.f32 0.0, %v2634
    %2636 = vdwg.mxu0
    %2638 = vrot.lane.b32.xlu0 %v2477, 8
    %v2639 = vpop.permute.xlu0 %2638
    %2642 = vrot.lane.b32.xlu0 %v2556, 16
    %v2643 = vpop.permute.xlu0 %2642
    %2646 = vrot.lane.b32.xlu0 %v2635, 24
    %v2647 = vpop.permute.xlu0 %2646
    %v2649 = vsel %vm206, %v2398, %v2639
    %v2650 = vsel %vm532, %v2649, %v2643
    %v2651 = vsel %vm534, %v2650, %v2647
    %v2652 = vmul.f32 %v2610, 0.25
    %2657 = vrot.lane.b32.xlu0 %v1954, 32
    %v2658 = vpop.permute.xlu0 %2657
    %2659 = vrot.lane.b32.xlu0 %v1955, 32
    %v2660 = vpop.permute.xlu0 %2659
    %2661 = vrot.lane.b32.xlu0 %v1956, 32
    %v2662 = vpop.permute.xlu0 %2661
    %2663 = vrot.lane.b32.xlu0 %v1957, 32
    %v2664 = vpop.permute.xlu0 %2663
    %2670 = vrot.lane.b32.xlu0 %v1959, 32
    %v2671 = vpop.permute.xlu0 %2670
    %v2674 = vsel %vm106, %v2319, 0
    %v2677 = vsel %vm106, %v2651, 0
    %2679 = vmatpush.msra.mxu0 0.0
    %2680 = vmatpush.msra.mxu0 0.0
    %2681 = vmatpush.msra.mxu0 0.0
    %2682 = vmatpush.msra.mxu0 0.0
    %2683 = vmatpush.msra.mxu0 0.0
    %2684 = vmatpush.msra.mxu0 0.0
    %2685 = vmatpush.msra.mxu0 0.0
    %2686 = vmatpush.msra.mxu0 0.0
    %2687 = vmatpush.msra.mxu0 0.0
    %2688 = vmatpush.msra.mxu0 0.0
    %2689 = vmatpush.msra.mxu0 0.0
    %2690 = vmatpush.msra.mxu0 0.0
    %2691 = vmatpush.msra.mxu0 %v2664
    %2692 = vmatpush.msra.mxu0 %v2662
    %2693 = vmatpush.msra.mxu0 %v2660
    %2694 = vmatpush.msra.mxu0 %v2658
    %2695 = vmatmul.f32.gmra.mxu0 %v2674
    %v2696 = vpop.f32.mrf.mxu0
    %v2697 = vadd.f32 %v2671, %v2696
    %2698 = vmatmul.f32.gmra.mxu0 %v2677
    %v2699 = vpop.f32.mrf.mxu0
    %v2700 = vadd.f32 %v2671, %v2699
    %2701 = vdwg.mxu0
    %v2702 = vadd.f32 %v1897, %v2697
    %v2703 = vadd.f32 %v1898, %v2700
    %v2704 = vsel %vm106, %v2702, 0.0
    %2705 = vadd.xlane.f32.xlu0 %v2704
    %v2706 = vpop.xlane.xlu0 %2705
    %v2707 = vsel %vm106, %v2703, 0.0
    %2708 = vadd.xlane.f32.xlu0 %v2707
    %v2709 = vpop.xlane.xlu0 %2708
    %v2710 = vmul.f32 %v2706, %v119
    %v2711 = vmul.f32 %v2709, %v119
    %v2712 = vsub.f32 %v2702, %v2710
    %v2713 = vsub.f32 %v2703, %v2711
    %v2714 = vmul.f32 %v2712, %v2712
    %v2715 = vmul.f32 %v2713, %v2713
    %v2716 = vsel %vm106, %v2714, 0.0
    %2717 = vadd.xlane.f32.xlu0 %v2716
    %v2718 = vpop.xlane.xlu0 %2717
    %v2719 = vsel %vm106, %v2715, 0.0
    %2720 = vadd.xlane.f32.xlu0 %v2719
    %v2721 = vpop.xlane.xlu0 %2720
    %v2722 = vmul.f32 %v2718, %v119
    %v2723 = vmul.f32 %v2721, %v119
    %v2724 = vadd.f32 %v2722, 1e-05
    %v2725 = vadd.f32 %v2723, 1e-05
    %v2726 = vrsqrt.pop %v2724
    %v2727 = vmul.f32 %v2726, %v2724
    %v2728 = vmul.f32 %v2727, %v2726
    %v2729 = vmul.f32 0.5, %v2728
    %v2730 = vsub.f32 1.5, %v2729
    %v2731 = vmul.f32 %v2726, %v2730
    %vm2732 = vweird.f32 %v2724
    %vm2733 = vweird.f32 %v2726
    %vm2734 = vmor %vm2732, %vm2733
    %v2735 = vsel %vm2734, %v2726, %v2731
    %v2736 = vrsqrt.pop %v2725
    %v2737 = vmul.f32 %v2736, %v2725
    %v2738 = vmul.f32 %v2737, %v2736
    %v2739 = vmul.f32 0.5, %v2738
    %v2740 = vsub.f32 1.5, %v2739
    %v2741 = vmul.f32 %v2736, %v2740
    %vm2742 = vweird.f32 %v2725
    %vm2743 = vweird.f32 %v2736
    %vm2744 = vmor %vm2742, %vm2743
    %v2745 = vsel %vm2744, %v2736, %v2741
    %v2746 = vmul.f32 %v2712, %v2735
    %v2747 = vmul.f32 %v2713, %v2745
    %2748 = vrot.lane.b32.xlu0 %v1944, 64
    %v2749 = vpop.permute.xlu0 %2748
    %v2751 = vmul.f32 %v2746, %v2749
    %v2752 = vmul.f32 %v2747, %v2749
    %2753 = vrot.lane.b32.xlu0 %v1944, 32
    %v2754 = vpop.permute.xlu0 %2753
    %v2756 = vadd.f32 %v2751, %v2754
    %v2757 = vadd.f32 %v2752, %v2754
    %s2758 = scalar_lea.vmem [#allocation2], 128
    %v2759 = vld [vmem:[%s2758] sm:$0xff]
    %v2760 = vld [vmem:[%s2758 + $0x8] sm:$0xff]
    %v2761 = vld [vmem:[%s2758 + $0x10] sm:$0xff]
    %v2762 = vld [vmem:[%s2758 + $0x18] sm:$0xff]
    %v2763 = vld [vmem:[%s2 + $0x7] sm:$0x1]
    %v2764 = vperm.slane %v2763, 0
    %v2766 = vsel %vm106, %v2756, 0
    %v2769 = vsel %vm106, %v2757, 0
    %2771 = vmatpush.msra.mxu0 0.0
    %2772 = vmatpush.msra.mxu0 0.0
    %2773 = vmatpush.msra.mxu0 0.0
    %2774 = vmatpush.msra.mxu0 0.0
    %2775 = vmatpush.msra.mxu0 0.0
    %2776 = vmatpush.msra.mxu0 0.0
    %2777 = vmatpush.msra.mxu0 0.0
    %2778 = vmatpush.msra.mxu0 0.0
    %2779 = vmatpush.msra.mxu0 0.0
    %2780 = vmatpush.msra.mxu0 0.0
    %2781 = vmatpush.msra.mxu0 0.0
    %2782 = vmatpush.msra.mxu0 0.0
    %2783 = vmatpush.msra.mxu0 %v2762
    %2784 = vmatpush.msra.mxu0 %v2761
    %2785 = vmatpush.msra.mxu0 %v2760
    %2786 = vmatpush.msra.mxu0 %v2759
    %2787 = vmatmul.f32.gmra.mxu0 %v2766
    %v2788 = vpop.f32.mrf.mxu0
    %v2789 = vadd.f32 %v2764, %v2788
    %2790 = vmatmul.f32.gmra.mxu0 %v2769
    %v2791 = vpop.f32.mrf.mxu0
    %v2792 = vadd.f32 %v2764, %v2791
    %2793 = vdwg.mxu0
    %2794 = vmatpush.msra.mxu0 0.0
    %2795 = vmatpush.msra.mxu0 0.0
    %2796 = vmatpush.msra.mxu0 0.0
    %2797 = vmatpush.msra.mxu0 0.0
    %2798 = vmatpush.msra.mxu0 0.0
    %2799 = vmatpush.msra.mxu0 0.0
    %2800 = vmatpush.msra.mxu0 0.0
    %2801 = vmatpush.msra.mxu0 0.0
    %2802 = vmatpush.msra.mxu0 0.0
    %2803 = vmatpush.msra.mxu0 0.0
    %2804 = vmatpush.msra.mxu0 0.0
    %2805 = vmatpush.msra.mxu0 0.0
    %2806 = vmatpush.msra.mxu0 %v2762
    %2807 = vmatpush.msra.mxu0 %v2761
    %2808 = vmatpush.msra.mxu0 %v2760
    %2809 = vmatpush.msra.mxu0 %v2759
    %2810 = vmatmul.f32.gmra.mxu0 %v1011
    %v2811 = vpop.f32.mrf.mxu0
    %v2812 = vadd.f32 %v2764, %v2811
    %2813 = vmatmul.f32.gmra.mxu0 %v1014
    %v2814 = vpop.f32.mrf.mxu0
    %v2815 = vadd.f32 %v2764, %v2814
    %2816 = vdwg.mxu0
    %v2817 = vmul.f32 %v2789, 0.35355338
    %2819 = vrot.lane.b32.xlu0 %v2812, 96
    %v2820 = vpop.permute.xlu0 %2819
    %v2822 = vsel %vm206, %v2817, 0
    %v2824 = vsel %vm206, %v2820, 0
    %2826 = vmatpush.xpose.msra.mxu0 0.0
    %2827 = vmatpush.xpose.msra.mxu0 0.0
    %2828 = vmatpush.xpose.msra.mxu0 0.0
    %2829 = vmatpush.xpose.msra.mxu0 0.0
    %2830 = vmatpush.xpose.msra.mxu0 0.0
    %2831 = vmatpush.xpose.msra.mxu0 0.0
    %2832 = vmatpush.xpose.msra.mxu0 0.0
    %2833 = vmatpush.xpose.msra.mxu0 0.0
    %2834 = vmatpush.xpose.msra.mxu0 0.0
    %2835 = vmatpush.xpose.msra.mxu0 0.0
    %2836 = vmatpush.xpose.msra.mxu0 0.0
    %2837 = vmatpush.xpose.msra.mxu0 0.0
    %2838 = vmatpush.xpose.msra.mxu0 0.0
    %2839 = vmatpush.xpose.msra.mxu0 0.0
    %2840 = vmatpush.xpose.msra.mxu0 0.0
    %2841 = vmatpush.xpose.msra.mxu0 %v2824
    %2842 = vmatmul.f32.gmra.mxu0 %v2822
    %v2843 = vpop.f32.mrf.mxu0
    %v2844 = vadd.f32 0.0, %v2843
    %2845 = vdwg.mxu0
    %v2846 = vsel %vm206, %v2844, -inf
    %2847 = vmax.xlane.f32.xlu0 %v2846
    %v2848 = vpop.xlane.xlu0 %2847
    %v2849 = vsub.f32 %v2844, %v2848
    %v2850 = vmul.f32 %v2849, 1.442695
    %v2851 = vpow.pop %v2850
    %v2852 = vsel %vm206, %v2851, 0.0
    %2853 = vadd.xlane.f32.xlu0 %v2852
    %v2854 = vpop.xlane.xlu0 %2853
    %v2855 = vrcp.pop %v2854
    %v2856 = vmul.f32 %v2854, %v2855
    %v2857 = vsub.f32 1.0, %v2856
    %v2858 = vmul.f32 %v2855, %v2857
    %v2859 = vadd.f32 %v2855, %v2858
    %vm2860 = vweird.f32 %v2854
    %vm2861 = vweird.f32 %v2855
    %vm2862 = vmor %vm2860, %vm2861
    %v2863 = vsel %vm2862, %v2855, %v2859
    %v2864 = vand.u32 2147483647, %v2854
    %vm2865 = vcmp.eq.f32.partialorder %v2864, 8.507059e+37
    %v2866 = vand.u32 %v2854, 2147483648
    %v2867 = vor.u32 1.1754944e-38, %v2866
    %v2868 = vsel %vm2865, %v2867, %v2863
    %v2869 = vmul.f32 %v2851, %v2868
    %2870 = vrot.lane.b32.xlu0 %v2812, 64
    %v2871 = vpop.permute.xlu0 %2870
    %v2874 = vsel %vm206, %v2869, 0
    %2876 = vmatpush.msra.mxu0 0.0
    %2877 = vmatpush.msra.mxu0 0.0
    %2878 = vmatpush.msra.mxu0 0.0
    %2879 = vmatpush.msra.mxu0 0.0
    %2880 = vmatpush.msra.mxu0 0.0
    %2881 = vmatpush.msra.mxu0 0.0
    %2882 = vmatpush.msra.mxu0 0.0
    %2883 = vmatpush.msra.mxu0 0.0
    %2884 = vmatpush.msra.mxu0 0.0
    %2885 = vmatpush.msra.mxu0 0.0
    %2886 = vmatpush.msra.mxu0 0.0
    %2887 = vmatpush.msra.mxu0 0.0
    %2888 = vmatpush.msra.mxu0 0.0
    %2889 = vmatpush.msra.mxu0 0.0
    %2890 = vmatpush.msra.mxu0 0.0
    %2891 = vmatpush.msra.mxu0 %v2871
    %2892 = vmatmul.f32.gmra.mxu0 %v2874
    %v2893 = vpop.f32.mrf.mxu0
    %v2894 = vadd.f32 0.0, %v2893
    %2895 = vdwg.mxu0
    %2896 = vrot.lane.b32.xlu0 %v2817, 120
    %v2897 = vpop.permute.xlu0 %2896
    %2898 = vrot.lane.b32.xlu0 %v2812, 88
    %v2899 = vpop.permute.xlu0 %2898
    %v2900 = vsel %vm206, %v2897, 0
    %v2902 = vsel %vm206, %v2899, 0
    %2904 = vmatpush.xpose.msra.mxu0 0.0
    %2905 = vmatpush.xpose.msra.mxu0 0.0
    %2906 = vmatpush.xpose.msra.mxu0 0.0
    %2907 = vmatpush.xpose.msra.mxu0 0.0
    %2908 = vmatpush.xpose.msra.mxu0 0.0
    %2909 = vmatpush.xpose.msra.mxu0 0.0
    %2910 = vmatpush.xpose.msra.mxu0 0.0
    %2911 = vmatpush.xpose.msra.mxu0 0.0
    %2912 = vmatpush.xpose.msra.mxu0 0.0
    %2913 = vmatpush.xpose.msra.mxu0 0.0
    %2914 = vmatpush.xpose.msra.mxu0 0.0
    %2915 = vmatpush.xpose.msra.mxu0 0.0
    %2916 = vmatpush.xpose.msra.mxu0 0.0
    %2917 = vmatpush.xpose.msra.mxu0 0.0
    %2918 = vmatpush.xpose.msra.mxu0 0.0
    %2919 = vmatpush.xpose.msra.mxu0 %v2902
    %2920 = vmatmul.f32.gmra.mxu0 %v2900
    %v2921 = vpop.f32.mrf.mxu0
    %v2922 = vadd.f32 0.0, %v2921
    %2923 = vdwg.mxu0
    %v2924 = vsel %vm206, %v2922, -inf
    %2925 = vmax.xlane.f32.xlu0 %v2924
    %v2926 = vpop.xlane.xlu0 %2925
    %v2927 = vsub.f32 %v2922, %v2926
    %v2928 = vmul.f32 %v2927, 1.442695
    %v2929 = vpow.pop %v2928
    %v2930 = vsel %vm206, %v2929, 0.0
    %2931 = vadd.xlane.f32.xlu0 %v2930
    %v2932 = vpop.xlane.xlu0 %2931
    %v2933 = vrcp.pop %v2932
    %v2934 = vmul.f32 %v2932, %v2933
    %v2935 = vsub.f32 1.0, %v2934
    %v2936 = vmul.f32 %v2933, %v2935
    %v2937 = vadd.f32 %v2933, %v2936
    %vm2938 = vweird.f32 %v2932
    %vm2939 = vweird.f32 %v2933
    %vm2940 = vmor %vm2938, %vm2939
    %v2941 = vsel %vm2940, %v2933, %v2937
    %v2942 = vand.u32 2147483647, %v2932
    %vm2943 = vcmp.eq.f32.partialorder %v2942, 8.507059e+37
    %v2944 = vand.u32 %v2932, 2147483648
    %v2945 = vor.u32 1.1754944e-38, %v2944
    %v2946 = vsel %vm2943, %v2945, %v2941
    %v2947 = vmul.f32 %v2929, %v2946
    %v2948 = vadd.f32 %v2869, %v2947
    %2949 = vrot.lane.b32.xlu0 %v2812, 56
    %v2950 = vpop.permute.xlu0 %2949
    %v2953 = vsel %vm206, %v2947, 0
    %2955 = vmatpush.msra.mxu0 0.0
    %2956 = vmatpush.msra.mxu0 0.0
    %2957 = vmatpush.msra.mxu0 0.0
    %2958 = vmatpush.msra.mxu0 0.0
    %2959 = vmatpush.msra.mxu0 0.0
    %2960 = vmatpush.msra.mxu0 0.0
    %2961 = vmatpush.msra.mxu0 0.0
    %2962 = vmatpush.msra.mxu0 0.0
    %2963 = vmatpush.msra.mxu0 0.0
    %2964 = vmatpush.msra.mxu0 0.0
    %2965 = vmatpush.msra.mxu0 0.0
    %2966 = vmatpush.msra.mxu0 0.0
    %2967 = vmatpush.msra.mxu0 0.0
    %2968 = vmatpush.msra.mxu0 0.0
    %2969 = vmatpush.msra.mxu0 0.0
    %2970 = vmatpush.msra.mxu0 %v2950
    %2971 = vmatmul.f32.gmra.mxu0 %v2953
    %v2972 = vpop.f32.mrf.mxu0
    %v2973 = vadd.f32 0.0, %v2972
    %2974 = vdwg.mxu0
    %2975 = vrot.lane.b32.xlu0 %v2817, 112
    %v2976 = vpop.permute.xlu0 %2975
    %2977 = vrot.lane.b32.xlu0 %v2812, 80
    %v2978 = vpop.permute.xlu0 %2977
    %v2979 = vsel %vm206, %v2976, 0
    %v2981 = vsel %vm206, %v2978, 0
    %2983 = vmatpush.xpose.msra.mxu0 0.0
    %2984 = vmatpush.xpose.msra.mxu0 0.0
    %2985 = vmatpush.xpose.msra.mxu0 0.0
    %2986 = vmatpush.xpose.msra.mxu0 0.0
    %2987 = vmatpush.xpose.msra.mxu0 0.0
    %2988 = vmatpush.xpose.msra.mxu0 0.0
    %2989 = vmatpush.xpose.msra.mxu0 0.0
    %2990 = vmatpush.xpose.msra.mxu0 0.0
    %2991 = vmatpush.xpose.msra.mxu0 0.0
    %2992 = vmatpush.xpose.msra.mxu0 0.0
    %2993 = vmatpush.xpose.msra.mxu0 0.0
    %2994 = vmatpush.xpose.msra.mxu0 0.0
    %2995 = vmatpush.xpose.msra.mxu0 0.0
    %2996 = vmatpush.xpose.msra.mxu0 0.0
    %2997 = vmatpush.xpose.msra.mxu0 0.0
    %2998 = vmatpush.xpose.msra.mxu0 %v2981
    %2999 = vmatmul.f32.gmra.mxu0 %v2979
    %v3000 = vpop.f32.mrf.mxu0
    %v3001 = vadd.f32 0.0, %v3000
    %3002 = vdwg.mxu0
    %v3003 = vsel %vm206, %v3001, -inf
    %3004 = vmax.xlane.f32.xlu0 %v3003
    %v3005 = vpop.xlane.xlu0 %3004
    %v3006 = vsub.f32 %v3001, %v3005
    %v3007 = vmul.f32 %v3006, 1.442695
    %v3008 = vpow.pop %v3007
    %v3009 = vsel %vm206, %v3008, 0.0
    %3010 = vadd.xlane.f32.xlu0 %v3009
    %v3011 = vpop.xlane.xlu0 %3010
    %v3012 = vrcp.pop %v3011
    %v3013 = vmul.f32 %v3011, %v3012
    %v3014 = vsub.f32 1.0, %v3013
    %v3015 = vmul.f32 %v3012, %v3014
    %v3016 = vadd.f32 %v3012, %v3015
    %vm3017 = vweird.f32 %v3011
    %vm3018 = vweird.f32 %v3012
    %vm3019 = vmor %vm3017, %vm3018
    %v3020 = vsel %vm3019, %v3012, %v3016
    %v3021 = vand.u32 2147483647, %v3011
    %vm3022 = vcmp.eq.f32.partialorder %v3021, 8.507059e+37
    %v3023 = vand.u32 %v3011, 2147483648
    %v3024 = vor.u32 1.1754944e-38, %v3023
    %v3025 = vsel %vm3022, %v3024, %v3020
    %v3026 = vmul.f32 %v3008, %v3025
    %v3027 = vadd.f32 %v2948, %v3026
    %3028 = vrot.lane.b32.xlu0 %v2812, 48
    %v3029 = vpop.permute.xlu0 %3028
    %v3032 = vsel %vm206, %v3026, 0
    %3034 = vmatpush.msra.mxu0 0.0
    %3035 = vmatpush.msra.mxu0 0.0
    %3036 = vmatpush.msra.mxu0 0.0
    %3037 = vmatpush.msra.mxu0 0.0
    %3038 = vmatpush.msra.mxu0 0.0
    %3039 = vmatpush.msra.mxu0 0.0
    %3040 = vmatpush.msra.mxu0 0.0
    %3041 = vmatpush.msra.mxu0 0.0
    %3042 = vmatpush.msra.mxu0 0.0
    %3043 = vmatpush.msra.mxu0 0.0
    %3044 = vmatpush.msra.mxu0 0.0
    %3045 = vmatpush.msra.mxu0 0.0
    %3046 = vmatpush.msra.mxu0 0.0
    %3047 = vmatpush.msra.mxu0 0.0
    %3048 = vmatpush.msra.mxu0 0.0
    %3049 = vmatpush.msra.mxu0 %v3029
    %3050 = vmatmul.f32.gmra.mxu0 %v3032
    %v3051 = vpop.f32.mrf.mxu0
    %v3052 = vadd.f32 0.0, %v3051
    %3053 = vdwg.mxu0
    %3054 = vrot.lane.b32.xlu0 %v2817, 104
    %v3055 = vpop.permute.xlu0 %3054
    %3056 = vrot.lane.b32.xlu0 %v2812, 72
    %v3057 = vpop.permute.xlu0 %3056
    %v3058 = vsel %vm206, %v3055, 0
    %v3060 = vsel %vm206, %v3057, 0
    %3062 = vmatpush.xpose.msra.mxu0 0.0
    %3063 = vmatpush.xpose.msra.mxu0 0.0
    %3064 = vmatpush.xpose.msra.mxu0 0.0
    %3065 = vmatpush.xpose.msra.mxu0 0.0
    %3066 = vmatpush.xpose.msra.mxu0 0.0
    %3067 = vmatpush.xpose.msra.mxu0 0.0
    %3068 = vmatpush.xpose.msra.mxu0 0.0
    %3069 = vmatpush.xpose.msra.mxu0 0.0
    %3070 = vmatpush.xpose.msra.mxu0 0.0
    %3071 = vmatpush.xpose.msra.mxu0 0.0
    %3072 = vmatpush.xpose.msra.mxu0 0.0
    %3073 = vmatpush.xpose.msra.mxu0 0.0
    %3074 = vmatpush.xpose.msra.mxu0 0.0
    %3075 = vmatpush.xpose.msra.mxu0 0.0
    %3076 = vmatpush.xpose.msra.mxu0 0.0
    %3077 = vmatpush.xpose.msra.mxu0 %v3060
    %3078 = vmatmul.f32.gmra.mxu0 %v3058
    %v3079 = vpop.f32.mrf.mxu0
    %v3080 = vadd.f32 0.0, %v3079
    %3081 = vdwg.mxu0
    %v3082 = vsel %vm206, %v3080, -inf
    %3083 = vmax.xlane.f32.xlu0 %v3082
    %v3084 = vpop.xlane.xlu0 %3083
    %v3085 = vsub.f32 %v3080, %v3084
    %v3086 = vmul.f32 %v3085, 1.442695
    %v3087 = vpow.pop %v3086
    %v3088 = vsel %vm206, %v3087, 0.0
    %3089 = vadd.xlane.f32.xlu0 %v3088
    %v3090 = vpop.xlane.xlu0 %3089
    %v3091 = vrcp.pop %v3090
    %v3092 = vmul.f32 %v3090, %v3091
    %v3093 = vsub.f32 1.0, %v3092
    %v3094 = vmul.f32 %v3091, %v3093
    %v3095 = vadd.f32 %v3091, %v3094
    %vm3096 = vweird.f32 %v3090
    %vm3097 = vweird.f32 %v3091
    %vm3098 = vmor %vm3096, %vm3097
    %v3099 = vsel %vm3098, %v3091, %v3095
    %v3100 = vand.u32 2147483647, %v3090
    %vm3101 = vcmp.eq.f32.partialorder %v3100, 8.507059e+37
    %v3102 = vand.u32 %v3090, 2147483648
    %v3103 = vor.u32 1.1754944e-38, %v3102
    %v3104 = vsel %vm3101, %v3103, %v3099
    %v3105 = vmul.f32 %v3087, %v3104
    %v3106 = vadd.f32 %v3027, %v3105
    %3107 = vrot.lane.b32.xlu0 %v2812, 40
    %v3108 = vpop.permute.xlu0 %3107
    %v3111 = vsel %vm206, %v3105, 0
    %3113 = vmatpush.msra.mxu0 0.0
    %3114 = vmatpush.msra.mxu0 0.0
    %3115 = vmatpush.msra.mxu0 0.0
    %3116 = vmatpush.msra.mxu0 0.0
    %3117 = vmatpush.msra.mxu0 0.0
    %3118 = vmatpush.msra.mxu0 0.0
    %3119 = vmatpush.msra.mxu0 0.0
    %3120 = vmatpush.msra.mxu0 0.0
    %3121 = vmatpush.msra.mxu0 0.0
    %3122 = vmatpush.msra.mxu0 0.0
    %3123 = vmatpush.msra.mxu0 0.0
    %3124 = vmatpush.msra.mxu0 0.0
    %3125 = vmatpush.msra.mxu0 0.0
    %3126 = vmatpush.msra.mxu0 0.0
    %3127 = vmatpush.msra.mxu0 0.0
    %3128 = vmatpush.msra.mxu0 %v3108
    %3129 = vmatmul.f32.gmra.mxu0 %v3111
    %v3130 = vpop.f32.mrf.mxu0
    %v3131 = vadd.f32 0.0, %v3130
    %3132 = vdwg.mxu0
    %3134 = vrot.lane.b32.xlu0 %v2973, 8
    %v3135 = vpop.permute.xlu0 %3134
    %3138 = vrot.lane.b32.xlu0 %v3052, 16
    %v3139 = vpop.permute.xlu0 %3138
    %3142 = vrot.lane.b32.xlu0 %v3131, 24
    %v3143 = vpop.permute.xlu0 %3142
    %v3145 = vsel %vm206, %v2894, %v3135
    %v3146 = vsel %vm532, %v3145, %v3139
    %v3147 = vsel %vm534, %v3146, %v3143
    %v3148 = vmul.f32 %v3106, 0.25
    %v3149 = vmul.f32 %v2792, 0.35355338
    %3151 = vrot.lane.b32.xlu0 %v2815, 96
    %v3152 = vpop.permute.xlu0 %3151
    %v3154 = vsel %vm206, %v3149, 0
    %v3156 = vsel %vm206, %v3152, 0
    %3158 = vmatpush.xpose.msra.mxu0 0.0
    %3159 = vmatpush.xpose.msra.mxu0 0.0
    %3160 = vmatpush.xpose.msra.mxu0 0.0
    %3161 = vmatpush.xpose.msra.mxu0 0.0
    %3162 = vmatpush.xpose.msra.mxu0 0.0
    %3163 = vmatpush.xpose.msra.mxu0 0.0
    %3164 = vmatpush.xpose.msra.mxu0 0.0
    %3165 = vmatpush.xpose.msra.mxu0 0.0
    %3166 = vmatpush.xpose.msra.mxu0 0.0
    %3167 = vmatpush.xpose.msra.mxu0 0.0
    %3168 = vmatpush.xpose.msra.mxu0 0.0
    %3169 = vmatpush.xpose.msra.mxu0 0.0
    %3170 = vmatpush.xpose.msra.mxu0 0.0
    %3171 = vmatpush.xpose.msra.mxu0 0.0
    %3172 = vmatpush.xpose.msra.mxu0 0.0
    %3173 = vmatpush.xpose.msra.mxu0 %v3156
    %3174 = vmatmul.f32.gmra.mxu0 %v3154
    %v3175 = vpop.f32.mrf.mxu0
    %v3176 = vadd.f32 0.0, %v3175
    %3177 = vdwg.mxu0
    %v3178 = vsel %vm206, %v3176, -inf
    %3179 = vmax.xlane.f32.xlu0 %v3178
    %v3180 = vpop.xlane.xlu0 %3179
    %v3181 = vsub.f32 %v3176, %v3180
    %v3182 = vmul.f32 %v3181, 1.442695
    %v3183 = vpow.pop %v3182
    %v3184 = vsel %vm206, %v3183, 0.0
    %3185 = vadd.xlane.f32.xlu0 %v3184
    %v3186 = vpop.xlane.xlu0 %3185
    %v3187 = vrcp.pop %v3186
    %v3188 = vmul.f32 %v3186, %v3187
    %v3189 = vsub.f32 1.0, %v3188
    %v3190 = vmul.f32 %v3187, %v3189
    %v3191 = vadd.f32 %v3187, %v3190
    %vm3192 = vweird.f32 %v3186
    %vm3193 = vweird.f32 %v3187
    %vm3194 = vmor %vm3192, %vm3193
    %v3195 = vsel %vm3194, %v3187, %v3191
    %v3196 = vand.u32 2147483647, %v3186
    %vm3197 = vcmp.eq.f32.partialorder %v3196, 8.507059e+37
    %v3198 = vand.u32 %v3186, 2147483648
    %v3199 = vor.u32 1.1754944e-38, %v3198
    %v3200 = vsel %vm3197, %v3199, %v3195
    %v3201 = vmul.f32 %v3183, %v3200
    %3202 = vrot.lane.b32.xlu0 %v2815, 64
    %v3203 = vpop.permute.xlu0 %3202
    %v3206 = vsel %vm206, %v3201, 0
    %3208 = vmatpush.msra.mxu0 0.0
    %3209 = vmatpush.msra.mxu0 0.0
    %3210 = vmatpush.msra.mxu0 0.0
    %3211 = vmatpush.msra.mxu0 0.0
    %3212 = vmatpush.msra.mxu0 0.0
    %3213 = vmatpush.msra.mxu0 0.0
    %3214 = vmatpush.msra.mxu0 0.0
    %3215 = vmatpush.msra.mxu0 0.0
    %3216 = vmatpush.msra.mxu0 0.0
    %3217 = vmatpush.msra.mxu0 0.0
    %3218 = vmatpush.msra.mxu0 0.0
    %3219 = vmatpush.msra.mxu0 0.0
    %3220 = vmatpush.msra.mxu0 0.0
    %3221 = vmatpush.msra.mxu0 0.0
    %3222 = vmatpush.msra.mxu0 0.0
    %3223 = vmatpush.msra.mxu0 %v3203
    %3224 = vmatmul.f32.gmra.mxu0 %v3206
    %v3225 = vpop.f32.mrf.mxu0
    %v3226 = vadd.f32 0.0, %v3225
    %3227 = vdwg.mxu0
    %3228 = vrot.lane.b32.xlu0 %v3149, 120
    %v3229 = vpop.permute.xlu0 %3228
    %3230 = vrot.lane.b32.xlu0 %v2815, 88
    %v3231 = vpop.permute.xlu0 %3230
    %v3232 = vsel %vm206, %v3229, 0
    %v3234 = vsel %vm206, %v3231, 0
    %3236 = vmatpush.xpose.msra.mxu0 0.0
    %3237 = vmatpush.xpose.msra.mxu0 0.0
    %3238 = vmatpush.xpose.msra.mxu0 0.0
    %3239 = vmatpush.xpose.msra.mxu0 0.0
    %3240 = vmatpush.xpose.msra.mxu0 0.0
    %3241 = vmatpush.xpose.msra.mxu0 0.0
    %3242 = vmatpush.xpose.msra.mxu0 0.0
    %3243 = vmatpush.xpose.msra.mxu0 0.0
    %3244 = vmatpush.xpose.msra.mxu0 0.0
    %3245 = vmatpush.xpose.msra.mxu0 0.0
    %3246 = vmatpush.xpose.msra.mxu0 0.0
    %3247 = vmatpush.xpose.msra.mxu0 0.0
    %3248 = vmatpush.xpose.msra.mxu0 0.0
    %3249 = vmatpush.xpose.msra.mxu0 0.0
    %3250 = vmatpush.xpose.msra.mxu0 0.0
    %3251 = vmatpush.xpose.msra.mxu0 %v3234
    %3252 = vmatmul.f32.gmra.mxu0 %v3232
    %v3253 = vpop.f32.mrf.mxu0
    %v3254 = vadd.f32 0.0, %v3253
    %3255 = vdwg.mxu0
    %v3256 = vsel %vm206, %v3254, -inf
    %3257 = vmax.xlane.f32.xlu0 %v3256
    %v3258 = vpop.xlane.xlu0 %3257
    %v3259 = vsub.f32 %v3254, %v3258
    %v3260 = vmul.f32 %v3259, 1.442695
    %v3261 = vpow.pop %v3260
    %v3262 = vsel %vm206, %v3261, 0.0
    %3263 = vadd.xlane.f32.xlu0 %v3262
    %v3264 = vpop.xlane.xlu0 %3263
    %v3265 = vrcp.pop %v3264
    %v3266 = vmul.f32 %v3264, %v3265
    %v3267 = vsub.f32 1.0, %v3266
    %v3268 = vmul.f32 %v3265, %v3267
    %v3269 = vadd.f32 %v3265, %v3268
    %vm3270 = vweird.f32 %v3264
    %vm3271 = vweird.f32 %v3265
    %vm3272 = vmor %vm3270, %vm3271
    %v3273 = vsel %vm3272, %v3265, %v3269
    %v3274 = vand.u32 2147483647, %v3264
    %vm3275 = vcmp.eq.f32.partialorder %v3274, 8.507059e+37
    %v3276 = vand.u32 %v3264, 2147483648
    %v3277 = vor.u32 1.1754944e-38, %v3276
    %v3278 = vsel %vm3275, %v3277, %v3273
    %v3279 = vmul.f32 %v3261, %v3278
    %v3280 = vadd.f32 %v3201, %v3279
    %3281 = vrot.lane.b32.xlu0 %v2815, 56
    %v3282 = vpop.permute.xlu0 %3281
    %v3285 = vsel %vm206, %v3279, 0
    %3287 = vmatpush.msra.mxu0 0.0
    %3288 = vmatpush.msra.mxu0 0.0
    %3289 = vmatpush.msra.mxu0 0.0
    %3290 = vmatpush.msra.mxu0 0.0
    %3291 = vmatpush.msra.mxu0 0.0
    %3292 = vmatpush.msra.mxu0 0.0
    %3293 = vmatpush.msra.mxu0 0.0
    %3294 = vmatpush.msra.mxu0 0.0
    %3295 = vmatpush.msra.mxu0 0.0
    %3296 = vmatpush.msra.mxu0 0.0
    %3297 = vmatpush.msra.mxu0 0.0
    %3298 = vmatpush.msra.mxu0 0.0
    %3299 = vmatpush.msra.mxu0 0.0
    %3300 = vmatpush.msra.mxu0 0.0
    %3301 = vmatpush.msra.mxu0 0.0
    %3302 = vmatpush.msra.mxu0 %v3282
    %3303 = vmatmul.f32.gmra.mxu0 %v3285
    %v3304 = vpop.f32.mrf.mxu0
    %v3305 = vadd.f32 0.0, %v3304
    %3306 = vdwg.mxu0
    %3307 = vrot.lane.b32.xlu0 %v3149, 112
    %v3308 = vpop.permute.xlu0 %3307
    %3309 = vrot.lane.b32.xlu0 %v2815, 80
    %v3310 = vpop.permute.xlu0 %3309
    %v3311 = vsel %vm206, %v3308, 0
    %v3313 = vsel %vm206, %v3310, 0
    %3315 = vmatpush.xpose.msra.mxu0 0.0
    %3316 = vmatpush.xpose.msra.mxu0 0.0
    %3317 = vmatpush.xpose.msra.mxu0 0.0
    %3318 = vmatpush.xpose.msra.mxu0 0.0
    %3319 = vmatpush.xpose.msra.mxu0 0.0
    %3320 = vmatpush.xpose.msra.mxu0 0.0
    %3321 = vmatpush.xpose.msra.mxu0 0.0
    %3322 = vmatpush.xpose.msra.mxu0 0.0
    %3323 = vmatpush.xpose.msra.mxu0 0.0
    %3324 = vmatpush.xpose.msra.mxu0 0.0
    %3325 = vmatpush.xpose.msra.mxu0 0.0
    %3326 = vmatpush.xpose.msra.mxu0 0.0
    %3327 = vmatpush.xpose.msra.mxu0 0.0
    %3328 = vmatpush.xpose.msra.mxu0 0.0
    %3329 = vmatpush.xpose.msra.mxu0 0.0
    %3330 = vmatpush.xpose.msra.mxu0 %v3313
    %3331 = vmatmul.f32.gmra.mxu0 %v3311
    %v3332 = vpop.f32.mrf.mxu0
    %v3333 = vadd.f32 0.0, %v3332
    %3334 = vdwg.mxu0
    %v3335 = vsel %vm206, %v3333, -inf
    %3336 = vmax.xlane.f32.xlu0 %v3335
    %v3337 = vpop.xlane.xlu0 %3336
    %v3338 = vsub.f32 %v3333, %v3337
    %v3339 = vmul.f32 %v3338, 1.442695
    %v3340 = vpow.pop %v3339
    %v3341 = vsel %vm206, %v3340, 0.0
    %3342 = vadd.xlane.f32.xlu0 %v3341
    %v3343 = vpop.xlane.xlu0 %3342
    %v3344 = vrcp.pop %v3343
    %v3345 = vmul.f32 %v3343, %v3344
    %v3346 = vsub.f32 1.0, %v3345
    %v3347 = vmul.f32 %v3344, %v3346
    %v3348 = vadd.f32 %v3344, %v3347
    %vm3349 = vweird.f32 %v3343
    %vm3350 = vweird.f32 %v3344
    %vm3351 = vmor %vm3349, %vm3350
    %v3352 = vsel %vm3351, %v3344, %v3348
    %v3353 = vand.u32 2147483647, %v3343
    %vm3354 = vcmp.eq.f32.partialorder %v3353, 8.507059e+37
    %v3355 = vand.u32 %v3343, 2147483648
    %v3356 = vor.u32 1.1754944e-38, %v3355
    %v3357 = vsel %vm3354, %v3356, %v3352
    %v3358 = vmul.f32 %v3340, %v3357
    %v3359 = vadd.f32 %v3280, %v3358
    %3360 = vrot.lane.b32.xlu0 %v2815, 48
    %v3361 = vpop.permute.xlu0 %3360
    %v3364 = vsel %vm206, %v3358, 0
    %3366 = vmatpush.msra.mxu0 0.0
    %3367 = vmatpush.msra.mxu0 0.0
    %3368 = vmatpush.msra.mxu0 0.0
    %3369 = vmatpush.msra.mxu0 0.0
    %3370 = vmatpush.msra.mxu0 0.0
    %3371 = vmatpush.msra.mxu0 0.0
    %3372 = vmatpush.msra.mxu0 0.0
    %3373 = vmatpush.msra.mxu0 0.0
    %3374 = vmatpush.msra.mxu0 0.0
    %3375 = vmatpush.msra.mxu0 0.0
    %3376 = vmatpush.msra.mxu0 0.0
    %3377 = vmatpush.msra.mxu0 0.0
    %3378 = vmatpush.msra.mxu0 0.0
    %3379 = vmatpush.msra.mxu0 0.0
    %3380 = vmatpush.msra.mxu0 0.0
    %3381 = vmatpush.msra.mxu0 %v3361
    %3382 = vmatmul.f32.gmra.mxu0 %v3364
    %v3383 = vpop.f32.mrf.mxu0
    %v3384 = vadd.f32 0.0, %v3383
    %3385 = vdwg.mxu0
    %3386 = vrot.lane.b32.xlu0 %v3149, 104
    %v3387 = vpop.permute.xlu0 %3386
    %3388 = vrot.lane.b32.xlu0 %v2815, 72
    %v3389 = vpop.permute.xlu0 %3388
    %v3390 = vsel %vm206, %v3387, 0
    %v3392 = vsel %vm206, %v3389, 0
    %3394 = vmatpush.xpose.msra.mxu0 0.0
    %3395 = vmatpush.xpose.msra.mxu0 0.0
    %3396 = vmatpush.xpose.msra.mxu0 0.0
    %3397 = vmatpush.xpose.msra.mxu0 0.0
    %3398 = vmatpush.xpose.msra.mxu0 0.0
    %3399 = vmatpush.xpose.msra.mxu0 0.0
    %3400 = vmatpush.xpose.msra.mxu0 0.0
    %3401 = vmatpush.xpose.msra.mxu0 0.0
    %3402 = vmatpush.xpose.msra.mxu0 0.0
    %3403 = vmatpush.xpose.msra.mxu0 0.0
    %3404 = vmatpush.xpose.msra.mxu0 0.0
    %3405 = vmatpush.xpose.msra.mxu0 0.0
    %3406 = vmatpush.xpose.msra.mxu0 0.0
    %3407 = vmatpush.xpose.msra.mxu0 0.0
    %3408 = vmatpush.xpose.msra.mxu0 0.0
    %3409 = vmatpush.xpose.msra.mxu0 %v3392
    %3410 = vmatmul.f32.gmra.mxu0 %v3390
    %v3411 = vpop.f32.mrf.mxu0
    %v3412 = vadd.f32 0.0, %v3411
    %3413 = vdwg.mxu0
    %v3414 = vsel %vm206, %v3412, -inf
    %3415 = vmax.xlane.f32.xlu0 %v3414
    %v3416 = vpop.xlane.xlu0 %3415
    %v3417 = vsub.f32 %v3412, %v3416
    %v3418 = vmul.f32 %v3417, 1.442695
    %v3419 = vpow.pop %v3418
    %v3420 = vsel %vm206, %v3419, 0.0
    %3421 = vadd.xlane.f32.xlu0 %v3420
    %v3422 = vpop.xlane.xlu0 %3421
    %v3423 = vrcp.pop %v3422
    %v3424 = vmul.f32 %v3422, %v3423
    %v3425 = vsub.f32 1.0, %v3424
    %v3426 = vmul.f32 %v3423, %v3425
    %v3427 = vadd.f32 %v3423, %v3426
    %vm3428 = vweird.f32 %v3422
    %vm3429 = vweird.f32 %v3423
    %vm3430 = vmor %vm3428, %vm3429
    %v3431 = vsel %vm3430, %v3423, %v3427
    %v3432 = vand.u32 2147483647, %v3422
    %vm3433 = vcmp.eq.f32.partialorder %v3432, 8.507059e+37
    %v3434 = vand.u32 %v3422, 2147483648
    %v3435 = vor.u32 1.1754944e-38, %v3434
    %v3436 = vsel %vm3433, %v3435, %v3431
    %v3437 = vmul.f32 %v3419, %v3436
    %v3438 = vadd.f32 %v3359, %v3437
    %3439 = vrot.lane.b32.xlu0 %v2815, 40
    %v3440 = vpop.permute.xlu0 %3439
    %v3443 = vsel %vm206, %v3437, 0
    %3445 = vmatpush.msra.mxu0 0.0
    %3446 = vmatpush.msra.mxu0 0.0
    %3447 = vmatpush.msra.mxu0 0.0
    %3448 = vmatpush.msra.mxu0 0.0
    %3449 = vmatpush.msra.mxu0 0.0
    %3450 = vmatpush.msra.mxu0 0.0
    %3451 = vmatpush.msra.mxu0 0.0
    %3452 = vmatpush.msra.mxu0 0.0
    %3453 = vmatpush.msra.mxu0 0.0
    %3454 = vmatpush.msra.mxu0 0.0
    %3455 = vmatpush.msra.mxu0 0.0
    %3456 = vmatpush.msra.mxu0 0.0
    %3457 = vmatpush.msra.mxu0 0.0
    %3458 = vmatpush.msra.mxu0 0.0
    %3459 = vmatpush.msra.mxu0 0.0
    %3460 = vmatpush.msra.mxu0 %v3440
    %3461 = vmatmul.f32.gmra.mxu0 %v3443
    %v3462 = vpop.f32.mrf.mxu0
    %v3463 = vadd.f32 0.0, %v3462
    %3464 = vdwg.mxu0
    %3466 = vrot.lane.b32.xlu0 %v3305, 8
    %v3467 = vpop.permute.xlu0 %3466
    %3470 = vrot.lane.b32.xlu0 %v3384, 16
    %v3471 = vpop.permute.xlu0 %3470
    %3474 = vrot.lane.b32.xlu0 %v3463, 24
    %v3475 = vpop.permute.xlu0 %3474
    %v3477 = vsel %vm206, %v3226, %v3467
    %v3478 = vsel %vm532, %v3477, %v3471
    %v3479 = vsel %vm534, %v3478, %v3475
    %v3480 = vmul.f32 %v3438, 0.25
    %3485 = vrot.lane.b32.xlu0 %v2759, 32
    %v3486 = vpop.permute.xlu0 %3485
    %3487 = vrot.lane.b32.xlu0 %v2760, 32
    %v3488 = vpop.permute.xlu0 %3487
    %3489 = vrot.lane.b32.xlu0 %v2761, 32
    %v3490 = vpop.permute.xlu0 %3489
    %3491 = vrot.lane.b32.xlu0 %v2762, 32
    %v3492 = vpop.permute.xlu0 %3491
    %3498 = vrot.lane.b32.xlu0 %v2764, 32
    %v3499 = vpop.permute.xlu0 %3498
    %v3502 = vsel %vm106, %v3147, 0
    %v3505 = vsel %vm106, %v3479, 0
    %3507 = vmatpush.msra.mxu0 0.0
    %3508 = vmatpush.msra.mxu0 0.0
    %3509 = vmatpush.msra.mxu0 0.0
    %3510 = vmatpush.msra.mxu0 0.0
    %3511 = vmatpush.msra.mxu0 0.0
    %3512 = vmatpush.msra.mxu0 0.0
    %3513 = vmatpush.msra.mxu0 0.0
    %3514 = vmatpush.msra.mxu0 0.0
    %3515 = vmatpush.msra.mxu0 0.0
    %3516 = vmatpush.msra.mxu0 0.0
    %3517 = vmatpush.msra.mxu0 0.0
    %3518 = vmatpush.msra.mxu0 0.0
    %3519 = vmatpush.msra.mxu0 %v3492
    %3520 = vmatpush.msra.mxu0 %v3490
    %3521 = vmatpush.msra.mxu0 %v3488
    %3522 = vmatpush.msra.mxu0 %v3486
    %3523 = vmatmul.f32.gmra.mxu0 %v3502
    %v3524 = vpop.f32.mrf.mxu0
    %v3525 = vadd.f32 %v3499, %v3524
    %3526 = vmatmul.f32.gmra.mxu0 %v3505
    %v3527 = vpop.f32.mrf.mxu0
    %v3528 = vadd.f32 %v3499, %v3527
    %3529 = vdwg.mxu0
    %v3530 = vadd.f32 %v2702, %v3525
    %v3531 = vadd.f32 %v2703, %v3528
    %v3532 = vld [vmem:[%s2 + $0x9] sm:$0x1]
    %v3533 = vsel %vm106, %v3530, 0.0
    %3534 = vadd.xlane.f32.xlu0 %v3533
    %v3535 = vpop.xlane.xlu0 %3534
    %v3536 = vsel %vm106, %v3531, 0.0
    %3537 = vadd.xlane.f32.xlu0 %v3536
    %v3538 = vpop.xlane.xlu0 %3537
    %v3539 = vmul.f32 %v3535, %v119
    %v3540 = vmul.f32 %v3538, %v119
    %v3541 = vsub.f32 %v3530, %v3539
    %v3542 = vsub.f32 %v3531, %v3540
    %v3543 = vmul.f32 %v3541, %v3541
    %v3544 = vmul.f32 %v3542, %v3542
    %v3545 = vsel %vm106, %v3543, 0.0
    %3546 = vadd.xlane.f32.xlu0 %v3545
    %v3547 = vpop.xlane.xlu0 %3546
    %v3548 = vsel %vm106, %v3544, 0.0
    %3549 = vadd.xlane.f32.xlu0 %v3548
    %v3550 = vpop.xlane.xlu0 %3549
    %v3551 = vmul.f32 %v3547, %v119
    %v3552 = vmul.f32 %v3550, %v119
    %v3553 = vadd.f32 %v3551, 1e-05
    %v3554 = vadd.f32 %v3552, 1e-05
    %v3555 = vrsqrt.pop %v3553
    %v3556 = vmul.f32 %v3555, %v3553
    %v3557 = vmul.f32 %v3556, %v3555
    %v3558 = vmul.f32 0.5, %v3557
    %v3559 = vsub.f32 1.5, %v3558
    %v3560 = vmul.f32 %v3555, %v3559
    %vm3561 = vweird.f32 %v3553
    %vm3562 = vweird.f32 %v3555
    %vm3563 = vmor %vm3561, %vm3562
    %v3564 = vsel %vm3563, %v3555, %v3560
    %v3565 = vrsqrt.pop %v3554
    %v3566 = vmul.f32 %v3565, %v3554
    %v3567 = vmul.f32 %v3566, %v3565
    %v3568 = vmul.f32 0.5, %v3567
    %v3569 = vsub.f32 1.5, %v3568
    %v3570 = vmul.f32 %v3565, %v3569
    %vm3571 = vweird.f32 %v3554
    %vm3572 = vweird.f32 %v3565
    %vm3573 = vmor %vm3571, %vm3572
    %v3574 = vsel %vm3573, %v3565, %v3570
    %v3575 = vmul.f32 %v3541, %v3564
    %v3576 = vmul.f32 %v3542, %v3574
    %v3577 = vperm.slane %v3532, 0
    %v3578 = vmul.f32 %v3575, %v3577
    %v3579 = vmul.f32 %v3576, %v3577
    %3581 = vrot.lane.b32.xlu0 %v3577, 96
    %v3582 = vpop.permute.xlu0 %3581
    %v3584 = vadd.f32 %v3578, %v3582
    %v3585 = vadd.f32 %v3579, %v3582
    %s3586 = scalar_lea.vmem [#allocation2], 160
    %v3587 = vld [vmem:[%s3586] sm:$0xff]
    %v3588 = vld [vmem:[%s3586 + $0x8] sm:$0xff]
    %v3589 = vld [vmem:[%s3586 + $0x10] sm:$0xff]
    %v3590 = vld [vmem:[%s3586 + $0x18] sm:$0xff]
    %3591 = vrot.lane.b32.xlu0 %v3577, 64
    %v3592 = vpop.permute.xlu0 %3591
    %v3595 = vsel %vm106, %v3584, 0
    %v3598 = vsel %vm106, %v3585, 0
    %3600 = vmatpush.msra.mxu0 0.0
    %3601 = vmatpush.msra.mxu0 0.0
    %3602 = vmatpush.msra.mxu0 0.0
    %3603 = vmatpush.msra.mxu0 0.0
    %3604 = vmatpush.msra.mxu0 0.0
    %3605 = vmatpush.msra.mxu0 0.0
    %3606 = vmatpush.msra.mxu0 0.0
    %3607 = vmatpush.msra.mxu0 0.0
    %3608 = vmatpush.msra.mxu0 0.0
    %3609 = vmatpush.msra.mxu0 0.0
    %3610 = vmatpush.msra.mxu0 0.0
    %3611 = vmatpush.msra.mxu0 0.0
    %3612 = vmatpush.msra.mxu0 %v3590
    %3613 = vmatpush.msra.mxu0 %v3589
    %3614 = vmatpush.msra.mxu0 %v3588
    %3615 = vmatpush.msra.mxu0 %v3587
    %3616 = vmatmul.f32.gmra.mxu0 %v3595
    %v3617 = vpop.f32.mrf.mxu0
    %v3618 = vadd.f32 %v3592, %v3617
    %3619 = vmatmul.f32.gmra.mxu0 %v3598
    %v3620 = vpop.f32.mrf.mxu0
    %v3621 = vadd.f32 %v3592, %v3620
    %3622 = vdwg.mxu0
    %v3623 = vmax.f32 %v3618, 0.0
    %v3624 = vmax.f32 %v3621, 0.0
    %3629 = vrot.lane.b32.xlu0 %v3587, 96
    %v3630 = vpop.permute.xlu0 %3629
    %3631 = vrot.lane.b32.xlu0 %v3588, 96
    %v3632 = vpop.permute.xlu0 %3631
    %3633 = vrot.lane.b32.xlu0 %v3589, 96
    %v3634 = vpop.permute.xlu0 %3633
    %3635 = vrot.lane.b32.xlu0 %v3590, 96
    %v3636 = vpop.permute.xlu0 %3635
    %v3642 = vsel %vm106, %v3623, 0
    %v3645 = vsel %vm106, %v3624, 0
    %3647 = vmatpush.msra.mxu0 0.0
    %3648 = vmatpush.msra.mxu0 0.0
    %3649 = vmatpush.msra.mxu0 0.0
    %3650 = vmatpush.msra.mxu0 0.0
    %3651 = vmatpush.msra.mxu0 0.0
    %3652 = vmatpush.msra.mxu0 0.0
    %3653 = vmatpush.msra.mxu0 0.0
    %3654 = vmatpush.msra.mxu0 0.0
    %3655 = vmatpush.msra.mxu0 0.0
    %3656 = vmatpush.msra.mxu0 0.0
    %3657 = vmatpush.msra.mxu0 0.0
    %3658 = vmatpush.msra.mxu0 0.0
    %3659 = vmatpush.msra.mxu0 %v3636
    %3660 = vmatpush.msra.mxu0 %v3634
    %3661 = vmatpush.msra.mxu0 %v3632
    %3662 = vmatpush.msra.mxu0 %v3630
    %3663 = vmatmul.f32.gmra.mxu0 %v3642
    %v3664 = vpop.f32.mrf.mxu0
    %v3665 = vadd.f32 0.0, %v3664
    %3666 = vmatmul.f32.gmra.mxu0 %v3645
    %v3667 = vpop.f32.mrf.mxu0
    %v3668 = vadd.f32 0.0, %v3667
    %3669 = vdwg.mxu0
    %v3670 = vadd.f32 %v3530, %v3665
    %v3671 = vadd.f32 %v3531, %v3668
    %3672 = vrot.lane.b32.xlu0 %v3577, 32
    %v3673 = vpop.permute.xlu0 %3672
    %v3675 = vadd.f32 %v3670, %v3673
    %v3676 = vadd.f32 %v3671, %v3673
    %s3677 = scalar_lea.vmem [#allocation2], 192
    %v3678 = vld [vmem:[%s3677] sm:$0xff]
    %v3679 = vld [vmem:[%s3677 + $0x8] sm:$0xff]
    %v3680 = vld [vmem:[%s3677 + $0x10] sm:$0xff]
    %v3681 = vld [vmem:[%s3677 + $0x18] sm:$0xff]
    %v3682 = vld [vmem:[%s2 + $0x1] sm:$0x1]
    %3683 = vrot.lane.b32.xlu0 %v44, 32
    %v3684 = vpop.permute.xlu0 %3683
    %v3687 = vsel %vm106, %v3675, 0
    %v3690 = vsel %vm106, %v3676, 0
    %3692 = vmatpush.msra.mxu0 0.0
    %3693 = vmatpush.msra.mxu0 0.0
    %3694 = vmatpush.msra.mxu0 0.0
    %3695 = vmatpush.msra.mxu0 0.0
    %3696 = vmatpush.msra.mxu0 0.0
    %3697 = vmatpush.msra.mxu0 0.0
    %3698 = vmatpush.msra.mxu0 0.0
    %3699 = vmatpush.msra.mxu0 0.0
    %3700 = vmatpush.msra.mxu0 0.0
    %3701 = vmatpush.msra.mxu0 0.0
    %3702 = vmatpush.msra.mxu0 0.0
    %3703 = vmatpush.msra.mxu0 0.0
    %3704 = vmatpush.msra.mxu0 %v3681
    %3705 = vmatpush.msra.mxu0 %v3680
    %3706 = vmatpush.msra.mxu0 %v3679
    %3707 = vmatpush.msra.mxu0 %v3678
    %3708 = vmatmul.f32.gmra.mxu0 %v3687
    %v3709 = vpop.f32.mrf.mxu0
    %v3710 = vadd.f32 %v3684, %v3709
    %3711 = vmatmul.f32.gmra.mxu0 %v3690
    %v3712 = vpop.f32.mrf.mxu0
    %v3713 = vadd.f32 %v3684, %v3712
    %3714 = vdwg.mxu0
    %v3715 = vmax.f32 %v3710, 0.0
    %v3716 = vmax.f32 %v3713, 0.0
    %v3717 = vperm.slane %v3682, 0
    %3722 = vrot.lane.b32.xlu0 %v3678, 96
    %v3723 = vpop.permute.xlu0 %3722
    %3724 = vrot.lane.b32.xlu0 %v3679, 96
    %v3725 = vpop.permute.xlu0 %3724
    %3726 = vrot.lane.b32.xlu0 %v3680, 96
    %v3727 = vpop.permute.xlu0 %3726
    %3728 = vrot.lane.b32.xlu0 %v3681, 96
    %v3729 = vpop.permute.xlu0 %3728
    %v3735 = vsel %vm106, %v3715, 0
    %v3738 = vsel %vm106, %v3716, 0
    %3740 = vmatpush.msra.mxu0 0.0
    %3741 = vmatpush.msra.mxu0 0.0
    %3742 = vmatpush.msra.mxu0 0.0
    %3743 = vmatpush.msra.mxu0 0.0
    %3744 = vmatpush.msra.mxu0 0.0
    %3745 = vmatpush.msra.mxu0 0.0
    %3746 = vmatpush.msra.mxu0 0.0
    %3747 = vmatpush.msra.mxu0 0.0
    %3748 = vmatpush.msra.mxu0 0.0
    %3749 = vmatpush.msra.mxu0 0.0
    %3750 = vmatpush.msra.mxu0 0.0
    %3751 = vmatpush.msra.mxu0 0.0
    %3752 = vmatpush.msra.mxu0 %v3729
    %3753 = vmatpush.msra.mxu0 %v3727
    %3754 = vmatpush.msra.mxu0 %v3725
    %3755 = vmatpush.msra.mxu0 %v3723
    %3756 = vmatmul.f32.gmra.mxu0 %v3735
    %v3757 = vpop.f32.mrf.mxu0
    %v3758 = vadd.f32 %v3717, %v3757
    %3759 = vmatmul.f32.gmra.mxu0 %v3738
    %v3760 = vpop.f32.mrf.mxu0
    %v3761 = vadd.f32 %v3717, %v3760
    %3762 = vdwg.mxu0
    %3764 = vrot.lane.b32.xlu0 %v1370, 8
    %v3765 = vpop.permute.xlu0 %3764
    %3768 = vrot.lane.b32.xlu0 %v2320, 16
    %v3769 = vpop.permute.xlu0 %3768
    %3772 = vrot.lane.b32.xlu0 %v3148, 24
    %v3773 = vpop.permute.xlu0 %3772
    %v3775 = vsel %vm206, %v536, %v3765
    %v3776 = vsel %vm532, %v3775, %v3769
    %v3777 = vsel %vm534, %v3776, %v3773
    %3779 = vrot.lane.b32.xlu0 %v1702, 8
    %v3780 = vpop.permute.xlu0 %3779
    %3783 = vrot.lane.b32.xlu0 %v2652, 16
    %v3784 = vpop.permute.xlu0 %3783
    %3787 = vrot.lane.b32.xlu0 %v3480, 24
    %v3788 = vpop.permute.xlu0 %3787
    %v3790 = vsel %vm206, %v868, %v3780
    %v3791 = vsel %vm532, %v3790, %v3784
    %v3792 = vsel %vm534, %v3791, %v3788
    %3795 = vrot.lane.b32.xlu0 %v3777, 32
    %v3796 = vpop.permute.xlu0 %3795
    %3797 = vrot.lane.b32.xlu0 %v3792, 32
    %v3798 = vpop.permute.xlu0 %3797
    %v3801 = vsel %vm106, %v3758, %v3796
    %v3802 = vsel %vm106, %v3761, %v3798
    %vm3803 = vcmask 523264
    %v3804 = vsel %vm3803, %v3801, 0.0
    %v3805 = vsel %vm3803, %v3802, 0.0
    %3806 = vst [vmem:[#allocation5] sm:$0xff] %v3804
    %3807 = vst [vmem:[#allocation5 + $0x8] sm:$0xff] %v3805
    // Predicated region
    $region18: #{tpu_custom_call.1} parent=1 // pred_check
      _
    $region19: #{tpu_custom_call.1} parent=1 // pred_check_branch
      %3809 = sbr.rel (0) target = $region21
    $region20: #{tpu_custom_call.1} parent=1 // pred_region
      %3811 = vsyncadd [#allocation4], 0
      %s3812 = sshll.u32 [#allocation5], 4
      %s3813 = int_to_ptr.vmem [resolvable:$true] %s3812
      %s3814 = sshll.u32 %s3, 4
      %s3815 = int_to_ptr.hbm [resolvable:$true] %s3814
      %3820 = dma.vmem_to_hbm [thread:$0]  %s3813, 256, %s3815, [#allocation4], 128, 128, 8
    $region21: #{tpu_custom_call.1} parent=1 // pred_fallthru
      _
    // Predicated region
    $region22: #{tpu_custom_call.1} parent=1 // pred_check
      _
    $region23: #{tpu_custom_call.1} parent=1 // pred_check_branch
      %3822 = sbr.rel (0) target = $region25
    $region24: #{tpu_custom_call.1} parent=1 // pred_region
      %3824 = dma.done [#allocation4], 256
    $region25: #{tpu_custom_call.1} parent=1 // pred_fallthru
      _
    %3825 = vsyncpa [#allocation3], 1
    %3826 = vsyncpa [#allocation4], 1

</llo_original>
